<compile_context>
chip_gen: v7x
topology: tpu7x:2x2x1
jax: 0.10.0
libtpu: 0.0.40
codegen_flags: <defaults>
</compile_context>

<pallas_src>
import numpy as np
import jax
import jax.numpy as jnp
from jax.experimental import pallas as pl
from jax.experimental.pallas import tpu as pltpu


# ------------------------- host-side metadata (numpy) -------------------------

def _ceil_to(x, m):
    return ((x + m - 1) // m) * m


def _conv_out(n, stride):
    # Conv2d(k=3, pad=1, stride): out = (n + 2 - 3)//stride + 1
    return (n - 1) // stride + 1


def make_tap_meta(H, W, L):
    """Per-tap lane-roll shifts (python ints) + validity masks for a 3x3, pad=1,
    stride-1 conv on an HxW map flattened row-major into the first H*W of L lanes.
    masks: (9, 1, L) f32; shift k moves x[p + s_k] to lane p (wrap is masked out)."""
    shifts = []
    masks = np.zeros((9, 1, L), np.float32)
    for k in range(9):
        dy, dx = k // 3 - 1, k % 3 - 1
        s = dy * W + dx
        shifts.append((-s) % L)
        for oy in range(H):
            iy = oy + dy
            if not (0 <= iy < H):
                continue
            for ox in range(W):
                ix = ox + dx
                if 0 <= ix < W:
                    masks[k, 0, oy * W + ox] = 1.0
    return shifts, jnp.asarray(masks)


def make_downsample_select(H, W, stride, L_in, L_out):
    """(L_in, L_out) 0/1 matrix: column (oy*Wo+ox) picks row (oy*stride)*W + ox*stride.
    A strided 3x3/pad-1 conv == stride-1 conv followed by this selection."""
    Ho, Wo = _conv_out(H, stride), _conv_out(W, stride)
    assert Ho * Wo <= L_out
    S = np.zeros((L_in, L_out), np.float32)
    for oy in range(Ho):
        for ox in range(Wo):
            S[(oy * stride) * W + ox * stride, oy * Wo + ox] = 1.0
    return jnp.asarray(S)


# ------------------------- in-kernel helpers -------------------------

def _conv3x3(x, m_ref, w2, b, shifts, *, relu=False):
    """3x3 pad-1 stride-1 conv via lane rolls.
    x: (Cin, L) value;  m_ref: (9, 1, L) mask ref;  w2: (Cout, 9*Cin);  b: (Cout, 1)."""
    taps = []
    for k in range(9):
        s = shifts[k]
        r = x if s == 0 else pltpu.roll(x, s, 1)     # XLU lane rotate (static shift)
        taps.append(r * m_ref[k])                    # zero out-of-bounds / padded taps
    t = jnp.concatenate(taps, axis=0)                # (9*Cin, L)  k-major, cin-minor
    y = jnp.dot(w2, t, preferred_element_type=jnp.float32) + b   # single K=9*Cin dot
    return jnp.maximum(y, 0.0) if relu else y


def _resblock(x, m_ref, w1, b1, w2, b2, shifts):
    t = _conv3x3(x, m_ref, w1, b1, shifts, relu=True)
    return _conv3x3(t, m_ref, w2, b2, shifts) + x


# ------------------------- Pallas kernels -------------------------

def _make_stem_kernel(B, shifts):
    # x: (B, Cin, L1)  fw: (F, Cin)  fb: (F, 1)  w: (5, F, 9F)  b: (5, F, 1)
    # m: (9, 1, L1)  sel: (L1, L2)  o: (B, F, L2)
    def kernel(x_ref, fw_ref, fb_ref, w_ref, b_ref, m_ref, sel_ref, o_ref):
        fw, fb, sel = fw_ref[...], fb_ref[...], sel_ref[...]
        for bidx in range(B):                         # B=2 batch loop inside the kernel
            x = x_ref[bidx]
            h = jnp.dot(fw, x, preferred_element_type=jnp.float32) + fb      # first 1x1
            h = _resblock(h, m_ref, w_ref[0], b_ref[0], w_ref[1], b_ref[1], shifts)
            h = _resblock(h, m_ref, w_ref[2], b_ref[2], w_ref[3], b_ref[3], shifts)
            y = _conv3x3(h, m_ref, w_ref[4], b_ref[4], shifts)               # share_downsample
            o_ref[bidx] = jnp.dot(y, sel, preferred_element_type=jnp.float32)  # stride-2 select
    return kernel


def _make_branch_kernel(B, shifts):
    # Fused intra/inter branch (grid axis picks branch): 2 ResBlocks + ReLU + strided
    # downsample + both 1x1 heads + both Linear bodies + clip_act, all in VMEM.
    # x: (B, F, L2)  w: (1,5,F,9F)  b: (1,5,F,1)  m: (9,1,L2)  sel: (L2, HW3)
    # hw: (1,2,F)  hb: (1,2,1)  bw: (1,2,NIN,128)  bb: (1,2,1,128)  o: (1, B, 2, 128)
    def kernel(x_ref, w_ref, b_ref, m_ref, sel_ref,
               hw_ref, hb_ref, bw_ref, bb_ref, o_ref):
        sel = sel_ref[...]
        for bidx in range(B):
            h = x_ref[bidx]
            h = _resblock(h, m_ref, w_ref[0, 0], b_ref[0, 0], w_ref[0, 1], b_ref[0, 1], shifts)
            h = _resblock(h, m_ref, w_ref[0, 2], b_ref[0, 2], w_ref[0, 3], b_ref[0, 3], shifts)
            h = jnp.maximum(h, 0.0)                                          # self.relu
            y = _conv3x3(h, m_ref, w_ref[0, 4], b_ref[0, 4], shifts)         # downsample conv
            feat = jnp.dot(y, sel, preferred_element_type=jnp.float32)       # (F, HW3)
            hv = (jnp.dot(hw_ref[0, 0:1, :], feat, preferred_element_type=jnp.float32)
                  + hb_ref[0, 0:1, :])                                       # v head, (1, HW3)
            hh = (jnp.dot(hw_ref[0, 1:2, :], feat, preferred_element_type=jnp.float32)
                  + hb_ref[0, 1:2, :])                                       # h head
            ov = jnp.dot(hv, bw_ref[0, 0], preferred_element_type=jnp.float32) + bb_ref[0, 0]
            oh = jnp.dot(hh, bw_ref[0, 1], preferred_element_type=jnp.float32) + bb_ref[0, 1]
            outs = jnp.concatenate([ov, oh], axis=0)                         # (2, 128) lane-dense
            # clip_act: where(x > 0, 1, 0); zero-padded columns give exactly 0.
            o_ref[0, bidx] = (outs > 0.0).astype(jnp.float32)
    return kernel


# ------------------------- pallas_call wrappers -------------------------

def stem_forward(x_flat, fw, fb, w_stack, b_stack, masks, sel, shifts, L2):
    B, Cin, L1 = x_flat.shape
    F = fw.shape[0]
    return pl.pallas_call(
        _make_stem_kernel(B, shifts),
        out_shape=jax.ShapeDtypeStruct((B, F, L2), jnp.float32),
        grid=(1,),
        in_specs=[
            pl.BlockSpec((B, Cin, L1), lambda i: (0, 0, 0)),
            pl.BlockSpec(fw.shape, lambda i: (0, 0)),
            pl.BlockSpec(fb.shape, lambda i: (0, 0)),
            pl.BlockSpec(w_stack.shape, lambda i: (0, 0, 0)),
            pl.BlockSpec(b_stack.shape, lambda i: (0, 0, 0)),
            pl.BlockSpec(masks.shape, lambda i: (0, 0, 0)),
            pl.BlockSpec(sel.shape, lambda i: (0, 0)),
        ],
        out_specs=pl.BlockSpec((B, F, L2), lambda i: (0, 0, 0)),
        compiler_params=pltpu.CompilerParams(dimension_semantics=("arbitrary",)),
    )(x_flat, fw, fb, w_stack, b_stack, masks, sel)


def branches_forward(x_ds, bp, masks, sel, shifts):
    """Both branches (0=intra, 1=inter) in ONE pallas_call via a 2-wide grid axis."""
    B, F, L2 = x_ds.shape
    return pl.pallas_call(
        _make_branch_kernel(B, shifts),
        out_shape=jax.ShapeDtypeStruct((2, B, 2, 128), jnp.float32),
        grid=(2,),
        in_specs=[
            pl.BlockSpec((B, F, L2), lambda br: (0, 0, 0)),                    # grid-invariant
            pl.BlockSpec((1,) + bp['w'].shape[1:], lambda br: (br, 0, 0, 0)),
            pl.BlockSpec((1,) + bp['b'].shape[1:], lambda br: (br, 0, 0, 0)),
            pl.BlockSpec(masks.shape, lambda br: (0, 0, 0)),
            pl.BlockSpec(sel.shape, lambda br: (0, 0)),
            pl.BlockSpec((1,) + bp['head_w'].shape[1:], lambda br: (br, 0, 0)),
            pl.BlockSpec((1,) + bp['head_b'].shape[1:], lambda br: (br, 0, 0)),
            pl.BlockSpec((1,) + bp['body_w'].shape[1:], lambda br: (br, 0, 0, 0)),
            pl.BlockSpec((1,) + bp['body_b'].shape[1:], lambda br: (br, 0, 0, 0)),
        ],
        out_specs=pl.BlockSpec((1, B, 2, 128), lambda br: (br, 0, 0, 0)),
        # On v7x this axis could be pltpu.CORE_PARALLEL to shard across both TensorCores.
        compiler_params=pltpu.CompilerParams(dimension_semantics=("parallel",)),
    )(x_ds, bp['w'], bp['b'], masks, sel,
      bp['head_w'], bp['head_b'], bp['body_w'], bp['body_b'])


# ------------------------- jnp epilogue (tiny 4x4 adjacency math) -------------------------
# TODO(synk): construct_adj's irregular upper-triangular scatter and the 4x4 gen_adj
# normalization have no sensible (8,128)-tile Pallas mapping; kept as a tiny jnp epilogue.

def construct_adj_batch(half_adj, n):
    iu = jnp.triu_indices(n, k=1)

    def one(h):
        A = jnp.zeros((n, n), jnp.float32).at[iu].set(h)
        return A + A.T + jnp.eye(n, dtype=jnp.float32)

    return jax.vmap(one)(half_adj)


def gen_adj_batch(A):
    # torch: D = diag(A.sum(1) ** -0.5); adj = (A @ D).T @ D  ==  d_i * A[j,i] * d_j
    d = jax.lax.rsqrt(jnp.sum(A, axis=2))                       # (M, n)
    return d[:, :, None] * jnp.swapaxes(A, 1, 2) * d[:, None, :]


# ------------------------- parameters -------------------------

def init_params(key, in_feature, n_filters, num_in, num_h_out, num_w_out, out_pad=128):
    it = iter(jax.random.split(key, 64))

    def conv3x3_p(cin, cout):
        w = jax.random.normal(next(it), (3, 3, cin, cout), jnp.float32) / np.sqrt(9 * cin)
        b = 0.1 * jax.random.normal(next(it), (cout,), jnp.float32)
        # (Cout, 9*Cin), k-major / cin-minor -> matches taps = concat_k(roll_k(x)*mask_k).
        return w.reshape(9 * cin, cout).T, b.reshape(cout, 1)

    def conv1x1_p(cin, cout):
        w = jax.random.normal(next(it), (cin, cout), jnp.float32) / np.sqrt(cin)
        b = 0.1 * jax.random.normal(next(it), (cout,), jnp.float32)
        return w.T, b.reshape(cout, 1)                           # (Cout, Cin), (Cout, 1)

    def lin_pad(nin, nout):
        # Linear weights zero-padded to 128 output columns -> lane-dense body dot / store.
        w = jax.random.normal(next(it), (nin, nout), jnp.float32) / np.sqrt(nin)
        b = 0.1 * jax.random.normal(next(it), (nout,), jnp.float32)
        wp = jnp.zeros((nin, out_pad), jnp.float32).at[:, :nout].set(w)
        bp = jnp.zeros((1, out_pad), jnp.float32).at[0, :nout].set(b)
        return wp, bp

    def conv_stack():
        # 2 ResBlocks (2 convs each) + 1 downsample conv, packed for one kernel.
        ws, bs = zip(*[conv3x3_p(n_filters, n_filters) for _ in range(5)])
        return jnp.stack(ws), jnp.stack(bs)                      # (5, F, 9F), (5, F, 1)

    def branch(v_out, h_out):
        hv_w, hv_b = conv1x1_p(n_filters, 1)
        hh_w, hh_b = conv1x1_p(n_filters, 1)
        w, b = conv_stack()
        bvw, bvb = lin_pad(num_in, v_out)
        bhw, bhb = lin_pad(num_in, h_out)
        return {'w': w, 'b': b,
                'head_w': jnp.concatenate([hv_w, hh_w], axis=0),  # (2, F)  [v, h]
                'head_b': jnp.concatenate([hv_b, hh_b], axis=0),  # (2, 1)
                'body_w': jnp.stack([bvw, bhw]),                  # (2, NIN, 128)
                'body_b': jnp.stack([bvb, bhb])}                  # (2, 1, 128)

    p = {}
    p['first_w'], p['first_b'] = conv1x1_p(in_feature, n_filters)
    p['share_w'], p['share_b'] = conv_stack()
    intra = branch(num_h_out, num_w_out)    # v -> num_h_out, h -> num_w_out
    inter = branch(num_w_out, num_h_out)    # v -> num_w_out, h -> num_h_out
    p['branch'] = {k: jnp.stack([intra[k], inter[k]]) for k in intra}  # leading dim 2
    return p


# ------------------------- forward -------------------------

def dynamic_adj_forward(x_nchw, params, *, scale, num_h_node, num_w_node):
    B, Cin, H, W = x_nchw.shape
    HW1 = H * W
    L1 = _ceil_to(HW1, 128)
    x_flat = x_nchw.reshape(B, Cin, HW1).astype(jnp.float32)     # channel-first, HW on lanes
    if L1 != HW1:
        x_flat = jnp.pad(x_flat, ((0, 0), (0, 0), (0, L1 - HW1)))

    # Stage geometries / tap metadata (host-side, tiny).
    H2, W2 = _conv_out(H, 2), _conv_out(W, 2)
    HW2 = H2 * W2
    L2 = _ceil_to(HW2, 128)                                      # lane-dense padded stage-2 width
    st = scale // 2
    H3, W3 = _conv_out(H2, st), _conv_out(W2, st)
    HW3 = H3 * W3
    assert HW3 == num_h_node * num_w_node, "model geometry mismatch"

    shifts1, masks1 = make_tap_meta(H, W, L1)
    shifts2, masks2 = make_tap_meta(H2, W2, L2)
    sel1 = make_downsample_select(H, W, 2, L1, L2)               # share_downsample (stride 2)
    sel2 = make_downsample_select(H2, W2, st, L2, HW3)           # intra/inter downsample

    num_h_out = num_h_node * (num_h_node - 1) // 2
    num_w_out = num_w_node * (num_w_node - 1) // 2

    # Kernel 1: first 1x1 conv + 2 shared ResBlocks + stride-2 downsample.
    x_ds = stem_forward(x_flat, params['first_w'], params['first_b'],
                        params['share_w'], params['share_b'],
                        masks1, sel1, shifts1, L2)               # (B, F, L2)

    # Kernel 2: both branches fused (ResBlocks + ReLU + downsample + heads + bodies + clip).
    out = branches_forward(x_ds, params['branch'], masks2, sel2, shifts2)  # (2, B, 2, 128)

    intra_half_v = out[0, :, 0, :num_h_out]
    intra_half_h = out[0, :, 1, :num_w_out]
    inter_half_v = out[1, :, 0, :num_w_out]
    inter_half_h = out[1, :, 1, :num_h_out]

    intra_adj_v = construct_adj_batch(intra_half_v, num_h_node)
    intra_adj_h = construct_adj_batch(intra_half_h, num_w_node)
    inter_adj_v = construct_adj_batch(inter_half_v, num_w_node)
    inter_adj_h = construct_adj_batch(inter_half_h, num_h_node)

    g_intra_v = gen_adj_batch(intra_adj_v)
    g_intra_h = gen_adj_batch(intra_adj_h)
    g_inter_v = gen_adj_batch(inter_adj_v)
    g_inter_h = gen_adj_batch(inter_adj_h)

    adj_matrix, adj_ori_matrix = [], []
    for idx in range(B):
        adj_ori_matrix.extend([intra_adj_v[idx], intra_adj_h[idx],
                               inter_adj_v[idx], inter_adj_h[idx]])
        adj_matrix.append({'intra_adj_h': g_intra_h[idx], 'intra_adj_v': g_intra_v[idx],
                           'inter_adj_h': g_inter_h[idx], 'inter_adj_v': g_inter_v[idx]})
    return adj_matrix, adj_ori_matrix


# ------------------------- main -------------------------

if __name__ == "__main__":
    in_feature, n_filters = 4, 8
    ipt_h = ipt_w = 64
    scale = 4
    num_h_node = ipt_h // (4 * scale)                     # 4
    num_w_node = ipt_w // (4 * scale)                     # 4
    num_h_out = num_h_node * (num_h_node - 1) // 2        # 6
    num_w_out = num_w_node * (num_w_node - 1) // 2        # 6
    num_in = num_h_node * num_w_node                      # 16

    key = jax.random.PRNGKey(0)
    kx, kp = jax.random.split(key)
    # The module consumes the /4-resolution feature map of the full image.
    x = jax.random.normal(kx, (2, in_feature, ipt_h // 4, ipt_w // 4), jnp.float32)
    params = init_params(kp, in_feature, n_filters, num_in, num_h_out, num_w_out)

    adj_matrix, adj_ori_matrix = dynamic_adj_forward(
        x, params, scale=scale, num_h_node=num_h_node, num_w_node=num_w_node)
    jax.block_until_ready((adj_matrix, adj_ori_matrix))
    print("KERNEL_OK")
</pallas_src>

<mosaic_0001>
module attributes {stable_mosaic.version = 11 : i64} {
  func.func @kernel(%arg0: i32, %arg1: memref<2x4x256xf32, #tpu.memory_space<vmem>>, %arg2: memref<8x4xf32, #tpu.memory_space<vmem>>, %arg3: memref<8x1xf32, #tpu.memory_space<vmem>>, %arg4: memref<5x8x72xf32, #tpu.memory_space<vmem>>, %arg5: memref<5x8x1xf32, #tpu.memory_space<vmem>>, %arg6: memref<9x1x256xf32, #tpu.memory_space<vmem>>, %arg7: memref<256x128xf32, #tpu.memory_space<vmem>>, %arg8: memref<2x8x128xf32, #tpu.memory_space<vmem>>) attributes {dimension_semantics = [#tpu.dimension_semantics<arbitrary>], iteration_bounds = array<i64: 1>, scalar_prefetch = 0 : i64, scratch_operands = 0 : i64, tpu.core_type = #tpu.core_type<tc>, window_params = [{pipeline_mode = #tpu.pipeline_mode<synchronous>, transform_indices = @transform_0, window_bounds = array<i64: 2, 4, 256>}, {pipeline_mode = #tpu.pipeline_mode<synchronous>, transform_indices = @transform_1, window_bounds = array<i64: 8, 4>}, {pipeline_mode = #tpu.pipeline_mode<synchronous>, transform_indices = @transform_2, window_bounds = array<i64: 8, 1>}, {pipeline_mode = #tpu.pipeline_mode<synchronous>, transform_indices = @transform_3, window_bounds = array<i64: 5, 8, 72>}, {pipeline_mode = #tpu.pipeline_mode<synchronous>, transform_indices = @transform_4, window_bounds = array<i64: 5, 8, 1>}, {pipeline_mode = #tpu.pipeline_mode<synchronous>, transform_indices = @transform_5, window_bounds = array<i64: 9, 1, 256>}, {pipeline_mode = #tpu.pipeline_mode<synchronous>, transform_indices = @transform_6, window_bounds = array<i64: 256, 128>}, {pipeline_mode = #tpu.pipeline_mode<synchronous>, transform_indices = @transform_7, window_bounds = array<i64: 2, 8, 128>}]} {
    %c0 = arith.constant 0 : index
    %c0_0 = arith.constant 0 : index
    %0 = vector.load %arg2[%c0, %c0_0] : memref<8x4xf32, #tpu.memory_space<vmem>>, vector<8x4xf32>
    %c0_1 = arith.constant 0 : index
    %c0_2 = arith.constant 0 : index
    %1 = vector.load %arg3[%c0_1, %c0_2] : memref<8x1xf32, #tpu.memory_space<vmem>>, vector<8x1xf32>
    %c0_3 = arith.constant 0 : index
    %c0_4 = arith.constant 0 : index
    %2 = vector.load %arg7[%c0_3, %c0_4] : memref<256x128xf32, #tpu.memory_space<vmem>>, vector<256x128xf32>
    %c0_5 = arith.constant 0 : index
    %c0_6 = arith.constant 0 : index
    %c0_7 = arith.constant 0 : index
    %3 = vector.load %arg1[%c0_5, %c0_6, %c0_7] : memref<2x4x256xf32, #tpu.memory_space<vmem>>, vector<1x4x256xf32>
    %4 = vector.shape_cast %3 : vector<1x4x256xf32> to vector<4x256xf32>
    %cst = arith.constant dense<0.000000e+00> : vector<8x256xf32>
    %5 = tpu.matmul %0, %4, %cst {dimension_numbers = #tpu.dot_dimension_numbers<[1], [0], [0], [1], [0, 0, 1, 1], [], []>} : vector<8x4xf32>, vector<4x256xf32>, vector<8x256xf32> -> vector<8x256xf32>
    %6 = vector.broadcast %1 : vector<8x1xf32> to vector<8x256xf32>
    %7 = arith.addf %5, %6 : vector<8x256xf32>
    %c0_8 = arith.constant 0 : index
    %c0_9 = arith.constant 0 : index
    %c0_10 = arith.constant 0 : index
    %8 = vector.load %arg4[%c0_8, %c0_9, %c0_10] : memref<5x8x72xf32, #tpu.memory_space<vmem>>, vector<1x8x72xf32>
    %9 = vector.shape_cast %8 : vector<1x8x72xf32> to vector<8x72xf32>
    %c0_11 = arith.constant 0 : index
    %c0_12 = arith.constant 0 : index
    %c0_13 = arith.constant 0 : index
    %10 = vector.load %arg5[%c0_11, %c0_12, %c0_13] : memref<5x8x1xf32, #tpu.memory_space<vmem>>, vector<1x8x1xf32>
    %11 = vector.shape_cast %10 : vector<1x8x1xf32> to vector<8x1xf32>
    %c1 = arith.constant 1 : index
    %c0_14 = arith.constant 0 : index
    %c0_15 = arith.constant 0 : index
    %12 = vector.load %arg4[%c1, %c0_14, %c0_15] : memref<5x8x72xf32, #tpu.memory_space<vmem>>, vector<1x8x72xf32>
    %13 = vector.shape_cast %12 : vector<1x8x72xf32> to vector<8x72xf32>
    %c1_16 = arith.constant 1 : index
    %c0_17 = arith.constant 0 : index
    %c0_18 = arith.constant 0 : index
    %14 = vector.load %arg5[%c1_16, %c0_17, %c0_18] : memref<5x8x1xf32, #tpu.memory_space<vmem>>, vector<1x8x1xf32>
    %15 = vector.shape_cast %14 : vector<1x8x1xf32> to vector<8x1xf32>
    %c17_i32 = arith.constant 17 : i32
    %16 = tpu.dynamic_rotate %7 by %c17_i32 dim 1 : vector<8x256xf32>, i32 -> vector<8x256xf32>
    %c0_19 = arith.constant 0 : index
    %c0_20 = arith.constant 0 : index
    %c0_21 = arith.constant 0 : index
    %17 = vector.load %arg6[%c0_19, %c0_20, %c0_21] : memref<9x1x256xf32, #tpu.memory_space<vmem>>, vector<1x1x256xf32>
    %18 = vector.shape_cast %17 : vector<1x1x256xf32> to vector<1x256xf32>
    %19 = vector.broadcast %18 : vector<1x256xf32> to vector<8x256xf32>
    %20 = arith.mulf %16, %19 : vector<8x256xf32>
    %c16_i32 = arith.constant 16 : i32
    %21 = tpu.dynamic_rotate %7 by %c16_i32 dim 1 : vector<8x256xf32>, i32 -> vector<8x256xf32>
    %c1_22 = arith.constant 1 : index
    %c0_23 = arith.constant 0 : index
    %c0_24 = arith.constant 0 : index
    %22 = vector.load %arg6[%c1_22, %c0_23, %c0_24] : memref<9x1x256xf32, #tpu.memory_space<vmem>>, vector<1x1x256xf32>
    %23 = vector.shape_cast %22 : vector<1x1x256xf32> to vector<1x256xf32>
    %24 = vector.broadcast %23 : vector<1x256xf32> to vector<8x256xf32>
    %25 = arith.mulf %21, %24 : vector<8x256xf32>
    %c15_i32 = arith.constant 15 : i32
    %26 = tpu.dynamic_rotate %7 by %c15_i32 dim 1 : vector<8x256xf32>, i32 -> vector<8x256xf32>
    %c2 = arith.constant 2 : index
    %c0_25 = arith.constant 0 : index
    %c0_26 = arith.constant 0 : index
    %27 = vector.load %arg6[%c2, %c0_25, %c0_26] : memref<9x1x256xf32, #tpu.memory_space<vmem>>, vector<1x1x256xf32>
    %28 = vector.shape_cast %27 : vector<1x1x256xf32> to vector<1x256xf32>
    %29 = vector.broadcast %28 : vector<1x256xf32> to vector<8x256xf32>
    %30 = arith.mulf %26, %29 : vector<8x256xf32>
    %c1_i32 = arith.constant 1 : i32
    %31 = tpu.dynamic_rotate %7 by %c1_i32 dim 1 : vector<8x256xf32>, i32 -> vector<8x256xf32>
    %c3 = arith.constant 3 : index
    %c0_27 = arith.constant 0 : index
    %c0_28 = arith.constant 0 : index
    %32 = vector.load %arg6[%c3, %c0_27, %c0_28] : memref<9x1x256xf32, #tpu.memory_space<vmem>>, vector<1x1x256xf32>
    %33 = vector.shape_cast %32 : vector<1x1x256xf32> to vector<1x256xf32>
    %34 = vector.broadcast %33 : vector<1x256xf32> to vector<8x256xf32>
    %35 = arith.mulf %31, %34 : vector<8x256xf32>
    %c4 = arith.constant 4 : index
    %c0_29 = arith.constant 0 : index
    %c0_30 = arith.constant 0 : index
    %36 = vector.load %arg6[%c4, %c0_29, %c0_30] : memref<9x1x256xf32, #tpu.memory_space<vmem>>, vector<1x1x256xf32>
    %37 = vector.shape_cast %36 : vector<1x1x256xf32> to vector<1x256xf32>
    %38 = vector.broadcast %37 : vector<1x256xf32> to vector<8x256xf32>
    %39 = arith.mulf %7, %38 : vector<8x256xf32>
    %c255_i32 = arith.constant 255 : i32
    %40 = tpu.dynamic_rotate %7 by %c255_i32 dim 1 : vector<8x256xf32>, i32 -> vector<8x256xf32>
    %c5 = arith.constant 5 : index
    %c0_31 = arith.constant 0 : index
    %c0_32 = arith.constant 0 : index
    %41 = vector.load %arg6[%c5, %c0_31, %c0_32] : memref<9x1x256xf32, #tpu.memory_space<vmem>>, vector<1x1x256xf32>
    %42 = vector.shape_cast %41 : vector<1x1x256xf32> to vector<1x256xf32>
    %43 = vector.broadcast %42 : vector<1x256xf32> to vector<8x256xf32>
    %44 = arith.mulf %40, %43 : vector<8x256xf32>
    %c241_i32 = arith.constant 241 : i32
    %45 = tpu.dynamic_rotate %7 by %c241_i32 dim 1 : vector<8x256xf32>, i32 -> vector<8x256xf32>
    %c6 = arith.constant 6 : index
    %c0_33 = arith.constant 0 : index
    %c0_34 = arith.constant 0 : index
    %46 = vector.load %arg6[%c6, %c0_33, %c0_34] : memref<9x1x256xf32, #tpu.memory_space<vmem>>, vector<1x1x256xf32>
    %47 = vector.shape_cast %46 : vector<1x1x256xf32> to vector<1x256xf32>
    %48 = vector.broadcast %47 : vector<1x256xf32> to vector<8x256xf32>
    %49 = arith.mulf %45, %48 : vector<8x256xf32>
    %c240_i32 = arith.constant 240 : i32
    %50 = tpu.dynamic_rotate %7 by %c240_i32 dim 1 : vector<8x256xf32>, i32 -> vector<8x256xf32>
    %c7 = arith.constant 7 : index
    %c0_35 = arith.constant 0 : index
    %c0_36 = arith.constant 0 : index
    %51 = vector.load %arg6[%c7, %c0_35, %c0_36] : memref<9x1x256xf32, #tpu.memory_space<vmem>>, vector<1x1x256xf32>
    %52 = vector.shape_cast %51 : vector<1x1x256xf32> to vector<1x256xf32>
    %53 = vector.broadcast %52 : vector<1x256xf32> to vector<8x256xf32>
    %54 = arith.mulf %50, %53 : vector<8x256xf32>
    %c239_i32 = arith.constant 239 : i32
    %55 = tpu.dynamic_rotate %7 by %c239_i32 dim 1 : vector<8x256xf32>, i32 -> vector<8x256xf32>
    %c8 = arith.constant 8 : index
    %c0_37 = arith.constant 0 : index
    %c0_38 = arith.constant 0 : index
    %56 = vector.load %arg6[%c8, %c0_37, %c0_38] : memref<9x1x256xf32, #tpu.memory_space<vmem>>, vector<1x1x256xf32>
    %57 = vector.shape_cast %56 : vector<1x1x256xf32> to vector<1x256xf32>
    %58 = vector.broadcast %57 : vector<1x256xf32> to vector<8x256xf32>
    %59 = arith.mulf %55, %58 : vector<8x256xf32>
    %60 = tpu.concatenate %20, %25, %30, %35, %39, %44, %49, %54, %59 in 0 : vector<8x256xf32>, vector<8x256xf32>, vector<8x256xf32>, vector<8x256xf32>, vector<8x256xf32>, vector<8x256xf32>, vector<8x256xf32>, vector<8x256xf32>, vector<8x256xf32> -> vector<72x256xf32>
    %cst_39 = arith.constant dense<0.000000e+00> : vector<8x256xf32>
    %61 = tpu.matmul %9, %60, %cst_39 {dimension_numbers = #tpu.dot_dimension_numbers<[1], [0], [0], [1], [0, 0, 1, 1], [], []>} : vector<8x72xf32>, vector<72x256xf32>, vector<8x256xf32> -> vector<8x256xf32>
    %62 = vector.broadcast %11 : vector<8x1xf32> to vector<8x256xf32>
    %63 = arith.addf %61, %62 : vector<8x256xf32>
    %cst_40 = arith.constant 0.000000e+00 : f32
    %64 = vector.broadcast %cst_40 : f32 to vector<8x256xf32>
    %65 = arith.maximumf %63, %64 : vector<8x256xf32>
    %c17_i32_41 = arith.constant 17 : i32
    %66 = tpu.dynamic_rotate %65 by %c17_i32_41 dim 1 : vector<8x256xf32>, i32 -> vector<8x256xf32>
    %c0_42 = arith.constant 0 : index
    %c0_43 = arith.constant 0 : index
    %c0_44 = arith.constant 0 : index
    %67 = vector.load %arg6[%c0_42, %c0_43, %c0_44] : memref<9x1x256xf32, #tpu.memory_space<vmem>>, vector<1x1x256xf32>
    %68 = vector.shape_cast %67 : vector<1x1x256xf32> to vector<1x256xf32>
    %69 = vector.broadcast %68 : vector<1x256xf32> to vector<8x256xf32>
    %70 = arith.mulf %66, %69 : vector<8x256xf32>
    %c16_i32_45 = arith.constant 16 : i32
    %71 = tpu.dynamic_rotate %65 by %c16_i32_45 dim 1 : vector<8x256xf32>, i32 -> vector<8x256xf32>
    %c1_46 = arith.constant 1 : index
    %c0_47 = arith.constant 0 : index
    %c0_48 = arith.constant 0 : index
    %72 = vector.load %arg6[%c1_46, %c0_47, %c0_48] : memref<9x1x256xf32, #tpu.memory_space<vmem>>, vector<1x1x256xf32>
    %73 = vector.shape_cast %72 : vector<1x1x256xf32> to vector<1x256xf32>
    %74 = vector.broadcast %73 : vector<1x256xf32> to vector<8x256xf32>
    %75 = arith.mulf %71, %74 : vector<8x256xf32>
    %c15_i32_49 = arith.constant 15 : i32
    %76 = tpu.dynamic_rotate %65 by %c15_i32_49 dim 1 : vector<8x256xf32>, i32 -> vector<8x256xf32>
    %c2_50 = arith.constant 2 : index
    %c0_51 = arith.constant 0 : index
    %c0_52 = arith.constant 0 : index
    %77 = vector.load %arg6[%c2_50, %c0_51, %c0_52] : memref<9x1x256xf32, #tpu.memory_space<vmem>>, vector<1x1x256xf32>
    %78 = vector.shape_cast %77 : vector<1x1x256xf32> to vector<1x256xf32>
    %79 = vector.broadcast %78 : vector<1x256xf32> to vector<8x256xf32>
    %80 = arith.mulf %76, %79 : vector<8x256xf32>
    %c1_i32_53 = arith.constant 1 : i32
    %81 = tpu.dynamic_rotate %65 by %c1_i32_53 dim 1 : vector<8x256xf32>, i32 -> vector<8x256xf32>
    %c3_54 = arith.constant 3 : index
    %c0_55 = arith.constant 0 : index
    %c0_56 = arith.constant 0 : index
    %82 = vector.load %arg6[%c3_54, %c0_55, %c0_56] : memref<9x1x256xf32, #tpu.memory_space<vmem>>, vector<1x1x256xf32>
    %83 = vector.shape_cast %82 : vector<1x1x256xf32> to vector<1x256xf32>
    %84 = vector.broadcast %83 : vector<1x256xf32> to vector<8x256xf32>
    %85 = arith.mulf %81, %84 : vector<8x256xf32>
    %c4_57 = arith.constant 4 : index
    %c0_58 = arith.constant 0 : index
    %c0_59 = arith.constant 0 : index
    %86 = vector.load %arg6[%c4_57, %c0_58, %c0_59] : memref<9x1x256xf32, #tpu.memory_space<vmem>>, vector<1x1x256xf32>
    %87 = vector.shape_cast %86 : vector<1x1x256xf32> to vector<1x256xf32>
    %88 = vector.broadcast %87 : vector<1x256xf32> to vector<8x256xf32>
    %89 = arith.mulf %65, %88 : vector<8x256xf32>
    %c255_i32_60 = arith.constant 255 : i32
    %90 = tpu.dynamic_rotate %65 by %c255_i32_60 dim 1 : vector<8x256xf32>, i32 -> vector<8x256xf32>
    %c5_61 = arith.constant 5 : index
    %c0_62 = arith.constant 0 : index
    %c0_63 = arith.constant 0 : index
    %91 = vector.load %arg6[%c5_61, %c0_62, %c0_63] : memref<9x1x256xf32, #tpu.memory_space<vmem>>, vector<1x1x256xf32>
    %92 = vector.shape_cast %91 : vector<1x1x256xf32> to vector<1x256xf32>
    %93 = vector.broadcast %92 : vector<1x256xf32> to vector<8x256xf32>
    %94 = arith.mulf %90, %93 : vector<8x256xf32>
    %c241_i32_64 = arith.constant 241 : i32
    %95 = tpu.dynamic_rotate %65 by %c241_i32_64 dim 1 : vector<8x256xf32>, i32 -> vector<8x256xf32>
    %c6_65 = arith.constant 6 : index
    %c0_66 = arith.constant 0 : index
    %c0_67 = arith.constant 0 : index
    %96 = vector.load %arg6[%c6_65, %c0_66, %c0_67] : memref<9x1x256xf32, #tpu.memory_space<vmem>>, vector<1x1x256xf32>
    %97 = vector.shape_cast %96 : vector<1x1x256xf32> to vector<1x256xf32>
    %98 = vector.broadcast %97 : vector<1x256xf32> to vector<8x256xf32>
    %99 = arith.mulf %95, %98 : vector<8x256xf32>
    %c240_i32_68 = arith.constant 240 : i32
    %100 = tpu.dynamic_rotate %65 by %c240_i32_68 dim 1 : vector<8x256xf32>, i32 -> vector<8x256xf32>
    %c7_69 = arith.constant 7 : index
    %c0_70 = arith.constant 0 : index
    %c0_71 = arith.constant 0 : index
    %101 = vector.load %arg6[%c7_69, %c0_70, %c0_71] : memref<9x1x256xf32, #tpu.memory_space<vmem>>, vector<1x1x256xf32>
    %102 = vector.shape_cast %101 : vector<1x1x256xf32> to vector<1x256xf32>
    %103 = vector.broadcast %102 : vector<1x256xf32> to vector<8x256xf32>
    %104 = arith.mulf %100, %103 : vector<8x256xf32>
    %c239_i32_72 = arith.constant 239 : i32
    %105 = tpu.dynamic_rotate %65 by %c239_i32_72 dim 1 : vector<8x256xf32>, i32 -> vector<8x256xf32>
    %c8_73 = arith.constant 8 : index
    %c0_74 = arith.constant 0 : index
    %c0_75 = arith.constant 0 : index
    %106 = vector.load %arg6[%c8_73, %c0_74, %c0_75] : memref<9x1x256xf32, #tpu.memory_space<vmem>>, vector<1x1x256xf32>
    %107 = vector.shape_cast %106 : vector<1x1x256xf32> to vector<1x256xf32>
    %108 = vector.broadcast %107 : vector<1x256xf32> to vector<8x256xf32>
    %109 = arith.mulf %105, %108 : vector<8x256xf32>
    %110 = tpu.concatenate %70, %75, %80, %85, %89, %94, %99, %104, %109 in 0 : vector<8x256xf32>, vector<8x256xf32>, vector<8x256xf32>, vector<8x256xf32>, vector<8x256xf32>, vector<8x256xf32>, vector<8x256xf32>, vector<8x256xf32>, vector<8x256xf32> -> vector<72x256xf32>
    %cst_76 = arith.constant dense<0.000000e+00> : vector<8x256xf32>
    %111 = tpu.matmul %13, %110, %cst_76 {dimension_numbers = #tpu.dot_dimension_numbers<[1], [0], [0], [1], [0, 0, 1, 1], [], []>} : vector<8x72xf32>, vector<72x256xf32>, vector<8x256xf32> -> vector<8x256xf32>
    %112 = vector.broadcast %15 : vector<8x1xf32> to vector<8x256xf32>
    %113 = arith.addf %111, %112 : vector<8x256xf32>
    %114 = arith.addf %113, %7 : vector<8x256xf32>
    %c2_77 = arith.constant 2 : index
    %c0_78 = arith.constant 0 : index
    %c0_79 = arith.constant 0 : index
    %115 = vector.load %arg4[%c2_77, %c0_78, %c0_79] : memref<5x8x72xf32, #tpu.memory_space<vmem>>, vector<1x8x72xf32>
    %116 = vector.shape_cast %115 : vector<1x8x72xf32> to vector<8x72xf32>
    %c2_80 = arith.constant 2 : index
    %c0_81 = arith.constant 0 : index
    %c0_82 = arith.constant 0 : index
    %117 = vector.load %arg5[%c2_80, %c0_81, %c0_82] : memref<5x8x1xf32, #tpu.memory_space<vmem>>, vector<1x8x1xf32>
    %118 = vector.shape_cast %117 : vector<1x8x1xf32> to vector<8x1xf32>
    %c3_83 = arith.constant 3 : index
    %c0_84 = arith.constant 0 : index
    %c0_85 = arith.constant 0 : index
    %119 = vector.load %arg4[%c3_83, %c0_84, %c0_85] : memref<5x8x72xf32, #tpu.memory_space<vmem>>, vector<1x8x72xf32>
    %120 = vector.shape_cast %119 : vector<1x8x72xf32> to vector<8x72xf32>
    %c3_86 = arith.constant 3 : index
    %c0_87 = arith.constant 0 : index
    %c0_88 = arith.constant 0 : index
    %121 = vector.load %arg5[%c3_86, %c0_87, %c0_88] : memref<5x8x1xf32, #tpu.memory_space<vmem>>, vector<1x8x1xf32>
    %122 = vector.shape_cast %121 : vector<1x8x1xf32> to vector<8x1xf32>
    %c17_i32_89 = arith.constant 17 : i32
    %123 = tpu.dynamic_rotate %114 by %c17_i32_89 dim 1 : vector<8x256xf32>, i32 -> vector<8x256xf32>
    %c0_90 = arith.constant 0 : index
    %c0_91 = arith.constant 0 : index
    %c0_92 = arith.constant 0 : index
    %124 = vector.load %arg6[%c0_90, %c0_91, %c0_92] : memref<9x1x256xf32, #tpu.memory_space<vmem>>, vector<1x1x256xf32>
    %125 = vector.shape_cast %124 : vector<1x1x256xf32> to vector<1x256xf32>
    %126 = vector.broadcast %125 : vector<1x256xf32> to vector<8x256xf32>
    %127 = arith.mulf %123, %126 : vector<8x256xf32>
    %c16_i32_93 = arith.constant 16 : i32
    %128 = tpu.dynamic_rotate %114 by %c16_i32_93 dim 1 : vector<8x256xf32>, i32 -> vector<8x256xf32>
    %c1_94 = arith.constant 1 : index
    %c0_95 = arith.constant 0 : index
    %c0_96 = arith.constant 0 : index
    %129 = vector.load %arg6[%c1_94, %c0_95, %c0_96] : memref<9x1x256xf32, #tpu.memory_space<vmem>>, vector<1x1x256xf32>
    %130 = vector.shape_cast %129 : vector<1x1x256xf32> to vector<1x256xf32>
    %131 = vector.broadcast %130 : vector<1x256xf32> to vector<8x256xf32>
    %132 = arith.mulf %128, %131 : vector<8x256xf32>
    %c15_i32_97 = arith.constant 15 : i32
    %133 = tpu.dynamic_rotate %114 by %c15_i32_97 dim 1 : vector<8x256xf32>, i32 -> vector<8x256xf32>
    %c2_98 = arith.constant 2 : index
    %c0_99 = arith.constant 0 : index
    %c0_100 = arith.constant 0 : index
    %134 = vector.load %arg6[%c2_98, %c0_99, %c0_100] : memref<9x1x256xf32, #tpu.memory_space<vmem>>, vector<1x1x256xf32>
    %135 = vector.shape_cast %134 : vector<1x1x256xf32> to vector<1x256xf32>
    %136 = vector.broadcast %135 : vector<1x256xf32> to vector<8x256xf32>
    %137 = arith.mulf %133, %136 : vector<8x256xf32>
    %c1_i32_101 = arith.constant 1 : i32
    %138 = tpu.dynamic_rotate %114 by %c1_i32_101 dim 1 : vector<8x256xf32>, i32 -> vector<8x256xf32>
    %c3_102 = arith.constant 3 : index
    %c0_103 = arith.constant 0 : index
    %c0_104 = arith.constant 0 : index
    %139 = vector.load %arg6[%c3_102, %c0_103, %c0_104] : memref<9x1x256xf32, #tpu.memory_space<vmem>>, vector<1x1x256xf32>
    %140 = vector.shape_cast %139 : vector<1x1x256xf32> to vector<1x256xf32>
    %141 = vector.broadcast %140 : vector<1x256xf32> to vector<8x256xf32>
    %142 = arith.mulf %138, %141 : vector<8x256xf32>
    %c4_105 = arith.constant 4 : index
    %c0_106 = arith.constant 0 : index
    %c0_107 = arith.constant 0 : index
    %143 = vector.load %arg6[%c4_105, %c0_106, %c0_107] : memref<9x1x256xf32, #tpu.memory_space<vmem>>, vector<1x1x256xf32>
    %144 = vector.shape_cast %143 : vector<1x1x256xf32> to vector<1x256xf32>
    %145 = vector.broadcast %144 : vector<1x256xf32> to vector<8x256xf32>
    %146 = arith.mulf %114, %145 : vector<8x256xf32>
    %c255_i32_108 = arith.constant 255 : i32
    %147 = tpu.dynamic_rotate %114 by %c255_i32_108 dim 1 : vector<8x256xf32>, i32 -> vector<8x256xf32>
    %c5_109 = arith.constant 5 : index
    %c0_110 = arith.constant 0 : index
    %c0_111 = arith.constant 0 : index
    %148 = vector.load %arg6[%c5_109, %c0_110, %c0_111] : memref<9x1x256xf32, #tpu.memory_space<vmem>>, vector<1x1x256xf32>
    %149 = vector.shape_cast %148 : vector<1x1x256xf32> to vector<1x256xf32>
    %150 = vector.broadcast %149 : vector<1x256xf32> to vector<8x256xf32>
    %151 = arith.mulf %147, %150 : vector<8x256xf32>
    %c241_i32_112 = arith.constant 241 : i32
    %152 = tpu.dynamic_rotate %114 by %c241_i32_112 dim 1 : vector<8x256xf32>, i32 -> vector<8x256xf32>
    %c6_113 = arith.constant 6 : index
    %c0_114 = arith.constant 0 : index
    %c0_115 = arith.constant 0 : index
    %153 = vector.load %arg6[%c6_113, %c0_114, %c0_115] : memref<9x1x256xf32, #tpu.memory_space<vmem>>, vector<1x1x256xf32>
    %154 = vector.shape_cast %153 : vector<1x1x256xf32> to vector<1x256xf32>
    %155 = vector.broadcast %154 : vector<1x256xf32> to vector<8x256xf32>
    %156 = arith.mulf %152, %155 : vector<8x256xf32>
    %c240_i32_116 = arith.constant 240 : i32
    %157 = tpu.dynamic_rotate %114 by %c240_i32_116 dim 1 : vector<8x256xf32>, i32 -> vector<8x256xf32>
    %c7_117 = arith.constant 7 : index
    %c0_118 = arith.constant 0 : index
    %c0_119 = arith.constant 0 : index
    %158 = vector.load %arg6[%c7_117, %c0_118, %c0_119] : memref<9x1x256xf32, #tpu.memory_space<vmem>>, vector<1x1x256xf32>
    %159 = vector.shape_cast %158 : vector<1x1x256xf32> to vector<1x256xf32>
    %160 = vector.broadcast %159 : vector<1x256xf32> to vector<8x256xf32>
    %161 = arith.mulf %157, %160 : vector<8x256xf32>
    %c239_i32_120 = arith.constant 239 : i32
    %162 = tpu.dynamic_rotate %114 by %c239_i32_120 dim 1 : vector<8x256xf32>, i32 -> vector<8x256xf32>
    %c8_121 = arith.constant 8 : index
    %c0_122 = arith.constant 0 : index
    %c0_123 = arith.constant 0 : index
    %163 = vector.load %arg6[%c8_121, %c0_122, %c0_123] : memref<9x1x256xf32, #tpu.memory_space<vmem>>, vector<1x1x256xf32>
    %164 = vector.shape_cast %163 : vector<1x1x256xf32> to vector<1x256xf32>
    %165 = vector.broadcast %164 : vector<1x256xf32> to vector<8x256xf32>
    %166 = arith.mulf %162, %165 : vector<8x256xf32>
    %167 = tpu.concatenate %127, %132, %137, %142, %146, %151, %156, %161, %166 in 0 : vector<8x256xf32>, vector<8x256xf32>, vector<8x256xf32>, vector<8x256xf32>, vector<8x256xf32>, vector<8x256xf32>, vector<8x256xf32>, vector<8x256xf32>, vector<8x256xf32> -> vector<72x256xf32>
    %cst_124 = arith.constant dense<0.000000e+00> : vector<8x256xf32>
    %168 = tpu.matmul %116, %167, %cst_124 {dimension_numbers = #tpu.dot_dimension_numbers<[1], [0], [0], [1], [0, 0, 1, 1], [], []>} : vector<8x72xf32>, vector<72x256xf32>, vector<8x256xf32> -> vector<8x256xf32>
    %169 = vector.broadcast %118 : vector<8x1xf32> to vector<8x256xf32>
    %170 = arith.addf %168, %169 : vector<8x256xf32>
    %cst_125 = arith.constant 0.000000e+00 : f32
    %171 = vector.broadcast %cst_125 : f32 to vector<8x256xf32>
    %172 = arith.maximumf %170, %171 : vector<8x256xf32>
    %c17_i32_126 = arith.constant 17 : i32
    %173 = tpu.dynamic_rotate %172 by %c17_i32_126 dim 1 : vector<8x256xf32>, i32 -> vector<8x256xf32>
    %c0_127 = arith.constant 0 : index
    %c0_128 = arith.constant 0 : index
    %c0_129 = arith.constant 0 : index
    %174 = vector.load %arg6[%c0_127, %c0_128, %c0_129] : memref<9x1x256xf32, #tpu.memory_space<vmem>>, vector<1x1x256xf32>
    %175 = vector.shape_cast %174 : vector<1x1x256xf32> to vector<1x256xf32>
    %176 = vector.broadcast %175 : vector<1x256xf32> to vector<8x256xf32>
    %177 = arith.mulf %173, %176 : vector<8x256xf32>
    %c16_i32_130 = arith.constant 16 : i32
    %178 = tpu.dynamic_rotate %172 by %c16_i32_130 dim 1 : vector<8x256xf32>, i32 -> vector<8x256xf32>
    %c1_131 = arith.constant 1 : index
    %c0_132 = arith.constant 0 : index
    %c0_133 = arith.constant 0 : index
    %179 = vector.load %arg6[%c1_131, %c0_132, %c0_133] : memref<9x1x256xf32, #tpu.memory_space<vmem>>, vector<1x1x256xf32>
    %180 = vector.shape_cast %179 : vector<1x1x256xf32> to vector<1x256xf32>
    %181 = vector.broadcast %180 : vector<1x256xf32> to vector<8x256xf32>
    %182 = arith.mulf %178, %181 : vector<8x256xf32>
    %c15_i32_134 = arith.constant 15 : i32
    %183 = tpu.dynamic_rotate %172 by %c15_i32_134 dim 1 : vector<8x256xf32>, i32 -> vector<8x256xf32>
    %c2_135 = arith.constant 2 : index
    %c0_136 = arith.constant 0 : index
    %c0_137 = arith.constant 0 : index
    %184 = vector.load %arg6[%c2_135, %c0_136, %c0_137] : memref<9x1x256xf32, #tpu.memory_space<vmem>>, vector<1x1x256xf32>
    %185 = vector.shape_cast %184 : vector<1x1x256xf32> to vector<1x256xf32>
    %186 = vector.broadcast %185 : vector<1x256xf32> to vector<8x256xf32>
    %187 = arith.mulf %183, %186 : vector<8x256xf32>
    %c1_i32_138 = arith.constant 1 : i32
    %188 = tpu.dynamic_rotate %172 by %c1_i32_138 dim 1 : vector<8x256xf32>, i32 -> vector<8x256xf32>
    %c3_139 = arith.constant 3 : index
    %c0_140 = arith.constant 0 : index
    %c0_141 = arith.constant 0 : index
    %189 = vector.load %arg6[%c3_139, %c0_140, %c0_141] : memref<9x1x256xf32, #tpu.memory_space<vmem>>, vector<1x1x256xf32>
    %190 = vector.shape_cast %189 : vector<1x1x256xf32> to vector<1x256xf32>
    %191 = vector.broadcast %190 : vector<1x256xf32> to vector<8x256xf32>
    %192 = arith.mulf %188, %191 : vector<8x256xf32>
    %c4_142 = arith.constant 4 : index
    %c0_143 = arith.constant 0 : index
    %c0_144 = arith.constant 0 : index
    %193 = vector.load %arg6[%c4_142, %c0_143, %c0_144] : memref<9x1x256xf32, #tpu.memory_space<vmem>>, vector<1x1x256xf32>
    %194 = vector.shape_cast %193 : vector<1x1x256xf32> to vector<1x256xf32>
    %195 = vector.broadcast %194 : vector<1x256xf32> to vector<8x256xf32>
    %196 = arith.mulf %172, %195 : vector<8x256xf32>
    %c255_i32_145 = arith.constant 255 : i32
    %197 = tpu.dynamic_rotate %172 by %c255_i32_145 dim 1 : vector<8x256xf32>, i32 -> vector<8x256xf32>
    %c5_146 = arith.constant 5 : index
    %c0_147 = arith.constant 0 : index
    %c0_148 = arith.constant 0 : index
    %198 = vector.load %arg6[%c5_146, %c0_147, %c0_148] : memref<9x1x256xf32, #tpu.memory_space<vmem>>, vector<1x1x256xf32>
    %199 = vector.shape_cast %198 : vector<1x1x256xf32> to vector<1x256xf32>
    %200 = vector.broadcast %199 : vector<1x256xf32> to vector<8x256xf32>
    %201 = arith.mulf %197, %200 : vector<8x256xf32>
    %c241_i32_149 = arith.constant 241 : i32
    %202 = tpu.dynamic_rotate %172 by %c241_i32_149 dim 1 : vector<8x256xf32>, i32 -> vector<8x256xf32>
    %c6_150 = arith.constant 6 : index
    %c0_151 = arith.constant 0 : index
    %c0_152 = arith.constant 0 : index
    %203 = vector.load %arg6[%c6_150, %c0_151, %c0_152] : memref<9x1x256xf32, #tpu.memory_space<vmem>>, vector<1x1x256xf32>
    %204 = vector.shape_cast %203 : vector<1x1x256xf32> to vector<1x256xf32>
    %205 = vector.broadcast %204 : vector<1x256xf32> to vector<8x256xf32>
    %206 = arith.mulf %202, %205 : vector<8x256xf32>
    %c240_i32_153 = arith.constant 240 : i32
    %207 = tpu.dynamic_rotate %172 by %c240_i32_153 dim 1 : vector<8x256xf32>, i32 -> vector<8x256xf32>
    %c7_154 = arith.constant 7 : index
    %c0_155 = arith.constant 0 : index
    %c0_156 = arith.constant 0 : index
    %208 = vector.load %arg6[%c7_154, %c0_155, %c0_156] : memref<9x1x256xf32, #tpu.memory_space<vmem>>, vector<1x1x256xf32>
    %209 = vector.shape_cast %208 : vector<1x1x256xf32> to vector<1x256xf32>
    %210 = vector.broadcast %209 : vector<1x256xf32> to vector<8x256xf32>
    %211 = arith.mulf %207, %210 : vector<8x256xf32>
    %c239_i32_157 = arith.constant 239 : i32
    %212 = tpu.dynamic_rotate %172 by %c239_i32_157 dim 1 : vector<8x256xf32>, i32 -> vector<8x256xf32>
    %c8_158 = arith.constant 8 : index
    %c0_159 = arith.constant 0 : index
    %c0_160 = arith.constant 0 : index
    %213 = vector.load %arg6[%c8_158, %c0_159, %c0_160] : memref<9x1x256xf32, #tpu.memory_space<vmem>>, vector<1x1x256xf32>
    %214 = vector.shape_cast %213 : vector<1x1x256xf32> to vector<1x256xf32>
    %215 = vector.broadcast %214 : vector<1x256xf32> to vector<8x256xf32>
    %216 = arith.mulf %212, %215 : vector<8x256xf32>
    %217 = tpu.concatenate %177, %182, %187, %192, %196, %201, %206, %211, %216 in 0 : vector<8x256xf32>, vector<8x256xf32>, vector<8x256xf32>, vector<8x256xf32>, vector<8x256xf32>, vector<8x256xf32>, vector<8x256xf32>, vector<8x256xf32>, vector<8x256xf32> -> vector<72x256xf32>
    %cst_161 = arith.constant dense<0.000000e+00> : vector<8x256xf32>
    %218 = tpu.matmul %120, %217, %cst_161 {dimension_numbers = #tpu.dot_dimension_numbers<[1], [0], [0], [1], [0, 0, 1, 1], [], []>} : vector<8x72xf32>, vector<72x256xf32>, vector<8x256xf32> -> vector<8x256xf32>
    %219 = vector.broadcast %122 : vector<8x1xf32> to vector<8x256xf32>
    %220 = arith.addf %218, %219 : vector<8x256xf32>
    %221 = arith.addf %220, %114 : vector<8x256xf32>
    %c4_162 = arith.constant 4 : index
    %c0_163 = arith.constant 0 : index
    %c0_164 = arith.constant 0 : index
    %222 = vector.load %arg4[%c4_162, %c0_163, %c0_164] : memref<5x8x72xf32, #tpu.memory_space<vmem>>, vector<1x8x72xf32>
    %223 = vector.shape_cast %222 : vector<1x8x72xf32> to vector<8x72xf32>
    %c4_165 = arith.constant 4 : index
    %c0_166 = arith.constant 0 : index
    %c0_167 = arith.constant 0 : index
    %224 = vector.load %arg5[%c4_165, %c0_166, %c0_167] : memref<5x8x1xf32, #tpu.memory_space<vmem>>, vector<1x8x1xf32>
    %225 = vector.shape_cast %224 : vector<1x8x1xf32> to vector<8x1xf32>
    %c17_i32_168 = arith.constant 17 : i32
    %226 = tpu.dynamic_rotate %221 by %c17_i32_168 dim 1 : vector<8x256xf32>, i32 -> vector<8x256xf32>
    %c0_169 = arith.constant 0 : index
    %c0_170 = arith.constant 0 : index
    %c0_171 = arith.constant 0 : index
    %227 = vector.load %arg6[%c0_169, %c0_170, %c0_171] : memref<9x1x256xf32, #tpu.memory_space<vmem>>, vector<1x1x256xf32>
    %228 = vector.shape_cast %227 : vector<1x1x256xf32> to vector<1x256xf32>
    %229 = vector.broadcast %228 : vector<1x256xf32> to vector<8x256xf32>
    %230 = arith.mulf %226, %229 : vector<8x256xf32>
    %c16_i32_172 = arith.constant 16 : i32
    %231 = tpu.dynamic_rotate %221 by %c16_i32_172 dim 1 : vector<8x256xf32>, i32 -> vector<8x256xf32>
    %c1_173 = arith.constant 1 : index
    %c0_174 = arith.constant 0 : index
    %c0_175 = arith.constant 0 : index
    %232 = vector.load %arg6[%c1_173, %c0_174, %c0_175] : memref<9x1x256xf32, #tpu.memory_space<vmem>>, vector<1x1x256xf32>
    %233 = vector.shape_cast %232 : vector<1x1x256xf32> to vector<1x256xf32>
    %234 = vector.broadcast %233 : vector<1x256xf32> to vector<8x256xf32>
    %235 = arith.mulf %231, %234 : vector<8x256xf32>
    %c15_i32_176 = arith.constant 15 : i32
    %236 = tpu.dynamic_rotate %221 by %c15_i32_176 dim 1 : vector<8x256xf32>, i32 -> vector<8x256xf32>
    %c2_177 = arith.constant 2 : index
    %c0_178 = arith.constant 0 : index
    %c0_179 = arith.constant 0 : index
    %237 = vector.load %arg6[%c2_177, %c0_178, %c0_179] : memref<9x1x256xf32, #tpu.memory_space<vmem>>, vector<1x1x256xf32>
    %238 = vector.shape_cast %237 : vector<1x1x256xf32> to vector<1x256xf32>
    %239 = vector.broadcast %238 : vector<1x256xf32> to vector<8x256xf32>
    %240 = arith.mulf %236, %239 : vector<8x256xf32>
    %c1_i32_180 = arith.constant 1 : i32
    %241 = tpu.dynamic_rotate %221 by %c1_i32_180 dim 1 : vector<8x256xf32>, i32 -> vector<8x256xf32>
    %c3_181 = arith.constant 3 : index
    %c0_182 = arith.constant 0 : index
    %c0_183 = arith.constant 0 : index
    %242 = vector.load %arg6[%c3_181, %c0_182, %c0_183] : memref<9x1x256xf32, #tpu.memory_space<vmem>>, vector<1x1x256xf32>
    %243 = vector.shape_cast %242 : vector<1x1x256xf32> to vector<1x256xf32>
    %244 = vector.broadcast %243 : vector<1x256xf32> to vector<8x256xf32>
    %245 = arith.mulf %241, %244 : vector<8x256xf32>
    %c4_184 = arith.constant 4 : index
    %c0_185 = arith.constant 0 : index
    %c0_186 = arith.constant 0 : index
    %246 = vector.load %arg6[%c4_184, %c0_185, %c0_186] : memref<9x1x256xf32, #tpu.memory_space<vmem>>, vector<1x1x256xf32>
    %247 = vector.shape_cast %246 : vector<1x1x256xf32> to vector<1x256xf32>
    %248 = vector.broadcast %247 : vector<1x256xf32> to vector<8x256xf32>
    %249 = arith.mulf %221, %248 : vector<8x256xf32>
    %c255_i32_187 = arith.constant 255 : i32
    %250 = tpu.dynamic_rotate %221 by %c255_i32_187 dim 1 : vector<8x256xf32>, i32 -> vector<8x256xf32>
    %c5_188 = arith.constant 5 : index
    %c0_189 = arith.constant 0 : index
    %c0_190 = arith.constant 0 : index
    %251 = vector.load %arg6[%c5_188, %c0_189, %c0_190] : memref<9x1x256xf32, #tpu.memory_space<vmem>>, vector<1x1x256xf32>
    %252 = vector.shape_cast %251 : vector<1x1x256xf32> to vector<1x256xf32>
    %253 = vector.broadcast %252 : vector<1x256xf32> to vector<8x256xf32>
    %254 = arith.mulf %250, %253 : vector<8x256xf32>
    %c241_i32_191 = arith.constant 241 : i32
    %255 = tpu.dynamic_rotate %221 by %c241_i32_191 dim 1 : vector<8x256xf32>, i32 -> vector<8x256xf32>
    %c6_192 = arith.constant 6 : index
    %c0_193 = arith.constant 0 : index
    %c0_194 = arith.constant 0 : index
    %256 = vector.load %arg6[%c6_192, %c0_193, %c0_194] : memref<9x1x256xf32, #tpu.memory_space<vmem>>, vector<1x1x256xf32>
    %257 = vector.shape_cast %256 : vector<1x1x256xf32> to vector<1x256xf32>
    %258 = vector.broadcast %257 : vector<1x256xf32> to vector<8x256xf32>
    %259 = arith.mulf %255, %258 : vector<8x256xf32>
    %c240_i32_195 = arith.constant 240 : i32
    %260 = tpu.dynamic_rotate %221 by %c240_i32_195 dim 1 : vector<8x256xf32>, i32 -> vector<8x256xf32>
    %c7_196 = arith.constant 7 : index
    %c0_197 = arith.constant 0 : index
    %c0_198 = arith.constant 0 : index
    %261 = vector.load %arg6[%c7_196, %c0_197, %c0_198] : memref<9x1x256xf32, #tpu.memory_space<vmem>>, vector<1x1x256xf32>
    %262 = vector.shape_cast %261 : vector<1x1x256xf32> to vector<1x256xf32>
    %263 = vector.broadcast %262 : vector<1x256xf32> to vector<8x256xf32>
    %264 = arith.mulf %260, %263 : vector<8x256xf32>
    %c239_i32_199 = arith.constant 239 : i32
    %265 = tpu.dynamic_rotate %221 by %c239_i32_199 dim 1 : vector<8x256xf32>, i32 -> vector<8x256xf32>
    %c8_200 = arith.constant 8 : index
    %c0_201 = arith.constant 0 : index
    %c0_202 = arith.constant 0 : index
    %266 = vector.load %arg6[%c8_200, %c0_201, %c0_202] : memref<9x1x256xf32, #tpu.memory_space<vmem>>, vector<1x1x256xf32>
    %267 = vector.shape_cast %266 : vector<1x1x256xf32> to vector<1x256xf32>
    %268 = vector.broadcast %267 : vector<1x256xf32> to vector<8x256xf32>
    %269 = arith.mulf %265, %268 : vector<8x256xf32>
    %270 = tpu.concatenate %230, %235, %240, %245, %249, %254, %259, %264, %269 in 0 : vector<8x256xf32>, vector<8x256xf32>, vector<8x256xf32>, vector<8x256xf32>, vector<8x256xf32>, vector<8x256xf32>, vector<8x256xf32>, vector<8x256xf32>, vector<8x256xf32> -> vector<72x256xf32>
    %cst_203 = arith.constant dense<0.000000e+00> : vector<8x256xf32>
    %271 = tpu.matmul %223, %270, %cst_203 {dimension_numbers = #tpu.dot_dimension_numbers<[1], [0], [0], [1], [0, 0, 1, 1], [], []>} : vector<8x72xf32>, vector<72x256xf32>, vector<8x256xf32> -> vector<8x256xf32>
    %272 = vector.broadcast %225 : vector<8x1xf32> to vector<8x256xf32>
    %273 = arith.addf %271, %272 : vector<8x256xf32>
    %cst_204 = arith.constant dense<0.000000e+00> : vector<8x128xf32>
    %274 = tpu.matmul %273, %2, %cst_204 {dimension_numbers = #tpu.dot_dimension_numbers<[1], [0], [0], [1], [0, 0, 1, 1], [], []>} : vector<8x256xf32>, vector<256x128xf32>, vector<8x128xf32> -> vector<8x128xf32>
    %c0_205 = arith.constant 0 : index
    %c0_206 = arith.constant 0 : index
    %c0_207 = arith.constant 0 : index
    %275 = vector.load %arg8[%c0_205, %c0_206, %c0_207] : memref<2x8x128xf32, #tpu.memory_space<vmem>>, vector<1x8x128xf32>
    %276 = vector.shape_cast %275 : vector<1x8x128xf32> to vector<8x128xf32>
    %277 = vector.shape_cast %274 : vector<8x128xf32> to vector<1x8x128xf32>
    tpu.vector_store %arg8[%c0_205, %c0_206, %c0_207], %277 {strides = array<i32>} : memref<2x8x128xf32, #tpu.memory_space<vmem>>, vector<1x8x128xf32>,
    %c1_208 = arith.constant 1 : index
    %c0_209 = arith.constant 0 : index
    %c0_210 = arith.constant 0 : index
    %278 = vector.load %arg1[%c1_208, %c0_209, %c0_210] : memref<2x4x256xf32, #tpu.memory_space<vmem>>, vector<1x4x256xf32>
    %279 = vector.shape_cast %278 : vector<1x4x256xf32> to vector<4x256xf32>
    %cst_211 = arith.constant dense<0.000000e+00> : vector<8x256xf32>
    %280 = tpu.matmul %0, %279, %cst_211 {dimension_numbers = #tpu.dot_dimension_numbers<[1], [0], [0], [1], [0, 0, 1, 1], [], []>} : vector<8x4xf32>, vector<4x256xf32>, vector<8x256xf32> -> vector<8x256xf32>
    %281 = vector.broadcast %1 : vector<8x1xf32> to vector<8x256xf32>
    %282 = arith.addf %280, %281 : vector<8x256xf32>
    %c0_212 = arith.constant 0 : index
    %c0_213 = arith.constant 0 : index
    %c0_214 = arith.constant 0 : index
    %283 = vector.load %arg4[%c0_212, %c0_213, %c0_214] : memref<5x8x72xf32, #tpu.memory_space<vmem>>, vector<1x8x72xf32>
    %284 = vector.shape_cast %283 : vector<1x8x72xf32> to vector<8x72xf32>
    %c0_215 = arith.constant 0 : index
    %c0_216 = arith.constant 0 : index
    %c0_217 = arith.constant 0 : index
    %285 = vector.load %arg5[%c0_215, %c0_216, %c0_217] : memref<5x8x1xf32, #tpu.memory_space<vmem>>, vector<1x8x1xf32>
    %286 = vector.shape_cast %285 : vector<1x8x1xf32> to vector<8x1xf32>
    %c1_218 = arith.constant 1 : index
    %c0_219 = arith.constant 0 : index
    %c0_220 = arith.constant 0 : index
    %287 = vector.load %arg4[%c1_218, %c0_219, %c0_220] : memref<5x8x72xf32, #tpu.memory_space<vmem>>, vector<1x8x72xf32>
    %288 = vector.shape_cast %287 : vector<1x8x72xf32> to vector<8x72xf32>
    %c1_221 = arith.constant 1 : index
    %c0_222 = arith.constant 0 : index
    %c0_223 = arith.constant 0 : index
    %289 = vector.load %arg5[%c1_221, %c0_222, %c0_223] : memref<5x8x1xf32, #tpu.memory_space<vmem>>, vector<1x8x1xf32>
    %290 = vector.shape_cast %289 : vector<1x8x1xf32> to vector<8x1xf32>
    %c17_i32_224 = arith.constant 17 : i32
    %291 = tpu.dynamic_rotate %282 by %c17_i32_224 dim 1 : vector<8x256xf32>, i32 -> vector<8x256xf32>
    %c0_225 = arith.constant 0 : index
    %c0_226 = arith.constant 0 : index
    %c0_227 = arith.constant 0 : index
    %292 = vector.load %arg6[%c0_225, %c0_226, %c0_227] : memref<9x1x256xf32, #tpu.memory_space<vmem>>, vector<1x1x256xf32>
    %293 = vector.shape_cast %292 : vector<1x1x256xf32> to vector<1x256xf32>
    %294 = vector.broadcast %293 : vector<1x256xf32> to vector<8x256xf32>
    %295 = arith.mulf %291, %294 : vector<8x256xf32>
    %c16_i32_228 = arith.constant 16 : i32
    %296 = tpu.dynamic_rotate %282 by %c16_i32_228 dim 1 : vector<8x256xf32>, i32 -> vector<8x256xf32>
    %c1_229 = arith.constant 1 : index
    %c0_230 = arith.constant 0 : index
    %c0_231 = arith.constant 0 : index
    %297 = vector.load %arg6[%c1_229, %c0_230, %c0_231] : memref<9x1x256xf32, #tpu.memory_space<vmem>>, vector<1x1x256xf32>
    %298 = vector.shape_cast %297 : vector<1x1x256xf32> to vector<1x256xf32>
    %299 = vector.broadcast %298 : vector<1x256xf32> to vector<8x256xf32>
    %300 = arith.mulf %296, %299 : vector<8x256xf32>
    %c15_i32_232 = arith.constant 15 : i32
    %301 = tpu.dynamic_rotate %282 by %c15_i32_232 dim 1 : vector<8x256xf32>, i32 -> vector<8x256xf32>
    %c2_233 = arith.constant 2 : index
    %c0_234 = arith.constant 0 : index
    %c0_235 = arith.constant 0 : index
    %302 = vector.load %arg6[%c2_233, %c0_234, %c0_235] : memref<9x1x256xf32, #tpu.memory_space<vmem>>, vector<1x1x256xf32>
    %303 = vector.shape_cast %302 : vector<1x1x256xf32> to vector<1x256xf32>
    %304 = vector.broadcast %303 : vector<1x256xf32> to vector<8x256xf32>
    %305 = arith.mulf %301, %304 : vector<8x256xf32>
    %c1_i32_236 = arith.constant 1 : i32
    %306 = tpu.dynamic_rotate %282 by %c1_i32_236 dim 1 : vector<8x256xf32>, i32 -> vector<8x256xf32>
    %c3_237 = arith.constant 3 : index
    %c0_238 = arith.constant 0 : index
    %c0_239 = arith.constant 0 : index
    %307 = vector.load %arg6[%c3_237, %c0_238, %c0_239] : memref<9x1x256xf32, #tpu.memory_space<vmem>>, vector<1x1x256xf32>
    %308 = vector.shape_cast %307 : vector<1x1x256xf32> to vector<1x256xf32>
    %309 = vector.broadcast %308 : vector<1x256xf32> to vector<8x256xf32>
    %310 = arith.mulf %306, %309 : vector<8x256xf32>
    %c4_240 = arith.constant 4 : index
    %c0_241 = arith.constant 0 : index
    %c0_242 = arith.constant 0 : index
    %311 = vector.load %arg6[%c4_240, %c0_241, %c0_242] : memref<9x1x256xf32, #tpu.memory_space<vmem>>, vector<1x1x256xf32>
    %312 = vector.shape_cast %311 : vector<1x1x256xf32> to vector<1x256xf32>
    %313 = vector.broadcast %312 : vector<1x256xf32> to vector<8x256xf32>
    %314 = arith.mulf %282, %313 : vector<8x256xf32>
    %c255_i32_243 = arith.constant 255 : i32
    %315 = tpu.dynamic_rotate %282 by %c255_i32_243 dim 1 : vector<8x256xf32>, i32 -> vector<8x256xf32>
    %c5_244 = arith.constant 5 : index
    %c0_245 = arith.constant 0 : index
    %c0_246 = arith.constant 0 : index
    %316 = vector.load %arg6[%c5_244, %c0_245, %c0_246] : memref<9x1x256xf32, #tpu.memory_space<vmem>>, vector<1x1x256xf32>
    %317 = vector.shape_cast %316 : vector<1x1x256xf32> to vector<1x256xf32>
    %318 = vector.broadcast %317 : vector<1x256xf32> to vector<8x256xf32>
    %319 = arith.mulf %315, %318 : vector<8x256xf32>
    %c241_i32_247 = arith.constant 241 : i32
    %320 = tpu.dynamic_rotate %282 by %c241_i32_247 dim 1 : vector<8x256xf32>, i32 -> vector<8x256xf32>
    %c6_248 = arith.constant 6 : index
    %c0_249 = arith.constant 0 : index
    %c0_250 = arith.constant 0 : index
    %321 = vector.load %arg6[%c6_248, %c0_249, %c0_250] : memref<9x1x256xf32, #tpu.memory_space<vmem>>, vector<1x1x256xf32>
    %322 = vector.shape_cast %321 : vector<1x1x256xf32> to vector<1x256xf32>
    %323 = vector.broadcast %322 : vector<1x256xf32> to vector<8x256xf32>
    %324 = arith.mulf %320, %323 : vector<8x256xf32>
    %c240_i32_251 = arith.constant 240 : i32
    %325 = tpu.dynamic_rotate %282 by %c240_i32_251 dim 1 : vector<8x256xf32>, i32 -> vector<8x256xf32>
    %c7_252 = arith.constant 7 : index
    %c0_253 = arith.constant 0 : index
    %c0_254 = arith.constant 0 : index
    %326 = vector.load %arg6[%c7_252, %c0_253, %c0_254] : memref<9x1x256xf32, #tpu.memory_space<vmem>>, vector<1x1x256xf32>
    %327 = vector.shape_cast %326 : vector<1x1x256xf32> to vector<1x256xf32>
    %328 = vector.broadcast %327 : vector<1x256xf32> to vector<8x256xf32>
    %329 = arith.mulf %325, %328 : vector<8x256xf32>
    %c239_i32_255 = arith.constant 239 : i32
    %330 = tpu.dynamic_rotate %282 by %c239_i32_255 dim 1 : vector<8x256xf32>, i32 -> vector<8x256xf32>
    %c8_256 = arith.constant 8 : index
    %c0_257 = arith.constant 0 : index
    %c0_258 = arith.constant 0 : index
    %331 = vector.load %arg6[%c8_256, %c0_257, %c0_258] : memref<9x1x256xf32, #tpu.memory_space<vmem>>, vector<1x1x256xf32>
    %332 = vector.shape_cast %331 : vector<1x1x256xf32> to vector<1x256xf32>
    %333 = vector.broadcast %332 : vector<1x256xf32> to vector<8x256xf32>
    %334 = arith.mulf %330, %333 : vector<8x256xf32>
    %335 = tpu.concatenate %295, %300, %305, %310, %314, %319, %324, %329, %334 in 0 : vector<8x256xf32>, vector<8x256xf32>, vector<8x256xf32>, vector<8x256xf32>, vector<8x256xf32>, vector<8x256xf32>, vector<8x256xf32>, vector<8x256xf32>, vector<8x256xf32> -> vector<72x256xf32>
    %cst_259 = arith.constant dense<0.000000e+00> : vector<8x256xf32>
    %336 = tpu.matmul %284, %335, %cst_259 {dimension_numbers = #tpu.dot_dimension_numbers<[1], [0], [0], [1], [0, 0, 1, 1], [], []>} : vector<8x72xf32>, vector<72x256xf32>, vector<8x256xf32> -> vector<8x256xf32>
    %337 = vector.broadcast %286 : vector<8x1xf32> to vector<8x256xf32>
    %338 = arith.addf %336, %337 : vector<8x256xf32>
    %cst_260 = arith.constant 0.000000e+00 : f32
    %339 = vector.broadcast %cst_260 : f32 to vector<8x256xf32>
    %340 = arith.maximumf %338, %339 : vector<8x256xf32>
    %c17_i32_261 = arith.constant 17 : i32
    %341 = tpu.dynamic_rotate %340 by %c17_i32_261 dim 1 : vector<8x256xf32>, i32 -> vector<8x256xf32>
    %c0_262 = arith.constant 0 : index
    %c0_263 = arith.constant 0 : index
    %c0_264 = arith.constant 0 : index
    %342 = vector.load %arg6[%c0_262, %c0_263, %c0_264] : memref<9x1x256xf32, #tpu.memory_space<vmem>>, vector<1x1x256xf32>
    %343 = vector.shape_cast %342 : vector<1x1x256xf32> to vector<1x256xf32>
    %344 = vector.broadcast %343 : vector<1x256xf32> to vector<8x256xf32>
    %345 = arith.mulf %341, %344 : vector<8x256xf32>
    %c16_i32_265 = arith.constant 16 : i32
    %346 = tpu.dynamic_rotate %340 by %c16_i32_265 dim 1 : vector<8x256xf32>, i32 -> vector<8x256xf32>
    %c1_266 = arith.constant 1 : index
    %c0_267 = arith.constant 0 : index
    %c0_268 = arith.constant 0 : index
    %347 = vector.load %arg6[%c1_266, %c0_267, %c0_268] : memref<9x1x256xf32, #tpu.memory_space<vmem>>, vector<1x1x256xf32>
    %348 = vector.shape_cast %347 : vector<1x1x256xf32> to vector<1x256xf32>
    %349 = vector.broadcast %348 : vector<1x256xf32> to vector<8x256xf32>
    %350 = arith.mulf %346, %349 : vector<8x256xf32>
    %c15_i32_269 = arith.constant 15 : i32
    %351 = tpu.dynamic_rotate %340 by %c15_i32_269 dim 1 : vector<8x256xf32>, i32 -> vector<8x256xf32>
    %c2_270 = arith.constant 2 : index
    %c0_271 = arith.constant 0 : index
    %c0_272 = arith.constant 0 : index
    %352 = vector.load %arg6[%c2_270, %c0_271, %c0_272] : memref<9x1x256xf32, #tpu.memory_space<vmem>>, vector<1x1x256xf32>
    %353 = vector.shape_cast %352 : vector<1x1x256xf32> to vector<1x256xf32>
    %354 = vector.broadcast %353 : vector<1x256xf32> to vector<8x256xf32>
    %355 = arith.mulf %351, %354 : vector<8x256xf32>
    %c1_i32_273 = arith.constant 1 : i32
    %356 = tpu.dynamic_rotate %340 by %c1_i32_273 dim 1 : vector<8x256xf32>, i32 -> vector<8x256xf32>
    %c3_274 = arith.constant 3 : index
    %c0_275 = arith.constant 0 : index
    %c0_276 = arith.constant 0 : index
    %357 = vector.load %arg6[%c3_274, %c0_275, %c0_276] : memref<9x1x256xf32, #tpu.memory_space<vmem>>, vector<1x1x256xf32>
    %358 = vector.shape_cast %357 : vector<1x1x256xf32> to vector<1x256xf32>
    %359 = vector.broadcast %358 : vector<1x256xf32> to vector<8x256xf32>
    %360 = arith.mulf %356, %359 : vector<8x256xf32>
    %c4_277 = arith.constant 4 : index
    %c0_278 = arith.constant 0 : index
    %c0_279 = arith.constant 0 : index
    %361 = vector.load %arg6[%c4_277, %c0_278, %c0_279] : memref<9x1x256xf32, #tpu.memory_space<vmem>>, vector<1x1x256xf32>
    %362 = vector.shape_cast %361 : vector<1x1x256xf32> to vector<1x256xf32>
    %363 = vector.broadcast %362 : vector<1x256xf32> to vector<8x256xf32>
    %364 = arith.mulf %340, %363 : vector<8x256xf32>
    %c255_i32_280 = arith.constant 255 : i32
    %365 = tpu.dynamic_rotate %340 by %c255_i32_280 dim 1 : vector<8x256xf32>, i32 -> vector<8x256xf32>
    %c5_281 = arith.constant 5 : index
    %c0_282 = arith.constant 0 : index
    %c0_283 = arith.constant 0 : index
    %366 = vector.load %arg6[%c5_281, %c0_282, %c0_283] : memref<9x1x256xf32, #tpu.memory_space<vmem>>, vector<1x1x256xf32>
    %367 = vector.shape_cast %366 : vector<1x1x256xf32> to vector<1x256xf32>
    %368 = vector.broadcast %367 : vector<1x256xf32> to vector<8x256xf32>
    %369 = arith.mulf %365, %368 : vector<8x256xf32>
    %c241_i32_284 = arith.constant 241 : i32
    %370 = tpu.dynamic_rotate %340 by %c241_i32_284 dim 1 : vector<8x256xf32>, i32 -> vector<8x256xf32>
    %c6_285 = arith.constant 6 : index
    %c0_286 = arith.constant 0 : index
    %c0_287 = arith.constant 0 : index
    %371 = vector.load %arg6[%c6_285, %c0_286, %c0_287] : memref<9x1x256xf32, #tpu.memory_space<vmem>>, vector<1x1x256xf32>
    %372 = vector.shape_cast %371 : vector<1x1x256xf32> to vector<1x256xf32>
    %373 = vector.broadcast %372 : vector<1x256xf32> to vector<8x256xf32>
    %374 = arith.mulf %370, %373 : vector<8x256xf32>
    %c240_i32_288 = arith.constant 240 : i32
    %375 = tpu.dynamic_rotate %340 by %c240_i32_288 dim 1 : vector<8x256xf32>, i32 -> vector<8x256xf32>
    %c7_289 = arith.constant 7 : index
    %c0_290 = arith.constant 0 : index
    %c0_291 = arith.constant 0 : index
    %376 = vector.load %arg6[%c7_289, %c0_290, %c0_291] : memref<9x1x256xf32, #tpu.memory_space<vmem>>, vector<1x1x256xf32>
    %377 = vector.shape_cast %376 : vector<1x1x256xf32> to vector<1x256xf32>
    %378 = vector.broadcast %377 : vector<1x256xf32> to vector<8x256xf32>
    %379 = arith.mulf %375, %378 : vector<8x256xf32>
    %c239_i32_292 = arith.constant 239 : i32
    %380 = tpu.dynamic_rotate %340 by %c239_i32_292 dim 1 : vector<8x256xf32>, i32 -> vector<8x256xf32>
    %c8_293 = arith.constant 8 : index
    %c0_294 = arith.constant 0 : index
    %c0_295 = arith.constant 0 : index
    %381 = vector.load %arg6[%c8_293, %c0_294, %c0_295] : memref<9x1x256xf32, #tpu.memory_space<vmem>>, vector<1x1x256xf32>
    %382 = vector.shape_cast %381 : vector<1x1x256xf32> to vector<1x256xf32>
    %383 = vector.broadcast %382 : vector<1x256xf32> to vector<8x256xf32>
    %384 = arith.mulf %380, %383 : vector<8x256xf32>
    %385 = tpu.concatenate %345, %350, %355, %360, %364, %369, %374, %379, %384 in 0 : vector<8x256xf32>, vector<8x256xf32>, vector<8x256xf32>, vector<8x256xf32>, vector<8x256xf32>, vector<8x256xf32>, vector<8x256xf32>, vector<8x256xf32>, vector<8x256xf32> -> vector<72x256xf32>
    %cst_296 = arith.constant dense<0.000000e+00> : vector<8x256xf32>
    %386 = tpu.matmul %288, %385, %cst_296 {dimension_numbers = #tpu.dot_dimension_numbers<[1], [0], [0], [1], [0, 0, 1, 1], [], []>} : vector<8x72xf32>, vector<72x256xf32>, vector<8x256xf32> -> vector<8x256xf32>
    %387 = vector.broadcast %290 : vector<8x1xf32> to vector<8x256xf32>
    %388 = arith.addf %386, %387 : vector<8x256xf32>
    %389 = arith.addf %388, %282 : vector<8x256xf32>
    %c2_297 = arith.constant 2 : index
    %c0_298 = arith.constant 0 : index
    %c0_299 = arith.constant 0 : index
    %390 = vector.load %arg4[%c2_297, %c0_298, %c0_299] : memref<5x8x72xf32, #tpu.memory_space<vmem>>, vector<1x8x72xf32>
    %391 = vector.shape_cast %390 : vector<1x8x72xf32> to vector<8x72xf32>
    %c2_300 = arith.constant 2 : index
    %c0_301 = arith.constant 0 : index
    %c0_302 = arith.constant 0 : index
    %392 = vector.load %arg5[%c2_300, %c0_301, %c0_302] : memref<5x8x1xf32, #tpu.memory_space<vmem>>, vector<1x8x1xf32>
    %393 = vector.shape_cast %392 : vector<1x8x1xf32> to vector<8x1xf32>
    %c3_303 = arith.constant 3 : index
    %c0_304 = arith.constant 0 : index
    %c0_305 = arith.constant 0 : index
    %394 = vector.load %arg4[%c3_303, %c0_304, %c0_305] : memref<5x8x72xf32, #tpu.memory_space<vmem>>, vector<1x8x72xf32>
    %395 = vector.shape_cast %394 : vector<1x8x72xf32> to vector<8x72xf32>
    %c3_306 = arith.constant 3 : index
    %c0_307 = arith.constant 0 : index
    %c0_308 = arith.constant 0 : index
    %396 = vector.load %arg5[%c3_306, %c0_307, %c0_308] : memref<5x8x1xf32, #tpu.memory_space<vmem>>, vector<1x8x1xf32>
    %397 = vector.shape_cast %396 : vector<1x8x1xf32> to vector<8x1xf32>
    %c17_i32_309 = arith.constant 17 : i32
    %398 = tpu.dynamic_rotate %389 by %c17_i32_309 dim 1 : vector<8x256xf32>, i32 -> vector<8x256xf32>
    %c0_310 = arith.constant 0 : index
    %c0_311 = arith.constant 0 : index
    %c0_312 = arith.constant 0 : index
    %399 = vector.load %arg6[%c0_310, %c0_311, %c0_312] : memref<9x1x256xf32, #tpu.memory_space<vmem>>, vector<1x1x256xf32>
    %400 = vector.shape_cast %399 : vector<1x1x256xf32> to vector<1x256xf32>
    %401 = vector.broadcast %400 : vector<1x256xf32> to vector<8x256xf32>
    %402 = arith.mulf %398, %401 : vector<8x256xf32>
    %c16_i32_313 = arith.constant 16 : i32
    %403 = tpu.dynamic_rotate %389 by %c16_i32_313 dim 1 : vector<8x256xf32>, i32 -> vector<8x256xf32>
    %c1_314 = arith.constant 1 : index
    %c0_315 = arith.constant 0 : index
    %c0_316 = arith.constant 0 : index
    %404 = vector.load %arg6[%c1_314, %c0_315, %c0_316] : memref<9x1x256xf32, #tpu.memory_space<vmem>>, vector<1x1x256xf32>
    %405 = vector.shape_cast %404 : vector<1x1x256xf32> to vector<1x256xf32>
    %406 = vector.broadcast %405 : vector<1x256xf32> to vector<8x256xf32>
    %407 = arith.mulf %403, %406 : vector<8x256xf32>
    %c15_i32_317 = arith.constant 15 : i32
    %408 = tpu.dynamic_rotate %389 by %c15_i32_317 dim 1 : vector<8x256xf32>, i32 -> vector<8x256xf32>
    %c2_318 = arith.constant 2 : index
    %c0_319 = arith.constant 0 : index
    %c0_320 = arith.constant 0 : index
    %409 = vector.load %arg6[%c2_318, %c0_319, %c0_320] : memref<9x1x256xf32, #tpu.memory_space<vmem>>, vector<1x1x256xf32>
    %410 = vector.shape_cast %409 : vector<1x1x256xf32> to vector<1x256xf32>
    %411 = vector.broadcast %410 : vector<1x256xf32> to vector<8x256xf32>
    %412 = arith.mulf %408, %411 : vector<8x256xf32>
    %c1_i32_321 = arith.constant 1 : i32
    %413 = tpu.dynamic_rotate %389 by %c1_i32_321 dim 1 : vector<8x256xf32>, i32 -> vector<8x256xf32>
    %c3_322 = arith.constant 3 : index
    %c0_323 = arith.constant 0 : index
    %c0_324 = arith.constant 0 : index
    %414 = vector.load %arg6[%c3_322, %c0_323, %c0_324] : memref<9x1x256xf32, #tpu.memory_space<vmem>>, vector<1x1x256xf32>
    %415 = vector.shape_cast %414 : vector<1x1x256xf32> to vector<1x256xf32>
    %416 = vector.broadcast %415 : vector<1x256xf32> to vector<8x256xf32>
    %417 = arith.mulf %413, %416 : vector<8x256xf32>
    %c4_325 = arith.constant 4 : index
    %c0_326 = arith.constant 0 : index
    %c0_327 = arith.constant 0 : index
    %418 = vector.load %arg6[%c4_325, %c0_326, %c0_327] : memref<9x1x256xf32, #tpu.memory_space<vmem>>, vector<1x1x256xf32>
    %419 = vector.shape_cast %418 : vector<1x1x256xf32> to vector<1x256xf32>
    %420 = vector.broadcast %419 : vector<1x256xf32> to vector<8x256xf32>
    %421 = arith.mulf %389, %420 : vector<8x256xf32>
    %c255_i32_328 = arith.constant 255 : i32
    %422 = tpu.dynamic_rotate %389 by %c255_i32_328 dim 1 : vector<8x256xf32>, i32 -> vector<8x256xf32>
    %c5_329 = arith.constant 5 : index
    %c0_330 = arith.constant 0 : index
    %c0_331 = arith.constant 0 : index
    %423 = vector.load %arg6[%c5_329, %c0_330, %c0_331] : memref<9x1x256xf32, #tpu.memory_space<vmem>>, vector<1x1x256xf32>
    %424 = vector.shape_cast %423 : vector<1x1x256xf32> to vector<1x256xf32>
    %425 = vector.broadcast %424 : vector<1x256xf32> to vector<8x256xf32>
    %426 = arith.mulf %422, %425 : vector<8x256xf32>
    %c241_i32_332 = arith.constant 241 : i32
    %427 = tpu.dynamic_rotate %389 by %c241_i32_332 dim 1 : vector<8x256xf32>, i32 -> vector<8x256xf32>
    %c6_333 = arith.constant 6 : index
    %c0_334 = arith.constant 0 : index
    %c0_335 = arith.constant 0 : index
    %428 = vector.load %arg6[%c6_333, %c0_334, %c0_335] : memref<9x1x256xf32, #tpu.memory_space<vmem>>, vector<1x1x256xf32>
    %429 = vector.shape_cast %428 : vector<1x1x256xf32> to vector<1x256xf32>
    %430 = vector.broadcast %429 : vector<1x256xf32> to vector<8x256xf32>
    %431 = arith.mulf %427, %430 : vector<8x256xf32>
    %c240_i32_336 = arith.constant 240 : i32
    %432 = tpu.dynamic_rotate %389 by %c240_i32_336 dim 1 : vector<8x256xf32>, i32 -> vector<8x256xf32>
    %c7_337 = arith.constant 7 : index
    %c0_338 = arith.constant 0 : index
    %c0_339 = arith.constant 0 : index
    %433 = vector.load %arg6[%c7_337, %c0_338, %c0_339] : memref<9x1x256xf32, #tpu.memory_space<vmem>>, vector<1x1x256xf32>
    %434 = vector.shape_cast %433 : vector<1x1x256xf32> to vector<1x256xf32>
    %435 = vector.broadcast %434 : vector<1x256xf32> to vector<8x256xf32>
    %436 = arith.mulf %432, %435 : vector<8x256xf32>
    %c239_i32_340 = arith.constant 239 : i32
    %437 = tpu.dynamic_rotate %389 by %c239_i32_340 dim 1 : vector<8x256xf32>, i32 -> vector<8x256xf32>
    %c8_341 = arith.constant 8 : index
    %c0_342 = arith.constant 0 : index
    %c0_343 = arith.constant 0 : index
    %438 = vector.load %arg6[%c8_341, %c0_342, %c0_343] : memref<9x1x256xf32, #tpu.memory_space<vmem>>, vector<1x1x256xf32>
    %439 = vector.shape_cast %438 : vector<1x1x256xf32> to vector<1x256xf32>
    %440 = vector.broadcast %439 : vector<1x256xf32> to vector<8x256xf32>
    %441 = arith.mulf %437, %440 : vector<8x256xf32>
    %442 = tpu.concatenate %402, %407, %412, %417, %421, %426, %431, %436, %441 in 0 : vector<8x256xf32>, vector<8x256xf32>, vector<8x256xf32>, vector<8x256xf32>, vector<8x256xf32>, vector<8x256xf32>, vector<8x256xf32>, vector<8x256xf32>, vector<8x256xf32> -> vector<72x256xf32>
    %cst_344 = arith.constant dense<0.000000e+00> : vector<8x256xf32>
    %443 = tpu.matmul %391, %442, %cst_344 {dimension_numbers = #tpu.dot_dimension_numbers<[1], [0], [0], [1], [0, 0, 1, 1], [], []>} : vector<8x72xf32>, vector<72x256xf32>, vector<8x256xf32> -> vector<8x256xf32>
    %444 = vector.broadcast %393 : vector<8x1xf32> to vector<8x256xf32>
    %445 = arith.addf %443, %444 : vector<8x256xf32>
    %cst_345 = arith.constant 0.000000e+00 : f32
    %446 = vector.broadcast %cst_345 : f32 to vector<8x256xf32>
    %447 = arith.maximumf %445, %446 : vector<8x256xf32>
    %c17_i32_346 = arith.constant 17 : i32
    %448 = tpu.dynamic_rotate %447 by %c17_i32_346 dim 1 : vector<8x256xf32>, i32 -> vector<8x256xf32>
    %c0_347 = arith.constant 0 : index
    %c0_348 = arith.constant 0 : index
    %c0_349 = arith.constant 0 : index
    %449 = vector.load %arg6[%c0_347, %c0_348, %c0_349] : memref<9x1x256xf32, #tpu.memory_space<vmem>>, vector<1x1x256xf32>
    %450 = vector.shape_cast %449 : vector<1x1x256xf32> to vector<1x256xf32>
    %451 = vector.broadcast %450 : vector<1x256xf32> to vector<8x256xf32>
    %452 = arith.mulf %448, %451 : vector<8x256xf32>
    %c16_i32_350 = arith.constant 16 : i32
    %453 = tpu.dynamic_rotate %447 by %c16_i32_350 dim 1 : vector<8x256xf32>, i32 -> vector<8x256xf32>
    %c1_351 = arith.constant 1 : index
    %c0_352 = arith.constant 0 : index
    %c0_353 = arith.constant 0 : index
    %454 = vector.load %arg6[%c1_351, %c0_352, %c0_353] : memref<9x1x256xf32, #tpu.memory_space<vmem>>, vector<1x1x256xf32>
    %455 = vector.shape_cast %454 : vector<1x1x256xf32> to vector<1x256xf32>
    %456 = vector.broadcast %455 : vector<1x256xf32> to vector<8x256xf32>
    %457 = arith.mulf %453, %456 : vector<8x256xf32>
    %c15_i32_354 = arith.constant 15 : i32
    %458 = tpu.dynamic_rotate %447 by %c15_i32_354 dim 1 : vector<8x256xf32>, i32 -> vector<8x256xf32>
    %c2_355 = arith.constant 2 : index
    %c0_356 = arith.constant 0 : index
    %c0_357 = arith.constant 0 : index
    %459 = vector.load %arg6[%c2_355, %c0_356, %c0_357] : memref<9x1x256xf32, #tpu.memory_space<vmem>>, vector<1x1x256xf32>
    %460 = vector.shape_cast %459 : vector<1x1x256xf32> to vector<1x256xf32>
    %461 = vector.broadcast %460 : vector<1x256xf32> to vector<8x256xf32>
    %462 = arith.mulf %458, %461 : vector<8x256xf32>
    %c1_i32_358 = arith.constant 1 : i32
    %463 = tpu.dynamic_rotate %447 by %c1_i32_358 dim 1 : vector<8x256xf32>, i32 -> vector<8x256xf32>
    %c3_359 = arith.constant 3 : index
    %c0_360 = arith.constant 0 : index
    %c0_361 = arith.constant 0 : index
    %464 = vector.load %arg6[%c3_359, %c0_360, %c0_361] : memref<9x1x256xf32, #tpu.memory_space<vmem>>, vector<1x1x256xf32>
    %465 = vector.shape_cast %464 : vector<1x1x256xf32> to vector<1x256xf32>
    %466 = vector.broadcast %465 : vector<1x256xf32> to vector<8x256xf32>
    %467 = arith.mulf %463, %466 : vector<8x256xf32>
    %c4_362 = arith.constant 4 : index
    %c0_363 = arith.constant 0 : index
    %c0_364 = arith.constant 0 : index
    %468 = vector.load %arg6[%c4_362, %c0_363, %c0_364] : memref<9x1x256xf32, #tpu.memory_space<vmem>>, vector<1x1x256xf32>
    %469 = vector.shape_cast %468 : vector<1x1x256xf32> to vector<1x256xf32>
    %470 = vector.broadcast %469 : vector<1x256xf32> to vector<8x256xf32>
    %471 = arith.mulf %447, %470 : vector<8x256xf32>
    %c255_i32_365 = arith.constant 255 : i32
    %472 = tpu.dynamic_rotate %447 by %c255_i32_365 dim 1 : vector<8x256xf32>, i32 -> vector<8x256xf32>
    %c5_366 = arith.constant 5 : index
    %c0_367 = arith.constant 0 : index
    %c0_368 = arith.constant 0 : index
    %473 = vector.load %arg6[%c5_366, %c0_367, %c0_368] : memref<9x1x256xf32, #tpu.memory_space<vmem>>, vector<1x1x256xf32>
    %474 = vector.shape_cast %473 : vector<1x1x256xf32> to vector<1x256xf32>
    %475 = vector.broadcast %474 : vector<1x256xf32> to vector<8x256xf32>
    %476 = arith.mulf %472, %475 : vector<8x256xf32>
    %c241_i32_369 = arith.constant 241 : i32
    %477 = tpu.dynamic_rotate %447 by %c241_i32_369 dim 1 : vector<8x256xf32>, i32 -> vector<8x256xf32>
    %c6_370 = arith.constant 6 : index
    %c0_371 = arith.constant 0 : index
    %c0_372 = arith.constant 0 : index
    %478 = vector.load %arg6[%c6_370, %c0_371, %c0_372] : memref<9x1x256xf32, #tpu.memory_space<vmem>>, vector<1x1x256xf32>
    %479 = vector.shape_cast %478 : vector<1x1x256xf32> to vector<1x256xf32>
    %480 = vector.broadcast %479 : vector<1x256xf32> to vector<8x256xf32>
    %481 = arith.mulf %477, %480 : vector<8x256xf32>
    %c240_i32_373 = arith.constant 240 : i32
    %482 = tpu.dynamic_rotate %447 by %c240_i32_373 dim 1 : vector<8x256xf32>, i32 -> vector<8x256xf32>
    %c7_374 = arith.constant 7 : index
    %c0_375 = arith.constant 0 : index
    %c0_376 = arith.constant 0 : index
    %483 = vector.load %arg6[%c7_374, %c0_375, %c0_376] : memref<9x1x256xf32, #tpu.memory_space<vmem>>, vector<1x1x256xf32>
    %484 = vector.shape_cast %483 : vector<1x1x256xf32> to vector<1x256xf32>
    %485 = vector.broadcast %484 : vector<1x256xf32> to vector<8x256xf32>
    %486 = arith.mulf %482, %485 : vector<8x256xf32>
    %c239_i32_377 = arith.constant 239 : i32
    %487 = tpu.dynamic_rotate %447 by %c239_i32_377 dim 1 : vector<8x256xf32>, i32 -> vector<8x256xf32>
    %c8_378 = arith.constant 8 : index
    %c0_379 = arith.constant 0 : index
    %c0_380 = arith.constant 0 : index
    %488 = vector.load %arg6[%c8_378, %c0_379, %c0_380] : memref<9x1x256xf32, #tpu.memory_space<vmem>>, vector<1x1x256xf32>
    %489 = vector.shape_cast %488 : vector<1x1x256xf32> to vector<1x256xf32>
    %490 = vector.broadcast %489 : vector<1x256xf32> to vector<8x256xf32>
    %491 = arith.mulf %487, %490 : vector<8x256xf32>
    %492 = tpu.concatenate %452, %457, %462, %467, %471, %476, %481, %486, %491 in 0 : vector<8x256xf32>, vector<8x256xf32>, vector<8x256xf32>, vector<8x256xf32>, vector<8x256xf32>, vector<8x256xf32>, vector<8x256xf32>, vector<8x256xf32>, vector<8x256xf32> -> vector<72x256xf32>
    %cst_381 = arith.constant dense<0.000000e+00> : vector<8x256xf32>
    %493 = tpu.matmul %395, %492, %cst_381 {dimension_numbers = #tpu.dot_dimension_numbers<[1], [0], [0], [1], [0, 0, 1, 1], [], []>} : vector<8x72xf32>, vector<72x256xf32>, vector<8x256xf32> -> vector<8x256xf32>
    %494 = vector.broadcast %397 : vector<8x1xf32> to vector<8x256xf32>
    %495 = arith.addf %493, %494 : vector<8x256xf32>
    %496 = arith.addf %495, %389 : vector<8x256xf32>
    %c4_382 = arith.constant 4 : index
    %c0_383 = arith.constant 0 : index
    %c0_384 = arith.constant 0 : index
    %497 = vector.load %arg4[%c4_382, %c0_383, %c0_384] : memref<5x8x72xf32, #tpu.memory_space<vmem>>, vector<1x8x72xf32>
    %498 = vector.shape_cast %497 : vector<1x8x72xf32> to vector<8x72xf32>
    %c4_385 = arith.constant 4 : index
    %c0_386 = arith.constant 0 : index
    %c0_387 = arith.constant 0 : index
    %499 = vector.load %arg5[%c4_385, %c0_386, %c0_387] : memref<5x8x1xf32, #tpu.memory_space<vmem>>, vector<1x8x1xf32>
    %500 = vector.shape_cast %499 : vector<1x8x1xf32> to vector<8x1xf32>
    %c17_i32_388 = arith.constant 17 : i32
    %501 = tpu.dynamic_rotate %496 by %c17_i32_388 dim 1 : vector<8x256xf32>, i32 -> vector<8x256xf32>
    %c0_389 = arith.constant 0 : index
    %c0_390 = arith.constant 0 : index
    %c0_391 = arith.constant 0 : index
    %502 = vector.load %arg6[%c0_389, %c0_390, %c0_391] : memref<9x1x256xf32, #tpu.memory_space<vmem>>, vector<1x1x256xf32>
    %503 = vector.shape_cast %502 : vector<1x1x256xf32> to vector<1x256xf32>
    %504 = vector.broadcast %503 : vector<1x256xf32> to vector<8x256xf32>
    %505 = arith.mulf %501, %504 : vector<8x256xf32>
    %c16_i32_392 = arith.constant 16 : i32
    %506 = tpu.dynamic_rotate %496 by %c16_i32_392 dim 1 : vector<8x256xf32>, i32 -> vector<8x256xf32>
    %c1_393 = arith.constant 1 : index
    %c0_394 = arith.constant 0 : index
    %c0_395 = arith.constant 0 : index
    %507 = vector.load %arg6[%c1_393, %c0_394, %c0_395] : memref<9x1x256xf32, #tpu.memory_space<vmem>>, vector<1x1x256xf32>
    %508 = vector.shape_cast %507 : vector<1x1x256xf32> to vector<1x256xf32>
    %509 = vector.broadcast %508 : vector<1x256xf32> to vector<8x256xf32>
    %510 = arith.mulf %506, %509 : vector<8x256xf32>
    %c15_i32_396 = arith.constant 15 : i32
    %511 = tpu.dynamic_rotate %496 by %c15_i32_396 dim 1 : vector<8x256xf32>, i32 -> vector<8x256xf32>
    %c2_397 = arith.constant 2 : index
    %c0_398 = arith.constant 0 : index
    %c0_399 = arith.constant 0 : index
    %512 = vector.load %arg6[%c2_397, %c0_398, %c0_399] : memref<9x1x256xf32, #tpu.memory_space<vmem>>, vector<1x1x256xf32>
    %513 = vector.shape_cast %512 : vector<1x1x256xf32> to vector<1x256xf32>
    %514 = vector.broadcast %513 : vector<1x256xf32> to vector<8x256xf32>
    %515 = arith.mulf %511, %514 : vector<8x256xf32>
    %c1_i32_400 = arith.constant 1 : i32
    %516 = tpu.dynamic_rotate %496 by %c1_i32_400 dim 1 : vector<8x256xf32>, i32 -> vector<8x256xf32>
    %c3_401 = arith.constant 3 : index
    %c0_402 = arith.constant 0 : index
    %c0_403 = arith.constant 0 : index
    %517 = vector.load %arg6[%c3_401, %c0_402, %c0_403] : memref<9x1x256xf32, #tpu.memory_space<vmem>>, vector<1x1x256xf32>
    %518 = vector.shape_cast %517 : vector<1x1x256xf32> to vector<1x256xf32>
    %519 = vector.broadcast %518 : vector<1x256xf32> to vector<8x256xf32>
    %520 = arith.mulf %516, %519 : vector<8x256xf32>
    %c4_404 = arith.constant 4 : index
    %c0_405 = arith.constant 0 : index
    %c0_406 = arith.constant 0 : index
    %521 = vector.load %arg6[%c4_404, %c0_405, %c0_406] : memref<9x1x256xf32, #tpu.memory_space<vmem>>, vector<1x1x256xf32>
    %522 = vector.shape_cast %521 : vector<1x1x256xf32> to vector<1x256xf32>
    %523 = vector.broadcast %522 : vector<1x256xf32> to vector<8x256xf32>
    %524 = arith.mulf %496, %523 : vector<8x256xf32>
    %c255_i32_407 = arith.constant 255 : i32
    %525 = tpu.dynamic_rotate %496 by %c255_i32_407 dim 1 : vector<8x256xf32>, i32 -> vector<8x256xf32>
    %c5_408 = arith.constant 5 : index
    %c0_409 = arith.constant 0 : index
    %c0_410 = arith.constant 0 : index
    %526 = vector.load %arg6[%c5_408, %c0_409, %c0_410] : memref<9x1x256xf32, #tpu.memory_space<vmem>>, vector<1x1x256xf32>
    %527 = vector.shape_cast %526 : vector<1x1x256xf32> to vector<1x256xf32>
    %528 = vector.broadcast %527 : vector<1x256xf32> to vector<8x256xf32>
    %529 = arith.mulf %525, %528 : vector<8x256xf32>
    %c241_i32_411 = arith.constant 241 : i32
    %530 = tpu.dynamic_rotate %496 by %c241_i32_411 dim 1 : vector<8x256xf32>, i32 -> vector<8x256xf32>
    %c6_412 = arith.constant 6 : index
    %c0_413 = arith.constant 0 : index
    %c0_414 = arith.constant 0 : index
    %531 = vector.load %arg6[%c6_412, %c0_413, %c0_414] : memref<9x1x256xf32, #tpu.memory_space<vmem>>, vector<1x1x256xf32>
    %532 = vector.shape_cast %531 : vector<1x1x256xf32> to vector<1x256xf32>
    %533 = vector.broadcast %532 : vector<1x256xf32> to vector<8x256xf32>
    %534 = arith.mulf %530, %533 : vector<8x256xf32>
    %c240_i32_415 = arith.constant 240 : i32
    %535 = tpu.dynamic_rotate %496 by %c240_i32_415 dim 1 : vector<8x256xf32>, i32 -> vector<8x256xf32>
    %c7_416 = arith.constant 7 : index
    %c0_417 = arith.constant 0 : index
    %c0_418 = arith.constant 0 : index
    %536 = vector.load %arg6[%c7_416, %c0_417, %c0_418] : memref<9x1x256xf32, #tpu.memory_space<vmem>>, vector<1x1x256xf32>
    %537 = vector.shape_cast %536 : vector<1x1x256xf32> to vector<1x256xf32>
    %538 = vector.broadcast %537 : vector<1x256xf32> to vector<8x256xf32>
    %539 = arith.mulf %535, %538 : vector<8x256xf32>
    %c239_i32_419 = arith.constant 239 : i32
    %540 = tpu.dynamic_rotate %496 by %c239_i32_419 dim 1 : vector<8x256xf32>, i32 -> vector<8x256xf32>
    %c8_420 = arith.constant 8 : index
    %c0_421 = arith.constant 0 : index
    %c0_422 = arith.constant 0 : index
    %541 = vector.load %arg6[%c8_420, %c0_421, %c0_422] : memref<9x1x256xf32, #tpu.memory_space<vmem>>, vector<1x1x256xf32>
    %542 = vector.shape_cast %541 : vector<1x1x256xf32> to vector<1x256xf32>
    %543 = vector.broadcast %542 : vector<1x256xf32> to vector<8x256xf32>
    %544 = arith.mulf %540, %543 : vector<8x256xf32>
    %545 = tpu.concatenate %505, %510, %515, %520, %524, %529, %534, %539, %544 in 0 : vector<8x256xf32>, vector<8x256xf32>, vector<8x256xf32>, vector<8x256xf32>, vector<8x256xf32>, vector<8x256xf32>, vector<8x256xf32>, vector<8x256xf32>, vector<8x256xf32> -> vector<72x256xf32>
    %cst_423 = arith.constant dense<0.000000e+00> : vector<8x256xf32>
    %546 = tpu.matmul %498, %545, %cst_423 {dimension_numbers = #tpu.dot_dimension_numbers<[1], [0], [0], [1], [0, 0, 1, 1], [], []>} : vector<8x72xf32>, vector<72x256xf32>, vector<8x256xf32> -> vector<8x256xf32>
    %547 = vector.broadcast %500 : vector<8x1xf32> to vector<8x256xf32>
    %548 = arith.addf %546, %547 : vector<8x256xf32>
    %cst_424 = arith.constant dense<0.000000e+00> : vector<8x128xf32>
    %549 = tpu.matmul %548, %2, %cst_424 {dimension_numbers = #tpu.dot_dimension_numbers<[1], [0], [0], [1], [0, 0, 1, 1], [], []>} : vector<8x256xf32>, vector<256x128xf32>, vector<8x128xf32> -> vector<8x128xf32>
    %c1_425 = arith.constant 1 : index
    %c0_426 = arith.constant 0 : index
    %c0_427 = arith.constant 0 : index
    %550 = vector.load %arg8[%c1_425, %c0_426, %c0_427] : memref<2x8x128xf32, #tpu.memory_space<vmem>>, vector<1x8x128xf32>
    %551 = vector.shape_cast %550 : vector<1x8x128xf32> to vector<8x128xf32>
    %552 = vector.shape_cast %549 : vector<8x128xf32> to vector<1x8x128xf32>
    tpu.vector_store %arg8[%c1_425, %c0_426, %c0_427], %552 {strides = array<i32>} : memref<2x8x128xf32, #tpu.memory_space<vmem>>, vector<1x8x128xf32>,
    return
  }
  func.func @transform_0(%arg0: i32) -> (i32, i32, i32) {
    %c0_i32 = arith.constant 0 : i32
    %c0_i32_0 = arith.constant 0 : i32
    %c0_i32_1 = arith.constant 0 : i32
    %c0_i32_2 = arith.constant 0 : i32
    return %c0_i32, %c0_i32_0, %c0_i32_1 : i32, i32, i32
  }
  func.func @transform_1(%arg0: i32) -> (i32, i32) {
    %c0_i32 = arith.constant 0 : i32
    %c0_i32_0 = arith.constant 0 : i32
    %c0_i32_1 = arith.constant 0 : i32
    return %c0_i32, %c0_i32_0 : i32, i32
  }
  func.func @transform_2(%arg0: i32) -> (i32, i32) {
    %c0_i32 = arith.constant 0 : i32
    %c0_i32_0 = arith.constant 0 : i32
    %c0_i32_1 = arith.constant 0 : i32
    return %c0_i32, %c0_i32_0 : i32, i32
  }
  func.func @transform_3(%arg0: i32) -> (i32, i32, i32) {
    %c0_i32 = arith.constant 0 : i32
    %c0_i32_0 = arith.constant 0 : i32
    %c0_i32_1 = arith.constant 0 : i32
    %c0_i32_2 = arith.constant 0 : i32
    return %c0_i32, %c0_i32_0, %c0_i32_1 : i32, i32, i32
  }
  func.func @transform_4(%arg0: i32) -> (i32, i32, i32) {
    %c0_i32 = arith.constant 0 : i32
    %c0_i32_0 = arith.constant 0 : i32
    %c0_i32_1 = arith.constant 0 : i32
    %c0_i32_2 = arith.constant 0 : i32
    return %c0_i32, %c0_i32_0, %c0_i32_1 : i32, i32, i32
  }
  func.func @transform_5(%arg0: i32) -> (i32, i32, i32) {
    %c0_i32 = arith.constant 0 : i32
    %c0_i32_0 = arith.constant 0 : i32
    %c0_i32_1 = arith.constant 0 : i32
    %c0_i32_2 = arith.constant 0 : i32
    return %c0_i32, %c0_i32_0, %c0_i32_1 : i32, i32, i32
  }
  func.func @transform_6(%arg0: i32) -> (i32, i32) {
    %c0_i32 = arith.constant 0 : i32
    %c0_i32_0 = arith.constant 0 : i32
    %c0_i32_1 = arith.constant 0 : i32
    return %c0_i32, %c0_i32_0 : i32, i32
  }
  func.func @transform_7(%arg0: i32) -> (i32, i32, i32) {
    %c0_i32 = arith.constant 0 : i32
    %c0_i32_0 = arith.constant 0 : i32
    %c0_i32_1 = arith.constant 0 : i32
    %c0_i32_2 = arith.constant 0 : i32
    return %c0_i32, %c0_i32_0, %c0_i32_1 : i32, i32, i32
  }
}

</mosaic_0001>

<llo_original>
// kernel: tpu_custom_call.1
$region0: #{tpu_custom_call.1}
  #allocation0 [shape = 'u32[]', space=smem, size = 0x4, offset = 0x4, fixed_abs, tag = 'smem constant byte address 0x4 - core index']
  #allocation1 [shape = 'u32[144,128]{1,0:T(1,128)}', space=vmem, size = 0x12000, scoped, tag = 'internal scratch']
  %s0 = inlined_call_operand.vmem [shape: f32[2,4,256], index: 0, kind: input, shape index: {}]
  %s1 = inlined_call_operand.vmem [shape: f32[8,4], index: 1, kind: input, shape index: {}]
  %s2 = inlined_call_operand.vmem [shape: f32[8,1], index: 2, kind: input, shape index: {}]
  %s3 = inlined_call_operand.vmem [shape: f32[5,8,72], index: 3, kind: input, shape index: {}]
  %s4 = inlined_call_operand.vmem [shape: f32[5,8,1], index: 4, kind: input, shape index: {}]
  %s5 = inlined_call_operand.vmem [shape: f32[9,1,256], index: 5, kind: input, shape index: {}]
  %s6 = inlined_call_operand.hbm [shape: f32[256,128], index: 6, kind: input, shape index: {}]
  %s7 = inlined_call_operand.hbm [shape: f32[2,8,128], index: 7, kind: output, shape index: {}]
  %s8 = sld [smem:[#allocation0]]
  $region42: #{tpu_custom_call.1} parent=0
    _
  %s10 = ssub.s32 1, %s8
  %s11 = scalar_select 0, %s10, %s8
  $region1: #{tpu_custom_call.1} parent=0
    #allocation2 [shape = 'u8[131072]{0}', space=vmem, size = 0x20000, scoped, tag = 'input window, operand 6, single buffered']
    #allocation3 [shape = 's32[1]{0}', space=sflag, size = 0x4, scoped, tag = 'scoped memory for tpu_custom_call.1']
    #allocation4 [shape = 's32[1]{0}', space=sflag, size = 0x4, scoped, tag = 'scoped memory for tpu_custom_call.1']
    #allocation5 [shape = 'u8[8192]{0}', space=vmem, size = 0x2000, scoped, tag = 'output window, operand 0, single buffered']
    %12 = vsyncpa [#allocation3], 0
    %13 = vsyncpa [#allocation4], 0
    // Predicated region
    $region2: #{tpu_custom_call.1} parent=1 // pred_check
      _
    $region3: #{tpu_custom_call.1} parent=1 // pred_check_branch
      %15 = sbr.rel (0) target = $region5
    $region4: #{tpu_custom_call.1} parent=1 // pred_region
      _
    $region5: #{tpu_custom_call.1} parent=1 // pred_fallthru
      _
    // Predicated region
    $region6: #{tpu_custom_call.1} parent=1 // pred_check
      _
    $region7: #{tpu_custom_call.1} parent=1 // pred_check_branch
      %17 = sbr.rel (0) target = $region9
    $region8: #{tpu_custom_call.1} parent=1 // pred_region
      _
    $region9: #{tpu_custom_call.1} parent=1 // pred_fallthru
      _
    // Predicated region
    $region10: #{tpu_custom_call.1} parent=1 // pred_check
      _
    $region11: #{tpu_custom_call.1} parent=1 // pred_check_branch
      %19 = sbr.rel (0) target = $region13
    $region12: #{tpu_custom_call.1} parent=1 // pred_region
      _
    $region13: #{tpu_custom_call.1} parent=1 // pred_fallthru
      _
    // Predicated region
    $region14: #{tpu_custom_call.1} parent=1 // pred_check
      _
    $region15: #{tpu_custom_call.1} parent=1 // pred_check_branch
      %21 = sbr.rel (0) target = $region17
    $region16: #{tpu_custom_call.1} parent=1 // pred_region
      _
    $region17: #{tpu_custom_call.1} parent=1 // pred_fallthru
      _
    // Predicated region
    $region18: #{tpu_custom_call.1} parent=1 // pred_check
      _
    $region19: #{tpu_custom_call.1} parent=1 // pred_check_branch
      %23 = sbr.rel (0) target = $region21
    $region20: #{tpu_custom_call.1} parent=1 // pred_region
      _
    $region21: #{tpu_custom_call.1} parent=1 // pred_fallthru
      _
    // Predicated region
    $region22: #{tpu_custom_call.1} parent=1 // pred_check
      _
    $region23: #{tpu_custom_call.1} parent=1 // pred_check_branch
      %25 = sbr.rel (0) target = $region25
    $region24: #{tpu_custom_call.1} parent=1 // pred_region
      _
    $region25: #{tpu_custom_call.1} parent=1 // pred_fallthru
      _
    // Predicated region
    $region26: #{tpu_custom_call.1} parent=1 // pred_check
      _
    $region27: #{tpu_custom_call.1} parent=1 // pred_check_branch
      %27 = sbr.rel (0) target = $region29
    $region28: #{tpu_custom_call.1} parent=1 // pred_region
      %s29 = ssub.s32 4096, 4096
      %30 = vsyncadd [#allocation3], %s29
      %s31 = sshll.u32 [#allocation2], 4
      %s32 = int_to_ptr.vmem [resolvable:$true] %s31
      %37 = dma.hbm_to_vmem [thread:$0]  %s6, 4096, %s32, [#allocation3], 128, 128, 8
    $region29: #{tpu_custom_call.1} parent=1 // pred_fallthru
      _
    // Predicated region
    $region30: #{tpu_custom_call.1} parent=1 // pred_check
      _
    $region31: #{tpu_custom_call.1} parent=1 // pred_check_branch
      %39 = sbr.rel (0) target = $region33
    $region32: #{tpu_custom_call.1} parent=1 // pred_region
      %40 = dma.done [#allocation3], 4096
    $region33: #{tpu_custom_call.1} parent=1 // pred_fallthru
      _
    %v41 = vld [vmem:[%s1] sm:$0xff]
    %v42 = vld [vmem:[%s2] sm:$0xff]
    %v43 = vld [vmem:[#allocation2] sm:$0xff]
    %v44 = vld [vmem:[#allocation2 + $0x8] sm:$0xff]
    %v45 = vld [vmem:[#allocation2 + $0x10] sm:$0xff]
    %v46 = vld [vmem:[#allocation2 + $0x18] sm:$0xff]
    %v47 = vld [vmem:[#allocation2 + $0x20] sm:$0xff]
    %v48 = vld [vmem:[#allocation2 + $0x28] sm:$0xff]
    %v49 = vld [vmem:[#allocation2 + $0x30] sm:$0xff]
    %v50 = vld [vmem:[#allocation2 + $0x38] sm:$0xff]
    %v51 = vld [vmem:[#allocation2 + $0x40] sm:$0xff]
    %v52 = vld [vmem:[#allocation2 + $0x48] sm:$0xff]
    %v53 = vld [vmem:[#allocation2 + $0x50] sm:$0xff]
    %v54 = vld [vmem:[#allocation2 + $0x58] sm:$0xff]
    %v55 = vld [vmem:[#allocation2 + $0x60] sm:$0xff]
    %v56 = vld [vmem:[#allocation2 + $0x68] sm:$0xff]
    %v57 = vld [vmem:[#allocation2 + $0x70] sm:$0xff]
    %v58 = vld [vmem:[#allocation2 + $0x78] sm:$0xff]
    %v59 = vld [vmem:[#allocation2 + $0x80] sm:$0xff]
    %v60 = vld [vmem:[#allocation2 + $0x88] sm:$0xff]
    %v61 = vld [vmem:[#allocation2 + $0x90] sm:$0xff]
    %v62 = vld [vmem:[#allocation2 + $0x98] sm:$0xff]
    %v63 = vld [vmem:[#allocation2 + $0xa0] sm:$0xff]
    %v64 = vld [vmem:[#allocation2 + $0xa8] sm:$0xff]
    %v65 = vld [vmem:[#allocation2 + $0xb0] sm:$0xff]
    %v66 = vld [vmem:[#allocation2 + $0xb8] sm:$0xff]
    %v67 = vld [vmem:[#allocation2 + $0xc0] sm:$0xff]
    %v68 = vld [vmem:[#allocation2 + $0xc8] sm:$0xff]
    %v69 = vld [vmem:[#allocation2 + $0xd0] sm:$0xff]
    %v70 = vld [vmem:[#allocation2 + $0xd8] sm:$0xff]
    %v71 = vld [vmem:[#allocation2 + $0xe0] sm:$0xff]
    %v72 = vld [vmem:[#allocation2 + $0xe8] sm:$0xff]
    %v73 = vld [vmem:[#allocation2 + $0xf0] sm:$0xff]
    %v74 = vld [vmem:[#allocation2 + $0xf8] sm:$0xff]
    %v75 = vld [vmem:[%s0] sm:$0xff]
    %77 = vset.pattern.permute.xlu0 0
    %78 = vperm.xlu0 %77, %v42
    %v79 = vpop.permute.xlu0 %78
    %v82 = vcombine.high %v75, %v75
    %vm83 = vcmask 31744
    %v85 = vsel %vm83, %v41, 0
    %vm87 = vcmask 1043456
    %v88 = vsel %vm87, %v75, 0
    %v90 = vsel %vm87, %v82, 0
    %92 = vmatprep.subr.mxu0 %v90
    %93 = vmatpush1.msra.mxu0 %v88
    %94 = vmatprep.subr.mxu0 0.0
    %95 = vmatpush1.msra.mxu0 0.0
    %96 = vmatprep.subr.mxu0 0.0
    %97 = vmatpush1.msra.mxu0 0.0
    %98 = vmatprep.subr.mxu0 0.0
    %99 = vmatpush1.msra.mxu0 0.0
    %100 = vmatprep.subr.mxu0 0.0
    %101 = vmatpush1.msra.mxu0 0.0
    %102 = vmatprep.subr.mxu0 0.0
    %103 = vmatpush1.msra.mxu0 0.0
    %104 = vmatprep.subr.mxu0 0.0
    %105 = vmatpush1.msra.mxu0 0.0
    %106 = vmatprep.subr.mxu0 0.0
    %107 = vmatpush1.msra.mxu0 0.0
    %108 = vmatprep.subr.mxu0 0.0
    %109 = vmatpush1.msra.mxu0 0.0
    %110 = vmatprep.subr.mxu0 0.0
    %111 = vmatpush1.msra.mxu0 0.0
    %112 = vmatprep.subr.mxu0 0.0
    %113 = vmatpush1.msra.mxu0 0.0
    %114 = vmatprep.subr.mxu0 0.0
    %115 = vmatpush1.msra.mxu0 0.0
    %116 = vmatprep.subr.mxu0 0.0
    %117 = vmatpush1.msra.mxu0 0.0
    %118 = vmatprep.subr.mxu0 0.0
    %119 = vmatpush1.msra.mxu0 0.0
    %120 = vmatprep.subr.mxu0 0.0
    %121 = vmatpush1.msra.mxu0 0.0
    %122 = vmatprep.subr.mxu0 0.0
    %123 = vmatpush1.msra.mxu0 0.0
    %124 = vmatprep.subr.mxu0 0.0
    %125 = vmatpush1.msra.mxu0 0.0
    %126 = vmatprep.subr.mxu0 0.0
    %127 = vmatpush1.msra.mxu0 0.0
    %128 = vmatprep.subr.mxu0 0.0
    %129 = vmatpush1.msra.mxu0 0.0
    %130 = vmatprep.subr.mxu0 0.0
    %131 = vmatpush1.msra.mxu0 0.0
    %132 = vmatprep.subr.mxu0 0.0
    %133 = vmatpush1.msra.mxu0 0.0
    %134 = vmatprep.subr.mxu0 0.0
    %135 = vmatpush1.msra.mxu0 0.0
    %136 = vmatprep.subr.mxu0 0.0
    %137 = vmatpush1.msra.mxu0 0.0
    %138 = vmatprep.subr.mxu0 0.0
    %139 = vmatpush1.msra.mxu0 0.0
    %140 = vmatprep.subr.mxu0 0.0
    %141 = vmatpush1.msra.mxu0 0.0
    %142 = vmatprep.subr.mxu0 0.0
    %143 = vmatpush1.msra.mxu0 0.0
    %144 = vmatprep.subr.mxu0 0.0
    %145 = vmatpush1.msra.mxu0 0.0
    %146 = vmatprep.subr.mxu0 0.0
    %147 = vmatpush1.msra.mxu0 0.0
    %148 = vmatprep.subr.mxu0 0.0
    %149 = vmatpush1.msra.mxu0 0.0
    %150 = vmatprep.subr.mxu0 0.0
    %151 = vmatpush1.msra.mxu0 0.0
    %152 = vmatprep.subr.mxu0 0.0
    %153 = vmatpush1.msra.mxu0 0.0
    %154 = vmatprep.subr.mxu0 0.0
    %155 = vmatpush1.msra.mxu0 0.0
    %156 = vmatprep.mubr.f32.mxu0 0.0
    %157 = vmatmul.mubr.f32.gmra.mrb[0].mxu0 %v85
    %v158 = vpop.f32.mrb[0].mxu0
    %v159 = vadd.f32 %v79, %v158
    %v160 = vpop.f32.mrb[0].mxu0
    %v161 = vadd.f32 %v79, %v160
    %162 = vdwg.mxu0
    %v163 = vld [vmem:[%s3] sm:$0xff]
    %v164 = vld [vmem:[%s4] sm:$0xff]
    %s165 = scalar_lea.vmem %s3, 8
    %v166 = vld [vmem:[%s165] sm:$0xff]
    %s167 = scalar_lea.vmem %s4, 8
    %v168 = vld [vmem:[%s167] sm:$0xff]
    %169 = vrot.lane.b32.xlu0 %v159, 17
    %v170 = vpop.permute.xlu0 %169
    %171 = vrot.lane.b32.xlu0 %v161, 17
    %v172 = vpop.permute.xlu0 %171
    %v173 = vlaneseq
    %v174 = vand.u32 %v173, 127
    %vm175 = vcmp.lt.s32.totalorder %v174, 17
    %v176 = vsel %vm175, %v170, %v172
    %v177 = vsel %vm175, %v172, %v170
    %v178 = vld [vmem:[%s5] sm:$0x3]
    %v180 = vlaneseq
    %v181 = vshrl.u32 %v180, 7
    %v182 = vsub.s32 0, %v181
    %v183 = vrot.slane %v178, %v182
    %v184 = vlaneseq
    %v185 = vshrl.u32 %v184, 7
    %v186 = vsub.s32 1, %v185
    %v187 = vrot.slane %v178, %v186
    %v190 = vmul.f32 %v177, %v183
    %v191 = vmul.f32 %v176, %v187
    %192 = vrot.lane.b32.xlu0 %v159, 16
    %v193 = vpop.permute.xlu0 %192
    %194 = vrot.lane.b32.xlu0 %v161, 16
    %v195 = vpop.permute.xlu0 %194
    %vm196 = vcmp.lt.s32.totalorder %v174, 16
    %v197 = vsel %vm196, %v193, %v195
    %v198 = vsel %vm196, %v195, %v193
    %s199 = scalar_lea.vmem %s5, 2
    %v200 = vld [vmem:[%s199] sm:$0x3]
    %v202 = vlaneseq
    %v203 = vshrl.u32 %v202, 7
    %v204 = vsub.s32 0, %v203
    %v205 = vrot.slane %v200, %v204
    %v206 = vlaneseq
    %v207 = vshrl.u32 %v206, 7
    %v208 = vsub.s32 1, %v207
    %v209 = vrot.slane %v200, %v208
    %v212 = vmul.f32 %v198, %v205
    %v213 = vmul.f32 %v197, %v209
    %214 = vrot.lane.b32.xlu0 %v159, 15
    %v215 = vpop.permute.xlu0 %214
    %216 = vrot.lane.b32.xlu0 %v161, 15
    %v217 = vpop.permute.xlu0 %216
    %vm218 = vcmp.lt.s32.totalorder %v174, 15
    %v219 = vsel %vm218, %v215, %v217
    %v220 = vsel %vm218, %v217, %v215
    %s221 = scalar_lea.vmem %s5, 4
    %v222 = vld [vmem:[%s221] sm:$0x3]
    %v224 = vlaneseq
    %v225 = vshrl.u32 %v224, 7
    %v226 = vsub.s32 0, %v225
    %v227 = vrot.slane %v222, %v226
    %v228 = vlaneseq
    %v229 = vshrl.u32 %v228, 7
    %v230 = vsub.s32 1, %v229
    %v231 = vrot.slane %v222, %v230
    %v234 = vmul.f32 %v220, %v227
    %v235 = vmul.f32 %v219, %v231
    %236 = vrot.lane.b32.xlu0 %v159, 1
    %v237 = vpop.permute.xlu0 %236
    %238 = vrot.lane.b32.xlu0 %v161, 1
    %v239 = vpop.permute.xlu0 %238
    %vm240 = vcmp.lt.s32.totalorder %v174, 1
    %v241 = vsel %vm240, %v237, %v239
    %v242 = vsel %vm240, %v239, %v237
    %s243 = scalar_lea.vmem %s5, 6
    %v244 = vld [vmem:[%s243] sm:$0x3]
    %v246 = vlaneseq
    %v247 = vshrl.u32 %v246, 7
    %v248 = vsub.s32 0, %v247
    %v249 = vrot.slane %v244, %v248
    %v250 = vlaneseq
    %v251 = vshrl.u32 %v250, 7
    %v252 = vsub.s32 1, %v251
    %v253 = vrot.slane %v244, %v252
    %v256 = vmul.f32 %v242, %v249
    %v257 = vmul.f32 %v241, %v253
    %s258 = scalar_lea.vmem %s5, 8
    %v259 = vld [vmem:[%s258] sm:$0x3]
    %v261 = vlaneseq
    %v262 = vshrl.u32 %v261, 7
    %v263 = vsub.s32 0, %v262
    %v264 = vrot.slane %v259, %v263
    %v265 = vlaneseq
    %v266 = vshrl.u32 %v265, 7
    %v267 = vsub.s32 1, %v266
    %v268 = vrot.slane %v259, %v267
    %v271 = vmul.f32 %v159, %v264
    %v272 = vmul.f32 %v161, %v268
    %273 = vrot.lane.b32.xlu0 %v159, 127
    %v274 = vpop.permute.xlu0 %273
    %275 = vrot.lane.b32.xlu0 %v161, 127
    %v276 = vpop.permute.xlu0 %275
    %vm277 = vcmp.lt.s32.totalorder %v174, 127
    %v278 = vsel %vm277, %v274, %v276
    %v279 = vsel %vm277, %v276, %v274
    %s280 = scalar_lea.vmem %s5, 10
    %v281 = vld [vmem:[%s280] sm:$0x3]
    %v283 = vlaneseq
    %v284 = vshrl.u32 %v283, 7
    %v285 = vsub.s32 0, %v284
    %v286 = vrot.slane %v281, %v285
    %v287 = vlaneseq
    %v288 = vshrl.u32 %v287, 7
    %v289 = vsub.s32 1, %v288
    %v290 = vrot.slane %v281, %v289
    %v293 = vmul.f32 %v278, %v286
    %v294 = vmul.f32 %v279, %v290
    %295 = vrot.lane.b32.xlu0 %v159, 113
    %v296 = vpop.permute.xlu0 %295
    %297 = vrot.lane.b32.xlu0 %v161, 113
    %v298 = vpop.permute.xlu0 %297
    %vm299 = vcmp.lt.s32.totalorder %v174, 113
    %v300 = vsel %vm299, %v296, %v298
    %v301 = vsel %vm299, %v298, %v296
    %s302 = scalar_lea.vmem %s5, 12
    %v303 = vld [vmem:[%s302] sm:$0x3]
    %v305 = vlaneseq
    %v306 = vshrl.u32 %v305, 7
    %v307 = vsub.s32 0, %v306
    %v308 = vrot.slane %v303, %v307
    %v309 = vlaneseq
    %v310 = vshrl.u32 %v309, 7
    %v311 = vsub.s32 1, %v310
    %v312 = vrot.slane %v303, %v311
    %v315 = vmul.f32 %v300, %v308
    %v316 = vmul.f32 %v301, %v312
    %317 = vrot.lane.b32.xlu0 %v159, 112
    %v318 = vpop.permute.xlu0 %317
    %319 = vrot.lane.b32.xlu0 %v161, 112
    %v320 = vpop.permute.xlu0 %319
    %vm321 = vcmp.lt.s32.totalorder %v174, 112
    %v322 = vsel %vm321, %v318, %v320
    %v323 = vsel %vm321, %v320, %v318
    %s324 = scalar_lea.vmem %s5, 14
    %v325 = vld [vmem:[%s324] sm:$0x3]
    %v327 = vlaneseq
    %v328 = vshrl.u32 %v327, 7
    %v329 = vsub.s32 0, %v328
    %v330 = vrot.slane %v325, %v329
    %v331 = vlaneseq
    %v332 = vshrl.u32 %v331, 7
    %v333 = vsub.s32 1, %v332
    %v334 = vrot.slane %v325, %v333
    %v337 = vmul.f32 %v322, %v330
    %v338 = vmul.f32 %v323, %v334
    %339 = vrot.lane.b32.xlu0 %v159, 111
    %v340 = vpop.permute.xlu0 %339
    %341 = vrot.lane.b32.xlu0 %v161, 111
    %v342 = vpop.permute.xlu0 %341
    %vm343 = vcmp.lt.s32.totalorder %v174, 111
    %v344 = vsel %vm343, %v340, %v342
    %v345 = vsel %vm343, %v342, %v340
    %s346 = scalar_lea.vmem %s5, 16
    %v347 = vld [vmem:[%s346] sm:$0x3]
    %v349 = vlaneseq
    %v350 = vshrl.u32 %v349, 7
    %v351 = vsub.s32 0, %v350
    %v352 = vrot.slane %v347, %v351
    %v353 = vlaneseq
    %v354 = vshrl.u32 %v353, 7
    %v355 = vsub.s32 1, %v354
    %v356 = vrot.slane %v347, %v355
    %v359 = vmul.f32 %v344, %v352
    %v360 = vmul.f32 %v345, %v356
    %362 = vset.pattern.permute.xlu0 0
    %363 = vperm.xlu0 %362, %v164
    %v364 = vpop.permute.xlu0 %363
    %vm366 = vcmask 588800
    %v368 = vsel %vm366, %v163, 0
    %370 = vmatprep.subr.mxu0 %v191
    %371 = vmatpush1.msra.mxu0 %v190
    %372 = vmatprep.subr.mxu0 %v213
    %373 = vmatpush1.msra.mxu0 %v212
    %374 = vmatprep.subr.mxu0 %v235
    %375 = vmatpush1.msra.mxu0 %v234
    %376 = vmatprep.subr.mxu0 %v257
    %377 = vmatpush1.msra.mxu0 %v256
    %378 = vmatprep.subr.mxu0 %v272
    %379 = vmatpush1.msra.mxu0 %v271
    %380 = vmatprep.subr.mxu0 %v294
    %381 = vmatpush1.msra.mxu0 %v293
    %382 = vmatprep.subr.mxu0 %v316
    %383 = vmatpush1.msra.mxu0 %v315
    %384 = vmatprep.subr.mxu0 %v338
    %385 = vmatpush1.msra.mxu0 %v337
    %386 = vmatprep.subr.mxu0 %v360
    %387 = vmatpush1.msra.mxu0 %v359
    %388 = vmatprep.subr.mxu0 0.0
    %389 = vmatpush1.msra.mxu0 0.0
    %390 = vmatprep.subr.mxu0 0.0
    %391 = vmatpush1.msra.mxu0 0.0
    %392 = vmatprep.subr.mxu0 0.0
    %393 = vmatpush1.msra.mxu0 0.0
    %394 = vmatprep.subr.mxu0 0.0
    %395 = vmatpush1.msra.mxu0 0.0
    %396 = vmatprep.subr.mxu0 0.0
    %397 = vmatpush1.msra.mxu0 0.0
    %398 = vmatprep.subr.mxu0 0.0
    %399 = vmatpush1.msra.mxu0 0.0
    %400 = vmatprep.subr.mxu0 0.0
    %401 = vmatpush1.msra.mxu0 0.0
    %402 = vmatprep.subr.mxu0 0.0
    %403 = vmatpush1.msra.mxu0 0.0
    %404 = vmatprep.subr.mxu0 0.0
    %405 = vmatpush1.msra.mxu0 0.0
    %406 = vmatprep.subr.mxu0 0.0
    %407 = vmatpush1.msra.mxu0 0.0
    %408 = vmatprep.subr.mxu0 0.0
    %409 = vmatpush1.msra.mxu0 0.0
    %410 = vmatprep.subr.mxu0 0.0
    %411 = vmatpush1.msra.mxu0 0.0
    %412 = vmatprep.subr.mxu0 0.0
    %413 = vmatpush1.msra.mxu0 0.0
    %414 = vmatprep.subr.mxu0 0.0
    %415 = vmatpush1.msra.mxu0 0.0
    %416 = vmatprep.subr.mxu0 0.0
    %417 = vmatpush1.msra.mxu0 0.0
    %418 = vmatprep.subr.mxu0 0.0
    %419 = vmatpush1.msra.mxu0 0.0
    %420 = vmatprep.subr.mxu0 0.0
    %421 = vmatpush1.msra.mxu0 0.0
    %422 = vmatprep.subr.mxu0 0.0
    %423 = vmatpush1.msra.mxu0 0.0
    %424 = vmatprep.subr.mxu0 0.0
    %425 = vmatpush1.msra.mxu0 0.0
    %426 = vmatprep.subr.mxu0 0.0
    %427 = vmatpush1.msra.mxu0 0.0
    %428 = vmatprep.subr.mxu0 0.0
    %429 = vmatpush1.msra.mxu0 0.0
    %430 = vmatprep.subr.mxu0 0.0
    %431 = vmatpush1.msra.mxu0 0.0
    %432 = vmatprep.subr.mxu0 0.0
    %433 = vmatpush1.msra.mxu0 0.0
    %434 = vmatprep.mubr.f32.mxu0 0.0
    %435 = vmatmul.mubr.f32.gmra.mrb[0].mxu0 %v368
    %v436 = vpop.f32.mrb[0].mxu0
    %v437 = vadd.f32 %v364, %v436
    %v438 = vpop.f32.mrb[0].mxu0
    %v439 = vadd.f32 %v364, %v438
    %440 = vdwg.mxu0
    %v441 = vmax.f32 %v437, 0.0
    %v442 = vmax.f32 %v439, 0.0
    %443 = vrot.lane.b32.xlu0 %v441, 17
    %v444 = vpop.permute.xlu0 %443
    %445 = vrot.lane.b32.xlu0 %v442, 17
    %v446 = vpop.permute.xlu0 %445
    %v447 = vsel %vm175, %v444, %v446
    %v448 = vsel %vm175, %v446, %v444
    %v449 = vmul.f32 %v448, %v183
    %v450 = vmul.f32 %v447, %v187
    %451 = vrot.lane.b32.xlu0 %v441, 16
    %v452 = vpop.permute.xlu0 %451
    %453 = vrot.lane.b32.xlu0 %v442, 16
    %v454 = vpop.permute.xlu0 %453
    %v455 = vsel %vm196, %v452, %v454
    %v456 = vsel %vm196, %v454, %v452
    %v457 = vmul.f32 %v456, %v205
    %v458 = vmul.f32 %v455, %v209
    %459 = vrot.lane.b32.xlu0 %v441, 15
    %v460 = vpop.permute.xlu0 %459
    %461 = vrot.lane.b32.xlu0 %v442, 15
    %v462 = vpop.permute.xlu0 %461
    %v463 = vsel %vm218, %v460, %v462
    %v464 = vsel %vm218, %v462, %v460
    %v465 = vmul.f32 %v464, %v227
    %v466 = vmul.f32 %v463, %v231
    %467 = vrot.lane.b32.xlu0 %v441, 1
    %v468 = vpop.permute.xlu0 %467
    %469 = vrot.lane.b32.xlu0 %v442, 1
    %v470 = vpop.permute.xlu0 %469
    %v471 = vsel %vm240, %v468, %v470
    %v472 = vsel %vm240, %v470, %v468
    %v473 = vmul.f32 %v472, %v249
    %v474 = vmul.f32 %v471, %v253
    %v475 = vmul.f32 %v441, %v264
    %v476 = vmul.f32 %v442, %v268
    %477 = vrot.lane.b32.xlu0 %v441, 127
    %v478 = vpop.permute.xlu0 %477
    %479 = vrot.lane.b32.xlu0 %v442, 127
    %v480 = vpop.permute.xlu0 %479
    %v481 = vsel %vm277, %v478, %v480
    %v482 = vsel %vm277, %v480, %v478
    %v483 = vmul.f32 %v481, %v286
    %v484 = vmul.f32 %v482, %v290
    %485 = vrot.lane.b32.xlu0 %v441, 113
    %v486 = vpop.permute.xlu0 %485
    %487 = vrot.lane.b32.xlu0 %v442, 113
    %v488 = vpop.permute.xlu0 %487
    %v489 = vsel %vm299, %v486, %v488
    %v490 = vsel %vm299, %v488, %v486
    %v491 = vmul.f32 %v489, %v308
    %v492 = vmul.f32 %v490, %v312
    %493 = vrot.lane.b32.xlu0 %v441, 112
    %v494 = vpop.permute.xlu0 %493
    %495 = vrot.lane.b32.xlu0 %v442, 112
    %v496 = vpop.permute.xlu0 %495
    %v497 = vsel %vm321, %v494, %v496
    %v498 = vsel %vm321, %v496, %v494
    %v499 = vmul.f32 %v497, %v330
    %v500 = vmul.f32 %v498, %v334
    %501 = vrot.lane.b32.xlu0 %v441, 111
    %v502 = vpop.permute.xlu0 %501
    %503 = vrot.lane.b32.xlu0 %v442, 111
    %v504 = vpop.permute.xlu0 %503
    %v505 = vsel %vm343, %v502, %v504
    %v506 = vsel %vm343, %v504, %v502
    %v507 = vmul.f32 %v505, %v352
    %v508 = vmul.f32 %v506, %v356
    %510 = vset.pattern.permute.xlu0 0
    %511 = vperm.xlu0 %510, %v168
    %v512 = vpop.permute.xlu0 %511
    %v515 = vsel %vm366, %v166, 0
    %517 = vmatprep.subr.mxu0 %v450
    %518 = vmatpush1.msra.mxu0 %v449
    %519 = vmatprep.subr.mxu0 %v458
    %520 = vmatpush1.msra.mxu0 %v457
    %521 = vmatprep.subr.mxu0 %v466
    %522 = vmatpush1.msra.mxu0 %v465
    %523 = vmatprep.subr.mxu0 %v474
    %524 = vmatpush1.msra.mxu0 %v473
    %525 = vmatprep.subr.mxu0 %v476
    %526 = vmatpush1.msra.mxu0 %v475
    %527 = vmatprep.subr.mxu0 %v484
    %528 = vmatpush1.msra.mxu0 %v483
    %529 = vmatprep.subr.mxu0 %v492
    %530 = vmatpush1.msra.mxu0 %v491
    %531 = vmatprep.subr.mxu0 %v500
    %532 = vmatpush1.msra.mxu0 %v499
    %533 = vmatprep.subr.mxu0 %v508
    %534 = vmatpush1.msra.mxu0 %v507
    %535 = vmatprep.subr.mxu0 0.0
    %536 = vmatpush1.msra.mxu0 0.0
    %537 = vmatprep.subr.mxu0 0.0
    %538 = vmatpush1.msra.mxu0 0.0
    %539 = vmatprep.subr.mxu0 0.0
    %540 = vmatpush1.msra.mxu0 0.0
    %541 = vmatprep.subr.mxu0 0.0
    %542 = vmatpush1.msra.mxu0 0.0
    %543 = vmatprep.subr.mxu0 0.0
    %544 = vmatpush1.msra.mxu0 0.0
    %545 = vmatprep.subr.mxu0 0.0
    %546 = vmatpush1.msra.mxu0 0.0
    %547 = vmatprep.subr.mxu0 0.0
    %548 = vmatpush1.msra.mxu0 0.0
    %549 = vmatprep.subr.mxu0 0.0
    %550 = vmatpush1.msra.mxu0 0.0
    %551 = vmatprep.subr.mxu0 0.0
    %552 = vmatpush1.msra.mxu0 0.0
    %553 = vmatprep.subr.mxu0 0.0
    %554 = vmatpush1.msra.mxu0 0.0
    %555 = vmatprep.subr.mxu0 0.0
    %556 = vmatpush1.msra.mxu0 0.0
    %557 = vmatprep.subr.mxu0 0.0
    %558 = vmatpush1.msra.mxu0 0.0
    %559 = vmatprep.subr.mxu0 0.0
    %560 = vmatpush1.msra.mxu0 0.0
    %561 = vmatprep.subr.mxu0 0.0
    %562 = vmatpush1.msra.mxu0 0.0
    %563 = vmatprep.subr.mxu0 0.0
    %564 = vmatpush1.msra.mxu0 0.0
    %565 = vmatprep.subr.mxu0 0.0
    %566 = vmatpush1.msra.mxu0 0.0
    %567 = vmatprep.subr.mxu0 0.0
    %568 = vmatpush1.msra.mxu0 0.0
    %569 = vmatprep.subr.mxu0 0.0
    %570 = vmatpush1.msra.mxu0 0.0
    %571 = vmatprep.subr.mxu0 0.0
    %572 = vmatpush1.msra.mxu0 0.0
    %573 = vmatprep.subr.mxu0 0.0
    %574 = vmatpush1.msra.mxu0 0.0
    %575 = vmatprep.subr.mxu0 0.0
    %576 = vmatpush1.msra.mxu0 0.0
    %577 = vmatprep.subr.mxu0 0.0
    %578 = vmatpush1.msra.mxu0 0.0
    %579 = vmatprep.subr.mxu0 0.0
    %580 = vmatpush1.msra.mxu0 0.0
    %581 = vmatprep.mubr.f32.mxu0 0.0
    %582 = vmatmul.mubr.f32.gmra.mrb[0].mxu0 %v515
    %v583 = vpop.f32.mrb[0].mxu0
    %v584 = vadd.f32 %v512, %v583
    %v585 = vpop.f32.mrb[0].mxu0
    %v586 = vadd.f32 %v512, %v585
    %587 = vdwg.mxu0
    %v588 = vadd.f32 %v584, %v159
    %v589 = vadd.f32 %v586, %v161
    %s590 = scalar_lea.vmem %s3, 16
    %v591 = vld [vmem:[%s590] sm:$0xff]
    %s592 = scalar_lea.vmem %s4, 16
    %v593 = vld [vmem:[%s592] sm:$0xff]
    %s594 = scalar_lea.vmem %s3, 24
    %v595 = vld [vmem:[%s594] sm:$0xff]
    %s596 = scalar_lea.vmem %s4, 24
    %v597 = vld [vmem:[%s596] sm:$0xff]
    %598 = vrot.lane.b32.xlu0 %v588, 17
    %v599 = vpop.permute.xlu0 %598
    %600 = vrot.lane.b32.xlu0 %v589, 17
    %v601 = vpop.permute.xlu0 %600
    %v602 = vsel %vm175, %v599, %v601
    %v603 = vsel %vm175, %v601, %v599
    %v604 = vmul.f32 %v603, %v183
    %v605 = vmul.f32 %v602, %v187
    %606 = vrot.lane.b32.xlu0 %v588, 16
    %v607 = vpop.permute.xlu0 %606
    %608 = vrot.lane.b32.xlu0 %v589, 16
    %v609 = vpop.permute.xlu0 %608
    %v610 = vsel %vm196, %v607, %v609
    %v611 = vsel %vm196, %v609, %v607
    %v612 = vmul.f32 %v611, %v205
    %v613 = vmul.f32 %v610, %v209
    %614 = vrot.lane.b32.xlu0 %v588, 15
    %v615 = vpop.permute.xlu0 %614
    %616 = vrot.lane.b32.xlu0 %v589, 15
    %v617 = vpop.permute.xlu0 %616
    %v618 = vsel %vm218, %v615, %v617
    %v619 = vsel %vm218, %v617, %v615
    %v620 = vmul.f32 %v619, %v227
    %v621 = vmul.f32 %v618, %v231
    %622 = vrot.lane.b32.xlu0 %v588, 1
    %v623 = vpop.permute.xlu0 %622
    %624 = vrot.lane.b32.xlu0 %v589, 1
    %v625 = vpop.permute.xlu0 %624
    %v626 = vsel %vm240, %v623, %v625
    %v627 = vsel %vm240, %v625, %v623
    %v628 = vmul.f32 %v627, %v249
    %v629 = vmul.f32 %v626, %v253
    %v630 = vmul.f32 %v588, %v264
    %v631 = vmul.f32 %v589, %v268
    %632 = vrot.lane.b32.xlu0 %v588, 127
    %v633 = vpop.permute.xlu0 %632
    %634 = vrot.lane.b32.xlu0 %v589, 127
    %v635 = vpop.permute.xlu0 %634
    %v636 = vsel %vm277, %v633, %v635
    %v637 = vsel %vm277, %v635, %v633
    %v638 = vmul.f32 %v636, %v286
    %v639 = vmul.f32 %v637, %v290
    %640 = vrot.lane.b32.xlu0 %v588, 113
    %v641 = vpop.permute.xlu0 %640
    %642 = vrot.lane.b32.xlu0 %v589, 113
    %v643 = vpop.permute.xlu0 %642
    %v644 = vsel %vm299, %v641, %v643
    %v645 = vsel %vm299, %v643, %v641
    %v646 = vmul.f32 %v644, %v308
    %v647 = vmul.f32 %v645, %v312
    %648 = vrot.lane.b32.xlu0 %v588, 112
    %v649 = vpop.permute.xlu0 %648
    %650 = vrot.lane.b32.xlu0 %v589, 112
    %v651 = vpop.permute.xlu0 %650
    %v652 = vsel %vm321, %v649, %v651
    %v653 = vsel %vm321, %v651, %v649
    %v654 = vmul.f32 %v652, %v330
    %v655 = vmul.f32 %v653, %v334
    %656 = vrot.lane.b32.xlu0 %v588, 111
    %v657 = vpop.permute.xlu0 %656
    %658 = vrot.lane.b32.xlu0 %v589, 111
    %v659 = vpop.permute.xlu0 %658
    %v660 = vsel %vm343, %v657, %v659
    %v661 = vsel %vm343, %v659, %v657
    %v662 = vmul.f32 %v660, %v352
    %v663 = vmul.f32 %v661, %v356
    %665 = vset.pattern.permute.xlu0 0
    %666 = vperm.xlu0 %665, %v593
    %v667 = vpop.permute.xlu0 %666
    %v670 = vsel %vm366, %v591, 0
    %672 = vmatprep.subr.mxu0 %v605
    %673 = vmatpush1.msra.mxu0 %v604
    %674 = vmatprep.subr.mxu0 %v613
    %675 = vmatpush1.msra.mxu0 %v612
    %676 = vmatprep.subr.mxu0 %v621
    %677 = vmatpush1.msra.mxu0 %v620
    %678 = vmatprep.subr.mxu0 %v629
    %679 = vmatpush1.msra.mxu0 %v628
    %680 = vmatprep.subr.mxu0 %v631
    %681 = vmatpush1.msra.mxu0 %v630
    %682 = vmatprep.subr.mxu0 %v639
    %683 = vmatpush1.msra.mxu0 %v638
    %684 = vmatprep.subr.mxu0 %v647
    %685 = vmatpush1.msra.mxu0 %v646
    %686 = vmatprep.subr.mxu0 %v655
    %687 = vmatpush1.msra.mxu0 %v654
    %688 = vmatprep.subr.mxu0 %v663
    %689 = vmatpush1.msra.mxu0 %v662
    %690 = vmatprep.subr.mxu0 0.0
    %691 = vmatpush1.msra.mxu0 0.0
    %692 = vmatprep.subr.mxu0 0.0
    %693 = vmatpush1.msra.mxu0 0.0
    %694 = vmatprep.subr.mxu0 0.0
    %695 = vmatpush1.msra.mxu0 0.0
    %696 = vmatprep.subr.mxu0 0.0
    %697 = vmatpush1.msra.mxu0 0.0
    %698 = vmatprep.subr.mxu0 0.0
    %699 = vmatpush1.msra.mxu0 0.0
    %700 = vmatprep.subr.mxu0 0.0
    %701 = vmatpush1.msra.mxu0 0.0
    %702 = vmatprep.subr.mxu0 0.0
    %703 = vmatpush1.msra.mxu0 0.0
    %704 = vmatprep.subr.mxu0 0.0
    %705 = vmatpush1.msra.mxu0 0.0
    %706 = vmatprep.subr.mxu0 0.0
    %707 = vmatpush1.msra.mxu0 0.0
    %708 = vmatprep.subr.mxu0 0.0
    %709 = vmatpush1.msra.mxu0 0.0
    %710 = vmatprep.subr.mxu0 0.0
    %711 = vmatpush1.msra.mxu0 0.0
    %712 = vmatprep.subr.mxu0 0.0
    %713 = vmatpush1.msra.mxu0 0.0
    %714 = vmatprep.subr.mxu0 0.0
    %715 = vmatpush1.msra.mxu0 0.0
    %716 = vmatprep.subr.mxu0 0.0
    %717 = vmatpush1.msra.mxu0 0.0
    %718 = vmatprep.subr.mxu0 0.0
    %719 = vmatpush1.msra.mxu0 0.0
    %720 = vmatprep.subr.mxu0 0.0
    %721 = vmatpush1.msra.mxu0 0.0
    %722 = vmatprep.subr.mxu0 0.0
    %723 = vmatpush1.msra.mxu0 0.0
    %724 = vmatprep.subr.mxu0 0.0
    %725 = vmatpush1.msra.mxu0 0.0
    %726 = vmatprep.subr.mxu0 0.0
    %727 = vmatpush1.msra.mxu0 0.0
    %728 = vmatprep.subr.mxu0 0.0
    %729 = vmatpush1.msra.mxu0 0.0
    %730 = vmatprep.subr.mxu0 0.0
    %731 = vmatpush1.msra.mxu0 0.0
    %732 = vmatprep.subr.mxu0 0.0
    %733 = vmatpush1.msra.mxu0 0.0
    %734 = vmatprep.subr.mxu0 0.0
    %735 = vmatpush1.msra.mxu0 0.0
    %736 = vmatprep.mubr.f32.mxu0 0.0
    %737 = vmatmul.mubr.f32.gmra.mrb[0].mxu0 %v670
    %v738 = vpop.f32.mrb[0].mxu0
    %v739 = vadd.f32 %v667, %v738
    %v740 = vpop.f32.mrb[0].mxu0
    %v741 = vadd.f32 %v667, %v740
    %742 = vdwg.mxu0
    %v743 = vmax.f32 %v739, 0.0
    %v744 = vmax.f32 %v741, 0.0
    %745 = vrot.lane.b32.xlu0 %v743, 17
    %v746 = vpop.permute.xlu0 %745
    %747 = vrot.lane.b32.xlu0 %v744, 17
    %v748 = vpop.permute.xlu0 %747
    %v749 = vsel %vm175, %v746, %v748
    %v750 = vsel %vm175, %v748, %v746
    %v751 = vmul.f32 %v750, %v183
    %v752 = vmul.f32 %v749, %v187
    %753 = vrot.lane.b32.xlu0 %v743, 16
    %v754 = vpop.permute.xlu0 %753
    %755 = vrot.lane.b32.xlu0 %v744, 16
    %v756 = vpop.permute.xlu0 %755
    %v757 = vsel %vm196, %v754, %v756
    %v758 = vsel %vm196, %v756, %v754
    %v759 = vmul.f32 %v758, %v205
    %v760 = vmul.f32 %v757, %v209
    %761 = vrot.lane.b32.xlu0 %v743, 15
    %v762 = vpop.permute.xlu0 %761
    %763 = vrot.lane.b32.xlu0 %v744, 15
    %v764 = vpop.permute.xlu0 %763
    %v765 = vsel %vm218, %v762, %v764
    %v766 = vsel %vm218, %v764, %v762
    %v767 = vmul.f32 %v766, %v227
    %v768 = vmul.f32 %v765, %v231
    %769 = vrot.lane.b32.xlu0 %v743, 1
    %v770 = vpop.permute.xlu0 %769
    %771 = vrot.lane.b32.xlu0 %v744, 1
    %v772 = vpop.permute.xlu0 %771
    %v773 = vsel %vm240, %v770, %v772
    %v774 = vsel %vm240, %v772, %v770
    %v775 = vmul.f32 %v774, %v249
    %v776 = vmul.f32 %v773, %v253
    %v777 = vmul.f32 %v743, %v264
    %v778 = vmul.f32 %v744, %v268
    %779 = vrot.lane.b32.xlu0 %v743, 127
    %v780 = vpop.permute.xlu0 %779
    %781 = vrot.lane.b32.xlu0 %v744, 127
    %v782 = vpop.permute.xlu0 %781
    %v783 = vsel %vm277, %v780, %v782
    %v784 = vsel %vm277, %v782, %v780
    %v785 = vmul.f32 %v783, %v286
    %v786 = vmul.f32 %v784, %v290
    %787 = vrot.lane.b32.xlu0 %v743, 113
    %v788 = vpop.permute.xlu0 %787
    %789 = vrot.lane.b32.xlu0 %v744, 113
    %v790 = vpop.permute.xlu0 %789
    %v791 = vsel %vm299, %v788, %v790
    %v792 = vsel %vm299, %v790, %v788
    %v793 = vmul.f32 %v791, %v308
    %v794 = vmul.f32 %v792, %v312
    %795 = vrot.lane.b32.xlu0 %v743, 112
    %v796 = vpop.permute.xlu0 %795
    %797 = vrot.lane.b32.xlu0 %v744, 112
    %v798 = vpop.permute.xlu0 %797
    %v799 = vsel %vm321, %v796, %v798
    %v800 = vsel %vm321, %v798, %v796
    %v801 = vmul.f32 %v799, %v330
    %v802 = vmul.f32 %v800, %v334
    %803 = vrot.lane.b32.xlu0 %v743, 111
    %v804 = vpop.permute.xlu0 %803
    %805 = vrot.lane.b32.xlu0 %v744, 111
    %v806 = vpop.permute.xlu0 %805
    %v807 = vsel %vm343, %v804, %v806
    %v808 = vsel %vm343, %v806, %v804
    %v809 = vmul.f32 %v807, %v352
    %v810 = vmul.f32 %v808, %v356
    %812 = vset.pattern.permute.xlu0 0
    %813 = vperm.xlu0 %812, %v597
    %v814 = vpop.permute.xlu0 %813
    %v817 = vsel %vm366, %v595, 0
    %819 = vmatprep.subr.mxu0 %v752
    %820 = vmatpush1.msra.mxu0 %v751
    %821 = vmatprep.subr.mxu0 %v760
    %822 = vmatpush1.msra.mxu0 %v759
    %823 = vmatprep.subr.mxu0 %v768
    %824 = vmatpush1.msra.mxu0 %v767
    %825 = vmatprep.subr.mxu0 %v776
    %826 = vmatpush1.msra.mxu0 %v775
    %827 = vmatprep.subr.mxu0 %v778
    %828 = vmatpush1.msra.mxu0 %v777
    %829 = vmatprep.subr.mxu0 %v786
    %830 = vmatpush1.msra.mxu0 %v785
    %831 = vmatprep.subr.mxu0 %v794
    %832 = vmatpush1.msra.mxu0 %v793
    %833 = vmatprep.subr.mxu0 %v802
    %834 = vmatpush1.msra.mxu0 %v801
    %835 = vmatprep.subr.mxu0 %v810
    %836 = vmatpush1.msra.mxu0 %v809
    %837 = vmatprep.subr.mxu0 0.0
    %838 = vmatpush1.msra.mxu0 0.0
    %839 = vmatprep.subr.mxu0 0.0
    %840 = vmatpush1.msra.mxu0 0.0
    %841 = vmatprep.subr.mxu0 0.0
    %842 = vmatpush1.msra.mxu0 0.0
    %843 = vmatprep.subr.mxu0 0.0
    %844 = vmatpush1.msra.mxu0 0.0
    %845 = vmatprep.subr.mxu0 0.0
    %846 = vmatpush1.msra.mxu0 0.0
    %847 = vmatprep.subr.mxu0 0.0
    %848 = vmatpush1.msra.mxu0 0.0
    %849 = vmatprep.subr.mxu0 0.0
    %850 = vmatpush1.msra.mxu0 0.0
    %851 = vmatprep.subr.mxu0 0.0
    %852 = vmatpush1.msra.mxu0 0.0
    %853 = vmatprep.subr.mxu0 0.0
    %854 = vmatpush1.msra.mxu0 0.0
    %855 = vmatprep.subr.mxu0 0.0
    %856 = vmatpush1.msra.mxu0 0.0
    %857 = vmatprep.subr.mxu0 0.0
    %858 = vmatpush1.msra.mxu0 0.0
    %859 = vmatprep.subr.mxu0 0.0
    %860 = vmatpush1.msra.mxu0 0.0
    %861 = vmatprep.subr.mxu0 0.0
    %862 = vmatpush1.msra.mxu0 0.0
    %863 = vmatprep.subr.mxu0 0.0
    %864 = vmatpush1.msra.mxu0 0.0
    %865 = vmatprep.subr.mxu0 0.0
    %866 = vmatpush1.msra.mxu0 0.0
    %867 = vmatprep.subr.mxu0 0.0
    %868 = vmatpush1.msra.mxu0 0.0
    %869 = vmatprep.subr.mxu0 0.0
    %870 = vmatpush1.msra.mxu0 0.0
    %871 = vmatprep.subr.mxu0 0.0
    %872 = vmatpush1.msra.mxu0 0.0
    %873 = vmatprep.subr.mxu0 0.0
    %874 = vmatpush1.msra.mxu0 0.0
    %875 = vmatprep.subr.mxu0 0.0
    %876 = vmatpush1.msra.mxu0 0.0
    %877 = vmatprep.subr.mxu0 0.0
    %878 = vmatpush1.msra.mxu0 0.0
    %879 = vmatprep.subr.mxu0 0.0
    %880 = vmatpush1.msra.mxu0 0.0
    %881 = vmatprep.subr.mxu0 0.0
    %882 = vmatpush1.msra.mxu0 0.0
    %883 = vmatprep.mubr.f32.mxu0 0.0
    %884 = vmatmul.mubr.f32.gmra.mrb[0].mxu0 %v817
    %v885 = vpop.f32.mrb[0].mxu0
    %v886 = vadd.f32 %v814, %v885
    %v887 = vpop.f32.mrb[0].mxu0
    %v888 = vadd.f32 %v814, %v887
    %889 = vdwg.mxu0
    %v890 = vadd.f32 %v886, %v588
    %v891 = vadd.f32 %v888, %v589
    %s892 = scalar_lea.vmem %s3, 32
    %v893 = vld [vmem:[%s892] sm:$0xff]
    %s894 = scalar_lea.vmem %s4, 32
    %v895 = vld [vmem:[%s894] sm:$0xff]
    %896 = vrot.lane.b32.xlu0 %v890, 17
    %v897 = vpop.permute.xlu0 %896
    %898 = vrot.lane.b32.xlu0 %v891, 17
    %v899 = vpop.permute.xlu0 %898
    %v900 = vsel %vm175, %v897, %v899
    %v901 = vsel %vm175, %v899, %v897
    %v902 = vmul.f32 %v901, %v183
    %v903 = vmul.f32 %v900, %v187
    %904 = vrot.lane.b32.xlu0 %v890, 16
    %v905 = vpop.permute.xlu0 %904
    %906 = vrot.lane.b32.xlu0 %v891, 16
    %v907 = vpop.permute.xlu0 %906
    %v908 = vsel %vm196, %v905, %v907
    %v909 = vsel %vm196, %v907, %v905
    %v910 = vmul.f32 %v909, %v205
    %v911 = vmul.f32 %v908, %v209
    %912 = vrot.lane.b32.xlu0 %v890, 15
    %v913 = vpop.permute.xlu0 %912
    %914 = vrot.lane.b32.xlu0 %v891, 15
    %v915 = vpop.permute.xlu0 %914
    %v916 = vsel %vm218, %v913, %v915
    %v917 = vsel %vm218, %v915, %v913
    %v918 = vmul.f32 %v917, %v227
    %v919 = vmul.f32 %v916, %v231
    %920 = vrot.lane.b32.xlu0 %v890, 1
    %v921 = vpop.permute.xlu0 %920
    %922 = vrot.lane.b32.xlu0 %v891, 1
    %v923 = vpop.permute.xlu0 %922
    %v924 = vsel %vm240, %v921, %v923
    %v925 = vsel %vm240, %v923, %v921
    %v926 = vmul.f32 %v925, %v249
    %v927 = vmul.f32 %v924, %v253
    %v928 = vmul.f32 %v890, %v264
    %v929 = vmul.f32 %v891, %v268
    %930 = vrot.lane.b32.xlu0 %v890, 127
    %v931 = vpop.permute.xlu0 %930
    %932 = vrot.lane.b32.xlu0 %v891, 127
    %v933 = vpop.permute.xlu0 %932
    %v934 = vsel %vm277, %v931, %v933
    %v935 = vsel %vm277, %v933, %v931
    %v936 = vmul.f32 %v934, %v286
    %v937 = vmul.f32 %v935, %v290
    %938 = vrot.lane.b32.xlu0 %v890, 113
    %v939 = vpop.permute.xlu0 %938
    %940 = vrot.lane.b32.xlu0 %v891, 113
    %v941 = vpop.permute.xlu0 %940
    %v942 = vsel %vm299, %v939, %v941
    %v943 = vsel %vm299, %v941, %v939
    %v944 = vmul.f32 %v942, %v308
    %v945 = vmul.f32 %v943, %v312
    %946 = vrot.lane.b32.xlu0 %v890, 112
    %v947 = vpop.permute.xlu0 %946
    %948 = vrot.lane.b32.xlu0 %v891, 112
    %v949 = vpop.permute.xlu0 %948
    %v950 = vsel %vm321, %v947, %v949
    %v951 = vsel %vm321, %v949, %v947
    %v952 = vmul.f32 %v950, %v330
    %v953 = vmul.f32 %v951, %v334
    %954 = vrot.lane.b32.xlu0 %v890, 111
    %v955 = vpop.permute.xlu0 %954
    %956 = vrot.lane.b32.xlu0 %v891, 111
    %v957 = vpop.permute.xlu0 %956
    %v958 = vsel %vm343, %v955, %v957
    %v959 = vsel %vm343, %v957, %v955
    %v960 = vmul.f32 %v958, %v352
    %v961 = vmul.f32 %v959, %v356
    %963 = vset.pattern.permute.xlu0 0
    %964 = vperm.xlu0 %963, %v895
    %v965 = vpop.permute.xlu0 %964
    %v968 = vsel %vm366, %v893, 0
    %970 = vmatprep.subr.mxu0 %v903
    %971 = vmatpush1.msra.mxu0 %v902
    %972 = vmatprep.subr.mxu0 %v911
    %973 = vmatpush1.msra.mxu0 %v910
    %974 = vmatprep.subr.mxu0 %v919
    %975 = vmatpush1.msra.mxu0 %v918
    %976 = vmatprep.subr.mxu0 %v927
    %977 = vmatpush1.msra.mxu0 %v926
    %978 = vmatprep.subr.mxu0 %v929
    %979 = vmatpush1.msra.mxu0 %v928
    %980 = vmatprep.subr.mxu0 %v937
    %981 = vmatpush1.msra.mxu0 %v936
    %982 = vmatprep.subr.mxu0 %v945
    %983 = vmatpush1.msra.mxu0 %v944
    %984 = vmatprep.subr.mxu0 %v953
    %985 = vmatpush1.msra.mxu0 %v952
    %986 = vmatprep.subr.mxu0 %v961
    %987 = vmatpush1.msra.mxu0 %v960
    %988 = vmatprep.subr.mxu0 0.0
    %989 = vmatpush1.msra.mxu0 0.0
    %990 = vmatprep.subr.mxu0 0.0
    %991 = vmatpush1.msra.mxu0 0.0
    %992 = vmatprep.subr.mxu0 0.0
    %993 = vmatpush1.msra.mxu0 0.0
    %994 = vmatprep.subr.mxu0 0.0
    %995 = vmatpush1.msra.mxu0 0.0
    %996 = vmatprep.subr.mxu0 0.0
    %997 = vmatpush1.msra.mxu0 0.0
    %998 = vmatprep.subr.mxu0 0.0
    %999 = vmatpush1.msra.mxu0 0.0
    %1000 = vmatprep.subr.mxu0 0.0
    %1001 = vmatpush1.msra.mxu0 0.0
    %1002 = vmatprep.subr.mxu0 0.0
    %1003 = vmatpush1.msra.mxu0 0.0
    %1004 = vmatprep.subr.mxu0 0.0
    %1005 = vmatpush1.msra.mxu0 0.0
    %1006 = vmatprep.subr.mxu0 0.0
    %1007 = vmatpush1.msra.mxu0 0.0
    %1008 = vmatprep.subr.mxu0 0.0
    %1009 = vmatpush1.msra.mxu0 0.0
    %1010 = vmatprep.subr.mxu0 0.0
    %1011 = vmatpush1.msra.mxu0 0.0
    %1012 = vmatprep.subr.mxu0 0.0
    %1013 = vmatpush1.msra.mxu0 0.0
    %1014 = vmatprep.subr.mxu0 0.0
    %1015 = vmatpush1.msra.mxu0 0.0
    %1016 = vmatprep.subr.mxu0 0.0
    %1017 = vmatpush1.msra.mxu0 0.0
    %1018 = vmatprep.subr.mxu0 0.0
    %1019 = vmatpush1.msra.mxu0 0.0
    %1020 = vmatprep.subr.mxu0 0.0
    %1021 = vmatpush1.msra.mxu0 0.0
    %1022 = vmatprep.subr.mxu0 0.0
    %1023 = vmatpush1.msra.mxu0 0.0
    %1024 = vmatprep.subr.mxu0 0.0
    %1025 = vmatpush1.msra.mxu0 0.0
    %1026 = vmatprep.subr.mxu0 0.0
    %1027 = vmatpush1.msra.mxu0 0.0
    %1028 = vmatprep.subr.mxu0 0.0
    %1029 = vmatpush1.msra.mxu0 0.0
    %1030 = vmatprep.subr.mxu0 0.0
    %1031 = vmatpush1.msra.mxu0 0.0
    %1032 = vmatprep.subr.mxu0 0.0
    %1033 = vmatpush1.msra.mxu0 0.0
    %1034 = vmatprep.mubr.f32.mxu0 0.0
    %1035 = vmatmul.mubr.f32.gmra.mrb[0].mxu0 %v968
    %v1036 = vpop.f32.mrb[0].mxu0
    %v1037 = vadd.f32 %v965, %v1036
    %v1038 = vpop.f32.mrb[0].mxu0
    %v1039 = vadd.f32 %v965, %v1038
    %1040 = vdwg.mxu0
    %1041 = vmatprep.subr.mxu0 0.0
    %1042 = vmatpush1.msra.mxu0 %v43
    %1043 = vmatprep.subr.mxu0 0.0
    %1044 = vmatpush1.msra.mxu0 %v44
    %1045 = vmatprep.subr.mxu0 0.0
    %1046 = vmatpush1.msra.mxu0 %v45
    %1047 = vmatprep.subr.mxu0 0.0
    %1048 = vmatpush1.msra.mxu0 %v46
    %1049 = vmatprep.subr.mxu0 0.0
    %1050 = vmatpush1.msra.mxu0 %v47
    %1051 = vmatprep.subr.mxu0 0.0
    %1052 = vmatpush1.msra.mxu0 %v48
    %1053 = vmatprep.subr.mxu0 0.0
    %1054 = vmatpush1.msra.mxu0 %v49
    %1055 = vmatprep.subr.mxu0 0.0
    %1056 = vmatpush1.msra.mxu0 %v50
    %1057 = vmatprep.subr.mxu0 0.0
    %1058 = vmatpush1.msra.mxu0 %v51
    %1059 = vmatprep.subr.mxu0 0.0
    %1060 = vmatpush1.msra.mxu0 %v52
    %1061 = vmatprep.subr.mxu0 0.0
    %1062 = vmatpush1.msra.mxu0 %v53
    %1063 = vmatprep.subr.mxu0 0.0
    %1064 = vmatpush1.msra.mxu0 %v54
    %1065 = vmatprep.subr.mxu0 0.0
    %1066 = vmatpush1.msra.mxu0 %v55
    %1067 = vmatprep.subr.mxu0 0.0
    %1068 = vmatpush1.msra.mxu0 %v56
    %1069 = vmatprep.subr.mxu0 0.0
    %1070 = vmatpush1.msra.mxu0 %v57
    %1071 = vmatprep.subr.mxu0 0.0
    %1072 = vmatpush1.msra.mxu0 %v58
    %1073 = vmatprep.subr.mxu0 0.0
    %1074 = vmatpush1.msra.mxu0 %v59
    %1075 = vmatprep.subr.mxu0 0.0
    %1076 = vmatpush1.msra.mxu0 %v60
    %1077 = vmatprep.subr.mxu0 0.0
    %1078 = vmatpush1.msra.mxu0 %v61
    %1079 = vmatprep.subr.mxu0 0.0
    %1080 = vmatpush1.msra.mxu0 %v62
    %1081 = vmatprep.subr.mxu0 0.0
    %1082 = vmatpush1.msra.mxu0 %v63
    %1083 = vmatprep.subr.mxu0 0.0
    %1084 = vmatpush1.msra.mxu0 %v64
    %1085 = vmatprep.subr.mxu0 0.0
    %1086 = vmatpush1.msra.mxu0 %v65
    %1087 = vmatprep.subr.mxu0 0.0
    %1088 = vmatpush1.msra.mxu0 %v66
    %1089 = vmatprep.subr.mxu0 0.0
    %1090 = vmatpush1.msra.mxu0 %v67
    %1091 = vmatprep.subr.mxu0 0.0
    %1092 = vmatpush1.msra.mxu0 %v68
    %1093 = vmatprep.subr.mxu0 0.0
    %1094 = vmatpush1.msra.mxu0 %v69
    %1095 = vmatprep.subr.mxu0 0.0
    %1096 = vmatpush1.msra.mxu0 %v70
    %1097 = vmatprep.subr.mxu0 0.0
    %1098 = vmatpush1.msra.mxu0 %v71
    %1099 = vmatprep.subr.mxu0 0.0
    %1100 = vmatpush1.msra.mxu0 %v72
    %1101 = vmatprep.subr.mxu0 0.0
    %1102 = vmatpush1.msra.mxu0 %v73
    %1103 = vmatprep.subr.mxu0 0.0
    %1104 = vmatpush1.msra.mxu0 %v74
    %1105 = vmatprep.mubr.f32.mxu0 %v1039
    %1106 = vmatmul.mubr.f32.gmra.mrb[0].mxu0 %v1037
    %v1107 = vpop.f32.mrb[0].mxu0
    %v1108 = vadd.f32 0.0, %v1107
    %v1109 = vpop.f32.mrb[0].mxu0
    %1110 = vdwg.mxu0
    %1111 = vst [vmem:[#allocation5] sm:$0xff] %v1108
    %s1112 = scalar_lea.vmem %s0, 8
    %v1113 = vld [vmem:[%s1112] sm:$0xff]
    %v1115 = vcombine.high %v1113, %v1113
    %v1116 = vsel %vm87, %v1113, 0
    %v1118 = vsel %vm87, %v1115, 0
    %1120 = vmatprep.subr.mxu0 %v1118
    %1121 = vmatpush1.msra.mxu0 %v1116
    %1122 = vmatprep.subr.mxu0 0.0
    %1123 = vmatpush1.msra.mxu0 0.0
    %1124 = vmatprep.subr.mxu0 0.0
    %1125 = vmatpush1.msra.mxu0 0.0
    %1126 = vmatprep.subr.mxu0 0.0
    %1127 = vmatpush1.msra.mxu0 0.0
    %1128 = vmatprep.subr.mxu0 0.0
    %1129 = vmatpush1.msra.mxu0 0.0
    %1130 = vmatprep.subr.mxu0 0.0
    %1131 = vmatpush1.msra.mxu0 0.0
    %1132 = vmatprep.subr.mxu0 0.0
    %1133 = vmatpush1.msra.mxu0 0.0
    %1134 = vmatprep.subr.mxu0 0.0
    %1135 = vmatpush1.msra.mxu0 0.0
    %1136 = vmatprep.subr.mxu0 0.0
    %1137 = vmatpush1.msra.mxu0 0.0
    %1138 = vmatprep.subr.mxu0 0.0
    %1139 = vmatpush1.msra.mxu0 0.0
    %1140 = vmatprep.subr.mxu0 0.0
    %1141 = vmatpush1.msra.mxu0 0.0
    %1142 = vmatprep.subr.mxu0 0.0
    %1143 = vmatpush1.msra.mxu0 0.0
    %1144 = vmatprep.subr.mxu0 0.0
    %1145 = vmatpush1.msra.mxu0 0.0
    %1146 = vmatprep.subr.mxu0 0.0
    %1147 = vmatpush1.msra.mxu0 0.0
    %1148 = vmatprep.subr.mxu0 0.0
    %1149 = vmatpush1.msra.mxu0 0.0
    %1150 = vmatprep.subr.mxu0 0.0
    %1151 = vmatpush1.msra.mxu0 0.0
    %1152 = vmatprep.subr.mxu0 0.0
    %1153 = vmatpush1.msra.mxu0 0.0
    %1154 = vmatprep.subr.mxu0 0.0
    %1155 = vmatpush1.msra.mxu0 0.0
    %1156 = vmatprep.subr.mxu0 0.0
    %1157 = vmatpush1.msra.mxu0 0.0
    %1158 = vmatprep.subr.mxu0 0.0
    %1159 = vmatpush1.msra.mxu0 0.0
    %1160 = vmatprep.subr.mxu0 0.0
    %1161 = vmatpush1.msra.mxu0 0.0
    %1162 = vmatprep.subr.mxu0 0.0
    %1163 = vmatpush1.msra.mxu0 0.0
    %1164 = vmatprep.subr.mxu0 0.0
    %1165 = vmatpush1.msra.mxu0 0.0
    %1166 = vmatprep.subr.mxu0 0.0
    %1167 = vmatpush1.msra.mxu0 0.0
    %1168 = vmatprep.subr.mxu0 0.0
    %1169 = vmatpush1.msra.mxu0 0.0
    %1170 = vmatprep.subr.mxu0 0.0
    %1171 = vmatpush1.msra.mxu0 0.0
    %1172 = vmatprep.subr.mxu0 0.0
    %1173 = vmatpush1.msra.mxu0 0.0
    %1174 = vmatprep.subr.mxu0 0.0
    %1175 = vmatpush1.msra.mxu0 0.0
    %1176 = vmatprep.subr.mxu0 0.0
    %1177 = vmatpush1.msra.mxu0 0.0
    %1178 = vmatprep.subr.mxu0 0.0
    %1179 = vmatpush1.msra.mxu0 0.0
    %1180 = vmatprep.subr.mxu0 0.0
    %1181 = vmatpush1.msra.mxu0 0.0
    %1182 = vmatprep.subr.mxu0 0.0
    %1183 = vmatpush1.msra.mxu0 0.0
    %1184 = vmatprep.mubr.f32.mxu0 0.0
    %1185 = vmatmul.mubr.f32.gmra.mrb[0].mxu0 %v85
    %v1186 = vpop.f32.mrb[0].mxu0
    %v1187 = vadd.f32 %v79, %v1186
    %v1188 = vpop.f32.mrb[0].mxu0
    %v1189 = vadd.f32 %v79, %v1188
    %1190 = vdwg.mxu0
    %v1191 = vld [vmem:[%s3] sm:$0xff]
    %v1192 = vld [vmem:[%s4] sm:$0xff]
    %v1193 = vld [vmem:[%s165] sm:$0xff]
    %v1194 = vld [vmem:[%s167] sm:$0xff]
    %1195 = vrot.lane.b32.xlu0 %v1187, 17
    %v1196 = vpop.permute.xlu0 %1195
    %1197 = vrot.lane.b32.xlu0 %v1189, 17
    %v1198 = vpop.permute.xlu0 %1197
    %v1199 = vsel %vm175, %v1196, %v1198
    %v1200 = vsel %vm175, %v1198, %v1196
    %v1201 = vld [vmem:[%s5] sm:$0x3]
    %v1203 = vlaneseq
    %v1204 = vshrl.u32 %v1203, 7
    %v1205 = vsub.s32 0, %v1204
    %v1206 = vrot.slane %v1201, %v1205
    %v1207 = vlaneseq
    %v1208 = vshrl.u32 %v1207, 7
    %v1209 = vsub.s32 1, %v1208
    %v1210 = vrot.slane %v1201, %v1209
    %v1213 = vmul.f32 %v1200, %v1206
    %v1214 = vmul.f32 %v1199, %v1210
    %1215 = vrot.lane.b32.xlu0 %v1187, 16
    %v1216 = vpop.permute.xlu0 %1215
    %1217 = vrot.lane.b32.xlu0 %v1189, 16
    %v1218 = vpop.permute.xlu0 %1217
    %v1219 = vsel %vm196, %v1216, %v1218
    %v1220 = vsel %vm196, %v1218, %v1216
    %v1221 = vld [vmem:[%s199] sm:$0x3]
    %v1223 = vlaneseq
    %v1224 = vshrl.u32 %v1223, 7
    %v1225 = vsub.s32 0, %v1224
    %v1226 = vrot.slane %v1221, %v1225
    %v1227 = vlaneseq
    %v1228 = vshrl.u32 %v1227, 7
    %v1229 = vsub.s32 1, %v1228
    %v1230 = vrot.slane %v1221, %v1229
    %v1233 = vmul.f32 %v1220, %v1226
    %v1234 = vmul.f32 %v1219, %v1230
    %1235 = vrot.lane.b32.xlu0 %v1187, 15
    %v1236 = vpop.permute.xlu0 %1235
    %1237 = vrot.lane.b32.xlu0 %v1189, 15
    %v1238 = vpop.permute.xlu0 %1237
    %v1239 = vsel %vm218, %v1236, %v1238
    %v1240 = vsel %vm218, %v1238, %v1236
    %v1241 = vld [vmem:[%s221] sm:$0x3]
    %v1243 = vlaneseq
    %v1244 = vshrl.u32 %v1243, 7
    %v1245 = vsub.s32 0, %v1244
    %v1246 = vrot.slane %v1241, %v1245
    %v1247 = vlaneseq
    %v1248 = vshrl.u32 %v1247, 7
    %v1249 = vsub.s32 1, %v1248
    %v1250 = vrot.slane %v1241, %v1249
    %v1253 = vmul.f32 %v1240, %v1246
    %v1254 = vmul.f32 %v1239, %v1250
    %1255 = vrot.lane.b32.xlu0 %v1187, 1
    %v1256 = vpop.permute.xlu0 %1255
    %1257 = vrot.lane.b32.xlu0 %v1189, 1
    %v1258 = vpop.permute.xlu0 %1257
    %v1259 = vsel %vm240, %v1256, %v1258
    %v1260 = vsel %vm240, %v1258, %v1256
    %v1261 = vld [vmem:[%s243] sm:$0x3]
    %v1263 = vlaneseq
    %v1264 = vshrl.u32 %v1263, 7
    %v1265 = vsub.s32 0, %v1264
    %v1266 = vrot.slane %v1261, %v1265
    %v1267 = vlaneseq
    %v1268 = vshrl.u32 %v1267, 7
    %v1269 = vsub.s32 1, %v1268
    %v1270 = vrot.slane %v1261, %v1269
    %v1273 = vmul.f32 %v1260, %v1266
    %v1274 = vmul.f32 %v1259, %v1270
    %v1275 = vld [vmem:[%s258] sm:$0x3]
    %v1277 = vlaneseq
    %v1278 = vshrl.u32 %v1277, 7
    %v1279 = vsub.s32 0, %v1278
    %v1280 = vrot.slane %v1275, %v1279
    %v1281 = vlaneseq
    %v1282 = vshrl.u32 %v1281, 7
    %v1283 = vsub.s32 1, %v1282
    %v1284 = vrot.slane %v1275, %v1283
    %v1287 = vmul.f32 %v1187, %v1280
    %v1288 = vmul.f32 %v1189, %v1284
    %1289 = vrot.lane.b32.xlu0 %v1187, 127
    %v1290 = vpop.permute.xlu0 %1289
    %1291 = vrot.lane.b32.xlu0 %v1189, 127
    %v1292 = vpop.permute.xlu0 %1291
    %v1293 = vsel %vm277, %v1290, %v1292
    %v1294 = vsel %vm277, %v1292, %v1290
    %v1295 = vld [vmem:[%s280] sm:$0x3]
    %v1297 = vlaneseq
    %v1298 = vshrl.u32 %v1297, 7
    %v1299 = vsub.s32 0, %v1298
    %v1300 = vrot.slane %v1295, %v1299
    %v1301 = vlaneseq
    %v1302 = vshrl.u32 %v1301, 7
    %v1303 = vsub.s32 1, %v1302
    %v1304 = vrot.slane %v1295, %v1303
    %v1307 = vmul.f32 %v1293, %v1300
    %v1308 = vmul.f32 %v1294, %v1304
    %1309 = vrot.lane.b32.xlu0 %v1187, 113
    %v1310 = vpop.permute.xlu0 %1309
    %1311 = vrot.lane.b32.xlu0 %v1189, 113
    %v1312 = vpop.permute.xlu0 %1311
    %v1313 = vsel %vm299, %v1310, %v1312
    %v1314 = vsel %vm299, %v1312, %v1310
    %v1315 = vld [vmem:[%s302] sm:$0x3]
    %v1317 = vlaneseq
    %v1318 = vshrl.u32 %v1317, 7
    %v1319 = vsub.s32 0, %v1318
    %v1320 = vrot.slane %v1315, %v1319
    %v1321 = vlaneseq
    %v1322 = vshrl.u32 %v1321, 7
    %v1323 = vsub.s32 1, %v1322
    %v1324 = vrot.slane %v1315, %v1323
    %v1327 = vmul.f32 %v1313, %v1320
    %v1328 = vmul.f32 %v1314, %v1324
    %1329 = vrot.lane.b32.xlu0 %v1187, 112
    %v1330 = vpop.permute.xlu0 %1329
    %1331 = vrot.lane.b32.xlu0 %v1189, 112
    %v1332 = vpop.permute.xlu0 %1331
    %v1333 = vsel %vm321, %v1330, %v1332
    %v1334 = vsel %vm321, %v1332, %v1330
    %v1335 = vld [vmem:[%s324] sm:$0x3]
    %v1337 = vlaneseq
    %v1338 = vshrl.u32 %v1337, 7
    %v1339 = vsub.s32 0, %v1338
    %v1340 = vrot.slane %v1335, %v1339
    %v1341 = vlaneseq
    %v1342 = vshrl.u32 %v1341, 7
    %v1343 = vsub.s32 1, %v1342
    %v1344 = vrot.slane %v1335, %v1343
    %v1347 = vmul.f32 %v1333, %v1340
    %v1348 = vmul.f32 %v1334, %v1344
    %1349 = vrot.lane.b32.xlu0 %v1187, 111
    %v1350 = vpop.permute.xlu0 %1349
    %1351 = vrot.lane.b32.xlu0 %v1189, 111
    %v1352 = vpop.permute.xlu0 %1351
    %v1353 = vsel %vm343, %v1350, %v1352
    %v1354 = vsel %vm343, %v1352, %v1350
    %v1355 = vld [vmem:[%s346] sm:$0x3]
    %v1357 = vlaneseq
    %v1358 = vshrl.u32 %v1357, 7
    %v1359 = vsub.s32 0, %v1358
    %v1360 = vrot.slane %v1355, %v1359
    %v1361 = vlaneseq
    %v1362 = vshrl.u32 %v1361, 7
    %v1363 = vsub.s32 1, %v1362
    %v1364 = vrot.slane %v1355, %v1363
    %v1367 = vmul.f32 %v1353, %v1360
    %v1368 = vmul.f32 %v1354, %v1364
    %1370 = vset.pattern.permute.xlu0 0
    %1371 = vperm.xlu0 %1370, %v1192
    %v1372 = vpop.permute.xlu0 %1371
    %v1375 = vsel %vm366, %v1191, 0
    %1377 = vmatprep.subr.mxu0 %v1214
    %1378 = vmatpush1.msra.mxu0 %v1213
    %1379 = vmatprep.subr.mxu0 %v1234
    %1380 = vmatpush1.msra.mxu0 %v1233
    %1381 = vmatprep.subr.mxu0 %v1254
    %1382 = vmatpush1.msra.mxu0 %v1253
    %1383 = vmatprep.subr.mxu0 %v1274
    %1384 = vmatpush1.msra.mxu0 %v1273
    %1385 = vmatprep.subr.mxu0 %v1288
    %1386 = vmatpush1.msra.mxu0 %v1287
    %1387 = vmatprep.subr.mxu0 %v1308
    %1388 = vmatpush1.msra.mxu0 %v1307
    %1389 = vmatprep.subr.mxu0 %v1328
    %1390 = vmatpush1.msra.mxu0 %v1327
    %1391 = vmatprep.subr.mxu0 %v1348
    %1392 = vmatpush1.msra.mxu0 %v1347
    %1393 = vmatprep.subr.mxu0 %v1368
    %1394 = vmatpush1.msra.mxu0 %v1367
    %1395 = vmatprep.subr.mxu0 0.0
    %1396 = vmatpush1.msra.mxu0 0.0
    %1397 = vmatprep.subr.mxu0 0.0
    %1398 = vmatpush1.msra.mxu0 0.0
    %1399 = vmatprep.subr.mxu0 0.0
    %1400 = vmatpush1.msra.mxu0 0.0
    %1401 = vmatprep.subr.mxu0 0.0
    %1402 = vmatpush1.msra.mxu0 0.0
    %1403 = vmatprep.subr.mxu0 0.0
    %1404 = vmatpush1.msra.mxu0 0.0
    %1405 = vmatprep.subr.mxu0 0.0
    %1406 = vmatpush1.msra.mxu0 0.0
    %1407 = vmatprep.subr.mxu0 0.0
    %1408 = vmatpush1.msra.mxu0 0.0
    %1409 = vmatprep.subr.mxu0 0.0
    %1410 = vmatpush1.msra.mxu0 0.0
    %1411 = vmatprep.subr.mxu0 0.0
    %1412 = vmatpush1.msra.mxu0 0.0
    %1413 = vmatprep.subr.mxu0 0.0
    %1414 = vmatpush1.msra.mxu0 0.0
    %1415 = vmatprep.subr.mxu0 0.0
    %1416 = vmatpush1.msra.mxu0 0.0
    %1417 = vmatprep.subr.mxu0 0.0
    %1418 = vmatpush1.msra.mxu0 0.0
    %1419 = vmatprep.subr.mxu0 0.0
    %1420 = vmatpush1.msra.mxu0 0.0
    %1421 = vmatprep.subr.mxu0 0.0
    %1422 = vmatpush1.msra.mxu0 0.0
    %1423 = vmatprep.subr.mxu0 0.0
    %1424 = vmatpush1.msra.mxu0 0.0
    %1425 = vmatprep.subr.mxu0 0.0
    %1426 = vmatpush1.msra.mxu0 0.0
    %1427 = vmatprep.subr.mxu0 0.0
    %1428 = vmatpush1.msra.mxu0 0.0
    %1429 = vmatprep.subr.mxu0 0.0
    %1430 = vmatpush1.msra.mxu0 0.0
    %1431 = vmatprep.subr.mxu0 0.0
    %1432 = vmatpush1.msra.mxu0 0.0
    %1433 = vmatprep.subr.mxu0 0.0
    %1434 = vmatpush1.msra.mxu0 0.0
    %1435 = vmatprep.subr.mxu0 0.0
    %1436 = vmatpush1.msra.mxu0 0.0
    %1437 = vmatprep.subr.mxu0 0.0
    %1438 = vmatpush1.msra.mxu0 0.0
    %1439 = vmatprep.subr.mxu0 0.0
    %1440 = vmatpush1.msra.mxu0 0.0
    %1441 = vmatprep.mubr.f32.mxu0 0.0
    %1442 = vmatmul.mubr.f32.gmra.mrb[0].mxu0 %v1375
    %v1443 = vpop.f32.mrb[0].mxu0
    %v1444 = vadd.f32 %v1372, %v1443
    %v1445 = vpop.f32.mrb[0].mxu0
    %v1446 = vadd.f32 %v1372, %v1445
    %1447 = vdwg.mxu0
    %v1448 = vmax.f32 %v1444, 0.0
    %v1449 = vmax.f32 %v1446, 0.0
    %1450 = vrot.lane.b32.xlu0 %v1448, 17
    %v1451 = vpop.permute.xlu0 %1450
    %1452 = vrot.lane.b32.xlu0 %v1449, 17
    %v1453 = vpop.permute.xlu0 %1452
    %v1454 = vsel %vm175, %v1451, %v1453
    %v1455 = vsel %vm175, %v1453, %v1451
    %v1456 = vmul.f32 %v1455, %v1206
    %v1457 = vmul.f32 %v1454, %v1210
    %1458 = vrot.lane.b32.xlu0 %v1448, 16
    %v1459 = vpop.permute.xlu0 %1458
    %1460 = vrot.lane.b32.xlu0 %v1449, 16
    %v1461 = vpop.permute.xlu0 %1460
    %v1462 = vsel %vm196, %v1459, %v1461
    %v1463 = vsel %vm196, %v1461, %v1459
    %v1464 = vmul.f32 %v1463, %v1226
    %v1465 = vmul.f32 %v1462, %v1230
    %1466 = vrot.lane.b32.xlu0 %v1448, 15
    %v1467 = vpop.permute.xlu0 %1466
    %1468 = vrot.lane.b32.xlu0 %v1449, 15
    %v1469 = vpop.permute.xlu0 %1468
    %v1470 = vsel %vm218, %v1467, %v1469
    %v1471 = vsel %vm218, %v1469, %v1467
    %v1472 = vmul.f32 %v1471, %v1246
    %v1473 = vmul.f32 %v1470, %v1250
    %1474 = vrot.lane.b32.xlu0 %v1448, 1
    %v1475 = vpop.permute.xlu0 %1474
    %1476 = vrot.lane.b32.xlu0 %v1449, 1
    %v1477 = vpop.permute.xlu0 %1476
    %v1478 = vsel %vm240, %v1475, %v1477
    %v1479 = vsel %vm240, %v1477, %v1475
    %v1480 = vmul.f32 %v1479, %v1266
    %v1481 = vmul.f32 %v1478, %v1270
    %v1482 = vmul.f32 %v1448, %v1280
    %v1483 = vmul.f32 %v1449, %v1284
    %1484 = vrot.lane.b32.xlu0 %v1448, 127
    %v1485 = vpop.permute.xlu0 %1484
    %1486 = vrot.lane.b32.xlu0 %v1449, 127
    %v1487 = vpop.permute.xlu0 %1486
    %v1488 = vsel %vm277, %v1485, %v1487
    %v1489 = vsel %vm277, %v1487, %v1485
    %v1490 = vmul.f32 %v1488, %v1300
    %v1491 = vmul.f32 %v1489, %v1304
    %1492 = vrot.lane.b32.xlu0 %v1448, 113
    %v1493 = vpop.permute.xlu0 %1492
    %1494 = vrot.lane.b32.xlu0 %v1449, 113
    %v1495 = vpop.permute.xlu0 %1494
    %v1496 = vsel %vm299, %v1493, %v1495
    %v1497 = vsel %vm299, %v1495, %v1493
    %v1498 = vmul.f32 %v1496, %v1320
    %v1499 = vmul.f32 %v1497, %v1324
    %1500 = vrot.lane.b32.xlu0 %v1448, 112
    %v1501 = vpop.permute.xlu0 %1500
    %1502 = vrot.lane.b32.xlu0 %v1449, 112
    %v1503 = vpop.permute.xlu0 %1502
    %v1504 = vsel %vm321, %v1501, %v1503
    %v1505 = vsel %vm321, %v1503, %v1501
    %v1506 = vmul.f32 %v1504, %v1340
    %v1507 = vmul.f32 %v1505, %v1344
    %1508 = vrot.lane.b32.xlu0 %v1448, 111
    %v1509 = vpop.permute.xlu0 %1508
    %1510 = vrot.lane.b32.xlu0 %v1449, 111
    %v1511 = vpop.permute.xlu0 %1510
    %v1512 = vsel %vm343, %v1509, %v1511
    %v1513 = vsel %vm343, %v1511, %v1509
    %v1514 = vmul.f32 %v1512, %v1360
    %v1515 = vmul.f32 %v1513, %v1364
    %1517 = vset.pattern.permute.xlu0 0
    %1518 = vperm.xlu0 %1517, %v1194
    %v1519 = vpop.permute.xlu0 %1518
    %v1522 = vsel %vm366, %v1193, 0
    %1524 = vmatprep.subr.mxu0 %v1457
    %1525 = vmatpush1.msra.mxu0 %v1456
    %1526 = vmatprep.subr.mxu0 %v1465
    %1527 = vmatpush1.msra.mxu0 %v1464
    %1528 = vmatprep.subr.mxu0 %v1473
    %1529 = vmatpush1.msra.mxu0 %v1472
    %1530 = vmatprep.subr.mxu0 %v1481
    %1531 = vmatpush1.msra.mxu0 %v1480
    %1532 = vmatprep.subr.mxu0 %v1483
    %1533 = vmatpush1.msra.mxu0 %v1482
    %1534 = vmatprep.subr.mxu0 %v1491
    %1535 = vmatpush1.msra.mxu0 %v1490
    %1536 = vmatprep.subr.mxu0 %v1499
    %1537 = vmatpush1.msra.mxu0 %v1498
    %1538 = vmatprep.subr.mxu0 %v1507
    %1539 = vmatpush1.msra.mxu0 %v1506
    %1540 = vmatprep.subr.mxu0 %v1515
    %1541 = vmatpush1.msra.mxu0 %v1514
    %1542 = vmatprep.subr.mxu0 0.0
    %1543 = vmatpush1.msra.mxu0 0.0
    %1544 = vmatprep.subr.mxu0 0.0
    %1545 = vmatpush1.msra.mxu0 0.0
    %1546 = vmatprep.subr.mxu0 0.0
    %1547 = vmatpush1.msra.mxu0 0.0
    %1548 = vmatprep.subr.mxu0 0.0
    %1549 = vmatpush1.msra.mxu0 0.0
    %1550 = vmatprep.subr.mxu0 0.0
    %1551 = vmatpush1.msra.mxu0 0.0
    %1552 = vmatprep.subr.mxu0 0.0
    %1553 = vmatpush1.msra.mxu0 0.0
    %1554 = vmatprep.subr.mxu0 0.0
    %1555 = vmatpush1.msra.mxu0 0.0
    %1556 = vmatprep.subr.mxu0 0.0
    %1557 = vmatpush1.msra.mxu0 0.0
    %1558 = vmatprep.subr.mxu0 0.0
    %1559 = vmatpush1.msra.mxu0 0.0
    %1560 = vmatprep.subr.mxu0 0.0
    %1561 = vmatpush1.msra.mxu0 0.0
    %1562 = vmatprep.subr.mxu0 0.0
    %1563 = vmatpush1.msra.mxu0 0.0
    %1564 = vmatprep.subr.mxu0 0.0
    %1565 = vmatpush1.msra.mxu0 0.0
    %1566 = vmatprep.subr.mxu0 0.0
    %1567 = vmatpush1.msra.mxu0 0.0
    %1568 = vmatprep.subr.mxu0 0.0
    %1569 = vmatpush1.msra.mxu0 0.0
    %1570 = vmatprep.subr.mxu0 0.0
    %1571 = vmatpush1.msra.mxu0 0.0
    %1572 = vmatprep.subr.mxu0 0.0
    %1573 = vmatpush1.msra.mxu0 0.0
    %1574 = vmatprep.subr.mxu0 0.0
    %1575 = vmatpush1.msra.mxu0 0.0
    %1576 = vmatprep.subr.mxu0 0.0
    %1577 = vmatpush1.msra.mxu0 0.0
    %1578 = vmatprep.subr.mxu0 0.0
    %1579 = vmatpush1.msra.mxu0 0.0
    %1580 = vmatprep.subr.mxu0 0.0
    %1581 = vmatpush1.msra.mxu0 0.0
    %1582 = vmatprep.subr.mxu0 0.0
    %1583 = vmatpush1.msra.mxu0 0.0
    %1584 = vmatprep.subr.mxu0 0.0
    %1585 = vmatpush1.msra.mxu0 0.0
    %1586 = vmatprep.subr.mxu0 0.0
    %1587 = vmatpush1.msra.mxu0 0.0
    %1588 = vmatprep.mubr.f32.mxu0 0.0
    %1589 = vmatmul.mubr.f32.gmra.mrb[0].mxu0 %v1522
    %v1590 = vpop.f32.mrb[0].mxu0
    %v1591 = vadd.f32 %v1519, %v1590
    %v1592 = vpop.f32.mrb[0].mxu0
    %v1593 = vadd.f32 %v1519, %v1592
    %1594 = vdwg.mxu0
    %v1595 = vadd.f32 %v1591, %v1187
    %v1596 = vadd.f32 %v1593, %v1189
    %v1597 = vld [vmem:[%s590] sm:$0xff]
    %v1598 = vld [vmem:[%s592] sm:$0xff]
    %v1599 = vld [vmem:[%s594] sm:$0xff]
    %v1600 = vld [vmem:[%s596] sm:$0xff]
    %1601 = vrot.lane.b32.xlu0 %v1595, 17
    %v1602 = vpop.permute.xlu0 %1601
    %1603 = vrot.lane.b32.xlu0 %v1596, 17
    %v1604 = vpop.permute.xlu0 %1603
    %v1605 = vsel %vm175, %v1602, %v1604
    %v1606 = vsel %vm175, %v1604, %v1602
    %v1607 = vmul.f32 %v1606, %v1206
    %v1608 = vmul.f32 %v1605, %v1210
    %1609 = vrot.lane.b32.xlu0 %v1595, 16
    %v1610 = vpop.permute.xlu0 %1609
    %1611 = vrot.lane.b32.xlu0 %v1596, 16
    %v1612 = vpop.permute.xlu0 %1611
    %v1613 = vsel %vm196, %v1610, %v1612
    %v1614 = vsel %vm196, %v1612, %v1610
    %v1615 = vmul.f32 %v1614, %v1226
    %v1616 = vmul.f32 %v1613, %v1230
    %1617 = vrot.lane.b32.xlu0 %v1595, 15
    %v1618 = vpop.permute.xlu0 %1617
    %1619 = vrot.lane.b32.xlu0 %v1596, 15
    %v1620 = vpop.permute.xlu0 %1619
    %v1621 = vsel %vm218, %v1618, %v1620
    %v1622 = vsel %vm218, %v1620, %v1618
    %v1623 = vmul.f32 %v1622, %v1246
    %v1624 = vmul.f32 %v1621, %v1250
    %1625 = vrot.lane.b32.xlu0 %v1595, 1
    %v1626 = vpop.permute.xlu0 %1625
    %1627 = vrot.lane.b32.xlu0 %v1596, 1
    %v1628 = vpop.permute.xlu0 %1627
    %v1629 = vsel %vm240, %v1626, %v1628
    %v1630 = vsel %vm240, %v1628, %v1626
    %v1631 = vmul.f32 %v1630, %v1266
    %v1632 = vmul.f32 %v1629, %v1270
    %v1633 = vmul.f32 %v1595, %v1280
    %v1634 = vmul.f32 %v1596, %v1284
    %1635 = vrot.lane.b32.xlu0 %v1595, 127
    %v1636 = vpop.permute.xlu0 %1635
    %1637 = vrot.lane.b32.xlu0 %v1596, 127
    %v1638 = vpop.permute.xlu0 %1637
    %v1639 = vsel %vm277, %v1636, %v1638
    %v1640 = vsel %vm277, %v1638, %v1636
    %v1641 = vmul.f32 %v1639, %v1300
    %v1642 = vmul.f32 %v1640, %v1304
    %1643 = vrot.lane.b32.xlu0 %v1595, 113
    %v1644 = vpop.permute.xlu0 %1643
    %1645 = vrot.lane.b32.xlu0 %v1596, 113
    %v1646 = vpop.permute.xlu0 %1645
    %v1647 = vsel %vm299, %v1644, %v1646
    %v1648 = vsel %vm299, %v1646, %v1644
    %v1649 = vmul.f32 %v1647, %v1320
    %v1650 = vmul.f32 %v1648, %v1324
    %1651 = vrot.lane.b32.xlu0 %v1595, 112
    %v1652 = vpop.permute.xlu0 %1651
    %1653 = vrot.lane.b32.xlu0 %v1596, 112
    %v1654 = vpop.permute.xlu0 %1653
    %v1655 = vsel %vm321, %v1652, %v1654
    %v1656 = vsel %vm321, %v1654, %v1652
    %v1657 = vmul.f32 %v1655, %v1340
    %v1658 = vmul.f32 %v1656, %v1344
    %1659 = vrot.lane.b32.xlu0 %v1595, 111
    %v1660 = vpop.permute.xlu0 %1659
    %1661 = vrot.lane.b32.xlu0 %v1596, 111
    %v1662 = vpop.permute.xlu0 %1661
    %v1663 = vsel %vm343, %v1660, %v1662
    %v1664 = vsel %vm343, %v1662, %v1660
    %v1665 = vmul.f32 %v1663, %v1360
    %v1666 = vmul.f32 %v1664, %v1364
    %1668 = vset.pattern.permute.xlu0 0
    %1669 = vperm.xlu0 %1668, %v1598
    %v1670 = vpop.permute.xlu0 %1669
    %v1673 = vsel %vm366, %v1597, 0
    %1675 = vmatprep.subr.mxu0 %v1608
    %1676 = vmatpush1.msra.mxu0 %v1607
    %1677 = vmatprep.subr.mxu0 %v1616
    %1678 = vmatpush1.msra.mxu0 %v1615
    %1679 = vmatprep.subr.mxu0 %v1624
    %1680 = vmatpush1.msra.mxu0 %v1623
    %1681 = vmatprep.subr.mxu0 %v1632
    %1682 = vmatpush1.msra.mxu0 %v1631
    %1683 = vmatprep.subr.mxu0 %v1634
    %1684 = vmatpush1.msra.mxu0 %v1633
    %1685 = vmatprep.subr.mxu0 %v1642
    %1686 = vmatpush1.msra.mxu0 %v1641
    %1687 = vmatprep.subr.mxu0 %v1650
    %1688 = vmatpush1.msra.mxu0 %v1649
    %1689 = vmatprep.subr.mxu0 %v1658
    %1690 = vmatpush1.msra.mxu0 %v1657
    %1691 = vmatprep.subr.mxu0 %v1666
    %1692 = vmatpush1.msra.mxu0 %v1665
    %1693 = vmatprep.subr.mxu0 0.0
    %1694 = vmatpush1.msra.mxu0 0.0
    %1695 = vmatprep.subr.mxu0 0.0
    %1696 = vmatpush1.msra.mxu0 0.0
    %1697 = vmatprep.subr.mxu0 0.0
    %1698 = vmatpush1.msra.mxu0 0.0
    %1699 = vmatprep.subr.mxu0 0.0
    %1700 = vmatpush1.msra.mxu0 0.0
    %1701 = vmatprep.subr.mxu0 0.0
    %1702 = vmatpush1.msra.mxu0 0.0
    %1703 = vmatprep.subr.mxu0 0.0
    %1704 = vmatpush1.msra.mxu0 0.0
    %1705 = vmatprep.subr.mxu0 0.0
    %1706 = vmatpush1.msra.mxu0 0.0
    %1707 = vmatprep.subr.mxu0 0.0
    %1708 = vmatpush1.msra.mxu0 0.0
    %1709 = vmatprep.subr.mxu0 0.0
    %1710 = vmatpush1.msra.mxu0 0.0
    %1711 = vmatprep.subr.mxu0 0.0
    %1712 = vmatpush1.msra.mxu0 0.0
    %1713 = vmatprep.subr.mxu0 0.0
    %1714 = vmatpush1.msra.mxu0 0.0
    %1715 = vmatprep.subr.mxu0 0.0
    %1716 = vmatpush1.msra.mxu0 0.0
    %1717 = vmatprep.subr.mxu0 0.0
    %1718 = vmatpush1.msra.mxu0 0.0
    %1719 = vmatprep.subr.mxu0 0.0
    %1720 = vmatpush1.msra.mxu0 0.0
    %1721 = vmatprep.subr.mxu0 0.0
    %1722 = vmatpush1.msra.mxu0 0.0
    %1723 = vmatprep.subr.mxu0 0.0
    %1724 = vmatpush1.msra.mxu0 0.0
    %1725 = vmatprep.subr.mxu0 0.0
    %1726 = vmatpush1.msra.mxu0 0.0
    %1727 = vmatprep.subr.mxu0 0.0
    %1728 = vmatpush1.msra.mxu0 0.0
    %1729 = vmatprep.subr.mxu0 0.0
    %1730 = vmatpush1.msra.mxu0 0.0
    %1731 = vmatprep.subr.mxu0 0.0
    %1732 = vmatpush1.msra.mxu0 0.0
    %1733 = vmatprep.subr.mxu0 0.0
    %1734 = vmatpush1.msra.mxu0 0.0
    %1735 = vmatprep.subr.mxu0 0.0
    %1736 = vmatpush1.msra.mxu0 0.0
    %1737 = vmatprep.subr.mxu0 0.0
    %1738 = vmatpush1.msra.mxu0 0.0
    %1739 = vmatprep.mubr.f32.mxu0 0.0
    %1740 = vmatmul.mubr.f32.gmra.mrb[0].mxu0 %v1673
    %v1741 = vpop.f32.mrb[0].mxu0
    %v1742 = vadd.f32 %v1670, %v1741
    %v1743 = vpop.f32.mrb[0].mxu0
    %v1744 = vadd.f32 %v1670, %v1743
    %1745 = vdwg.mxu0
    %v1746 = vmax.f32 %v1742, 0.0
    %v1747 = vmax.f32 %v1744, 0.0
    %1748 = vrot.lane.b32.xlu0 %v1746, 17
    %v1749 = vpop.permute.xlu0 %1748
    %1750 = vrot.lane.b32.xlu0 %v1747, 17
    %v1751 = vpop.permute.xlu0 %1750
    %v1752 = vsel %vm175, %v1749, %v1751
    %v1753 = vsel %vm175, %v1751, %v1749
    %v1754 = vmul.f32 %v1753, %v1206
    %v1755 = vmul.f32 %v1752, %v1210
    %1756 = vrot.lane.b32.xlu0 %v1746, 16
    %v1757 = vpop.permute.xlu0 %1756
    %1758 = vrot.lane.b32.xlu0 %v1747, 16
    %v1759 = vpop.permute.xlu0 %1758
    %v1760 = vsel %vm196, %v1757, %v1759
    %v1761 = vsel %vm196, %v1759, %v1757
    %v1762 = vmul.f32 %v1761, %v1226
    %v1763 = vmul.f32 %v1760, %v1230
    %1764 = vrot.lane.b32.xlu0 %v1746, 15
    %v1765 = vpop.permute.xlu0 %1764
    %1766 = vrot.lane.b32.xlu0 %v1747, 15
    %v1767 = vpop.permute.xlu0 %1766
    %v1768 = vsel %vm218, %v1765, %v1767
    %v1769 = vsel %vm218, %v1767, %v1765
    %v1770 = vmul.f32 %v1769, %v1246
    %v1771 = vmul.f32 %v1768, %v1250
    %1772 = vrot.lane.b32.xlu0 %v1746, 1
    %v1773 = vpop.permute.xlu0 %1772
    %1774 = vrot.lane.b32.xlu0 %v1747, 1
    %v1775 = vpop.permute.xlu0 %1774
    %v1776 = vsel %vm240, %v1773, %v1775
    %v1777 = vsel %vm240, %v1775, %v1773
    %v1778 = vmul.f32 %v1777, %v1266
    %v1779 = vmul.f32 %v1776, %v1270
    %v1780 = vmul.f32 %v1746, %v1280
    %v1781 = vmul.f32 %v1747, %v1284
    %1782 = vrot.lane.b32.xlu0 %v1746, 127
    %v1783 = vpop.permute.xlu0 %1782
    %1784 = vrot.lane.b32.xlu0 %v1747, 127
    %v1785 = vpop.permute.xlu0 %1784
    %v1786 = vsel %vm277, %v1783, %v1785
    %v1787 = vsel %vm277, %v1785, %v1783
    %v1788 = vmul.f32 %v1786, %v1300
    %v1789 = vmul.f32 %v1787, %v1304
    %1790 = vrot.lane.b32.xlu0 %v1746, 113
    %v1791 = vpop.permute.xlu0 %1790
    %1792 = vrot.lane.b32.xlu0 %v1747, 113
    %v1793 = vpop.permute.xlu0 %1792
    %v1794 = vsel %vm299, %v1791, %v1793
    %v1795 = vsel %vm299, %v1793, %v1791
    %v1796 = vmul.f32 %v1794, %v1320
    %v1797 = vmul.f32 %v1795, %v1324
    %1798 = vrot.lane.b32.xlu0 %v1746, 112
    %v1799 = vpop.permute.xlu0 %1798
    %1800 = vrot.lane.b32.xlu0 %v1747, 112
    %v1801 = vpop.permute.xlu0 %1800
    %v1802 = vsel %vm321, %v1799, %v1801
    %v1803 = vsel %vm321, %v1801, %v1799
    %v1804 = vmul.f32 %v1802, %v1340
    %v1805 = vmul.f32 %v1803, %v1344
    %1806 = vrot.lane.b32.xlu0 %v1746, 111
    %v1807 = vpop.permute.xlu0 %1806
    %1808 = vrot.lane.b32.xlu0 %v1747, 111
    %v1809 = vpop.permute.xlu0 %1808
    %v1810 = vsel %vm343, %v1807, %v1809
    %v1811 = vsel %vm343, %v1809, %v1807
    %v1812 = vmul.f32 %v1810, %v1360
    %v1813 = vmul.f32 %v1811, %v1364
    %1815 = vset.pattern.permute.xlu0 0
    %1816 = vperm.xlu0 %1815, %v1600
    %v1817 = vpop.permute.xlu0 %1816
    %v1820 = vsel %vm366, %v1599, 0
    %1822 = vmatprep.subr.mxu0 %v1755
    %1823 = vmatpush1.msra.mxu0 %v1754
    %1824 = vmatprep.subr.mxu0 %v1763
    %1825 = vmatpush1.msra.mxu0 %v1762
    %1826 = vmatprep.subr.mxu0 %v1771
    %1827 = vmatpush1.msra.mxu0 %v1770
    %1828 = vmatprep.subr.mxu0 %v1779
    %1829 = vmatpush1.msra.mxu0 %v1778
    %1830 = vmatprep.subr.mxu0 %v1781
    %1831 = vmatpush1.msra.mxu0 %v1780
    %1832 = vmatprep.subr.mxu0 %v1789
    %1833 = vmatpush1.msra.mxu0 %v1788
    %1834 = vmatprep.subr.mxu0 %v1797
    %1835 = vmatpush1.msra.mxu0 %v1796
    %1836 = vmatprep.subr.mxu0 %v1805
    %1837 = vmatpush1.msra.mxu0 %v1804
    %1838 = vmatprep.subr.mxu0 %v1813
    %1839 = vmatpush1.msra.mxu0 %v1812
    %1840 = vmatprep.subr.mxu0 0.0
    %1841 = vmatpush1.msra.mxu0 0.0
    %1842 = vmatprep.subr.mxu0 0.0
    %1843 = vmatpush1.msra.mxu0 0.0
    %1844 = vmatprep.subr.mxu0 0.0
    %1845 = vmatpush1.msra.mxu0 0.0
    %1846 = vmatprep.subr.mxu0 0.0
    %1847 = vmatpush1.msra.mxu0 0.0
    %1848 = vmatprep.subr.mxu0 0.0
    %1849 = vmatpush1.msra.mxu0 0.0
    %1850 = vmatprep.subr.mxu0 0.0
    %1851 = vmatpush1.msra.mxu0 0.0
    %1852 = vmatprep.subr.mxu0 0.0
    %1853 = vmatpush1.msra.mxu0 0.0
    %1854 = vmatprep.subr.mxu0 0.0
    %1855 = vmatpush1.msra.mxu0 0.0
    %1856 = vmatprep.subr.mxu0 0.0
    %1857 = vmatpush1.msra.mxu0 0.0
    %1858 = vmatprep.subr.mxu0 0.0
    %1859 = vmatpush1.msra.mxu0 0.0
    %1860 = vmatprep.subr.mxu0 0.0
    %1861 = vmatpush1.msra.mxu0 0.0
    %1862 = vmatprep.subr.mxu0 0.0
    %1863 = vmatpush1.msra.mxu0 0.0
    %1864 = vmatprep.subr.mxu0 0.0
    %1865 = vmatpush1.msra.mxu0 0.0
    %1866 = vmatprep.subr.mxu0 0.0
    %1867 = vmatpush1.msra.mxu0 0.0
    %1868 = vmatprep.subr.mxu0 0.0
    %1869 = vmatpush1.msra.mxu0 0.0
    %1870 = vmatprep.subr.mxu0 0.0
    %1871 = vmatpush1.msra.mxu0 0.0
    %1872 = vmatprep.subr.mxu0 0.0
    %1873 = vmatpush1.msra.mxu0 0.0
    %1874 = vmatprep.subr.mxu0 0.0
    %1875 = vmatpush1.msra.mxu0 0.0
    %1876 = vmatprep.subr.mxu0 0.0
    %1877 = vmatpush1.msra.mxu0 0.0
    %1878 = vmatprep.subr.mxu0 0.0
    %1879 = vmatpush1.msra.mxu0 0.0
    %1880 = vmatprep.subr.mxu0 0.0
    %1881 = vmatpush1.msra.mxu0 0.0
    %1882 = vmatprep.subr.mxu0 0.0
    %1883 = vmatpush1.msra.mxu0 0.0
    %1884 = vmatprep.subr.mxu0 0.0
    %1885 = vmatpush1.msra.mxu0 0.0
    %1886 = vmatprep.mubr.f32.mxu0 0.0
    %1887 = vmatmul.mubr.f32.gmra.mrb[0].mxu0 %v1820
    %v1888 = vpop.f32.mrb[0].mxu0
    %v1889 = vadd.f32 %v1817, %v1888
    %v1890 = vpop.f32.mrb[0].mxu0
    %v1891 = vadd.f32 %v1817, %v1890
    %1892 = vdwg.mxu0
    %v1893 = vadd.f32 %v1889, %v1595
    %v1894 = vadd.f32 %v1891, %v1596
    %v1895 = vld [vmem:[%s892] sm:$0xff]
    %v1896 = vld [vmem:[%s894] sm:$0xff]
    %1897 = vrot.lane.b32.xlu0 %v1893, 17
    %v1898 = vpop.permute.xlu0 %1897
    %1899 = vrot.lane.b32.xlu0 %v1894, 17
    %v1900 = vpop.permute.xlu0 %1899
    %v1901 = vsel %vm175, %v1898, %v1900
    %v1902 = vsel %vm175, %v1900, %v1898
    %v1903 = vmul.f32 %v1902, %v1206
    %v1904 = vmul.f32 %v1901, %v1210
    %1905 = vrot.lane.b32.xlu0 %v1893, 16
    %v1906 = vpop.permute.xlu0 %1905
    %1907 = vrot.lane.b32.xlu0 %v1894, 16
    %v1908 = vpop.permute.xlu0 %1907
    %v1909 = vsel %vm196, %v1906, %v1908
    %v1910 = vsel %vm196, %v1908, %v1906
    %v1911 = vmul.f32 %v1910, %v1226
    %v1912 = vmul.f32 %v1909, %v1230
    %1913 = vrot.lane.b32.xlu0 %v1893, 15
    %v1914 = vpop.permute.xlu0 %1913
    %1915 = vrot.lane.b32.xlu0 %v1894, 15
    %v1916 = vpop.permute.xlu0 %1915
    %v1917 = vsel %vm218, %v1914, %v1916
    %v1918 = vsel %vm218, %v1916, %v1914
    %v1919 = vmul.f32 %v1918, %v1246
    %v1920 = vmul.f32 %v1917, %v1250
    %1921 = vrot.lane.b32.xlu0 %v1893, 1
    %v1922 = vpop.permute.xlu0 %1921
    %1923 = vrot.lane.b32.xlu0 %v1894, 1
    %v1924 = vpop.permute.xlu0 %1923
    %v1925 = vsel %vm240, %v1922, %v1924
    %v1926 = vsel %vm240, %v1924, %v1922
    %v1927 = vmul.f32 %v1926, %v1266
    %v1928 = vmul.f32 %v1925, %v1270
    %v1929 = vmul.f32 %v1893, %v1280
    %v1930 = vmul.f32 %v1894, %v1284
    %1931 = vrot.lane.b32.xlu0 %v1893, 127
    %v1932 = vpop.permute.xlu0 %1931
    %1933 = vrot.lane.b32.xlu0 %v1894, 127
    %v1934 = vpop.permute.xlu0 %1933
    %v1935 = vsel %vm277, %v1932, %v1934
    %v1936 = vsel %vm277, %v1934, %v1932
    %v1937 = vmul.f32 %v1935, %v1300
    %v1938 = vmul.f32 %v1936, %v1304
    %1939 = vrot.lane.b32.xlu0 %v1893, 113
    %v1940 = vpop.permute.xlu0 %1939
    %1941 = vrot.lane.b32.xlu0 %v1894, 113
    %v1942 = vpop.permute.xlu0 %1941
    %v1943 = vsel %vm299, %v1940, %v1942
    %v1944 = vsel %vm299, %v1942, %v1940
    %v1945 = vmul.f32 %v1943, %v1320
    %v1946 = vmul.f32 %v1944, %v1324
    %1947 = vrot.lane.b32.xlu0 %v1893, 112
    %v1948 = vpop.permute.xlu0 %1947
    %1949 = vrot.lane.b32.xlu0 %v1894, 112
    %v1950 = vpop.permute.xlu0 %1949
    %v1951 = vsel %vm321, %v1948, %v1950
    %v1952 = vsel %vm321, %v1950, %v1948
    %v1953 = vmul.f32 %v1951, %v1340
    %v1954 = vmul.f32 %v1952, %v1344
    %1955 = vrot.lane.b32.xlu0 %v1893, 111
    %v1956 = vpop.permute.xlu0 %1955
    %1957 = vrot.lane.b32.xlu0 %v1894, 111
    %v1958 = vpop.permute.xlu0 %1957
    %v1959 = vsel %vm343, %v1956, %v1958
    %v1960 = vsel %vm343, %v1958, %v1956
    %v1961 = vmul.f32 %v1959, %v1360
    %v1962 = vmul.f32 %v1960, %v1364
    %1964 = vset.pattern.permute.xlu0 0
    %1965 = vperm.xlu0 %1964, %v1896
    %v1966 = vpop.permute.xlu0 %1965
    %v1969 = vsel %vm366, %v1895, 0
    %1971 = vmatprep.subr.mxu0 %v1904
    %1972 = vmatpush1.msra.mxu0 %v1903
    %1973 = vmatprep.subr.mxu0 %v1912
    %1974 = vmatpush1.msra.mxu0 %v1911
    %1975 = vmatprep.subr.mxu0 %v1920
    %1976 = vmatpush1.msra.mxu0 %v1919
    %1977 = vmatprep.subr.mxu0 %v1928
    %1978 = vmatpush1.msra.mxu0 %v1927
    %1979 = vmatprep.subr.mxu0 %v1930
    %1980 = vmatpush1.msra.mxu0 %v1929
    %1981 = vmatprep.subr.mxu0 %v1938
    %1982 = vmatpush1.msra.mxu0 %v1937
    %1983 = vmatprep.subr.mxu0 %v1946
    %1984 = vmatpush1.msra.mxu0 %v1945
    %1985 = vmatprep.subr.mxu0 %v1954
    %1986 = vmatpush1.msra.mxu0 %v1953
    %1987 = vmatprep.subr.mxu0 %v1962
    %1988 = vmatpush1.msra.mxu0 %v1961
    %1989 = vmatprep.subr.mxu0 0.0
    %1990 = vmatpush1.msra.mxu0 0.0
    %1991 = vmatprep.subr.mxu0 0.0
    %1992 = vmatpush1.msra.mxu0 0.0
    %1993 = vmatprep.subr.mxu0 0.0
    %1994 = vmatpush1.msra.mxu0 0.0
    %1995 = vmatprep.subr.mxu0 0.0
    %1996 = vmatpush1.msra.mxu0 0.0
    %1997 = vmatprep.subr.mxu0 0.0
    %1998 = vmatpush1.msra.mxu0 0.0
    %1999 = vmatprep.subr.mxu0 0.0
    %2000 = vmatpush1.msra.mxu0 0.0
    %2001 = vmatprep.subr.mxu0 0.0
    %2002 = vmatpush1.msra.mxu0 0.0
    %2003 = vmatprep.subr.mxu0 0.0
    %2004 = vmatpush1.msra.mxu0 0.0
    %2005 = vmatprep.subr.mxu0 0.0
    %2006 = vmatpush1.msra.mxu0 0.0
    %2007 = vmatprep.subr.mxu0 0.0
    %2008 = vmatpush1.msra.mxu0 0.0
    %2009 = vmatprep.subr.mxu0 0.0
    %2010 = vmatpush1.msra.mxu0 0.0
    %2011 = vmatprep.subr.mxu0 0.0
    %2012 = vmatpush1.msra.mxu0 0.0
    %2013 = vmatprep.subr.mxu0 0.0
    %2014 = vmatpush1.msra.mxu0 0.0
    %2015 = vmatprep.subr.mxu0 0.0
    %2016 = vmatpush1.msra.mxu0 0.0
    %2017 = vmatprep.subr.mxu0 0.0
    %2018 = vmatpush1.msra.mxu0 0.0
    %2019 = vmatprep.subr.mxu0 0.0
    %2020 = vmatpush1.msra.mxu0 0.0
    %2021 = vmatprep.subr.mxu0 0.0
    %2022 = vmatpush1.msra.mxu0 0.0
    %2023 = vmatprep.subr.mxu0 0.0
    %2024 = vmatpush1.msra.mxu0 0.0
    %2025 = vmatprep.subr.mxu0 0.0
    %2026 = vmatpush1.msra.mxu0 0.0
    %2027 = vmatprep.subr.mxu0 0.0
    %2028 = vmatpush1.msra.mxu0 0.0
    %2029 = vmatprep.subr.mxu0 0.0
    %2030 = vmatpush1.msra.mxu0 0.0
    %2031 = vmatprep.subr.mxu0 0.0
    %2032 = vmatpush1.msra.mxu0 0.0
    %2033 = vmatprep.subr.mxu0 0.0
    %2034 = vmatpush1.msra.mxu0 0.0
    %2035 = vmatprep.mubr.f32.mxu0 0.0
    %2036 = vmatmul.mubr.f32.gmra.mrb[0].mxu0 %v1969
    %v2037 = vpop.f32.mrb[0].mxu0
    %v2038 = vadd.f32 %v1966, %v2037
    %v2039 = vpop.f32.mrb[0].mxu0
    %v2040 = vadd.f32 %v1966, %v2039
    %2041 = vdwg.mxu0
    %2042 = vmatprep.subr.mxu0 0.0
    %2043 = vmatpush1.msra.mxu0 %v43
    %2044 = vmatprep.subr.mxu0 0.0
    %2045 = vmatpush1.msra.mxu0 %v44
    %2046 = vmatprep.subr.mxu0 0.0
    %2047 = vmatpush1.msra.mxu0 %v45
    %2048 = vmatprep.subr.mxu0 0.0
    %2049 = vmatpush1.msra.mxu0 %v46
    %2050 = vmatprep.subr.mxu0 0.0
    %2051 = vmatpush1.msra.mxu0 %v47
    %2052 = vmatprep.subr.mxu0 0.0
    %2053 = vmatpush1.msra.mxu0 %v48
    %2054 = vmatprep.subr.mxu0 0.0
    %2055 = vmatpush1.msra.mxu0 %v49
    %2056 = vmatprep.subr.mxu0 0.0
    %2057 = vmatpush1.msra.mxu0 %v50
    %2058 = vmatprep.subr.mxu0 0.0
    %2059 = vmatpush1.msra.mxu0 %v51
    %2060 = vmatprep.subr.mxu0 0.0
    %2061 = vmatpush1.msra.mxu0 %v52
    %2062 = vmatprep.subr.mxu0 0.0
    %2063 = vmatpush1.msra.mxu0 %v53
    %2064 = vmatprep.subr.mxu0 0.0
    %2065 = vmatpush1.msra.mxu0 %v54
    %2066 = vmatprep.subr.mxu0 0.0
    %2067 = vmatpush1.msra.mxu0 %v55
    %2068 = vmatprep.subr.mxu0 0.0
    %2069 = vmatpush1.msra.mxu0 %v56
    %2070 = vmatprep.subr.mxu0 0.0
    %2071 = vmatpush1.msra.mxu0 %v57
    %2072 = vmatprep.subr.mxu0 0.0
    %2073 = vmatpush1.msra.mxu0 %v58
    %2074 = vmatprep.subr.mxu0 0.0
    %2075 = vmatpush1.msra.mxu0 %v59
    %2076 = vmatprep.subr.mxu0 0.0
    %2077 = vmatpush1.msra.mxu0 %v60
    %2078 = vmatprep.subr.mxu0 0.0
    %2079 = vmatpush1.msra.mxu0 %v61
    %2080 = vmatprep.subr.mxu0 0.0
    %2081 = vmatpush1.msra.mxu0 %v62
    %2082 = vmatprep.subr.mxu0 0.0
    %2083 = vmatpush1.msra.mxu0 %v63
    %2084 = vmatprep.subr.mxu0 0.0
    %2085 = vmatpush1.msra.mxu0 %v64
    %2086 = vmatprep.subr.mxu0 0.0
    %2087 = vmatpush1.msra.mxu0 %v65
    %2088 = vmatprep.subr.mxu0 0.0
    %2089 = vmatpush1.msra.mxu0 %v66
    %2090 = vmatprep.subr.mxu0 0.0
    %2091 = vmatpush1.msra.mxu0 %v67
    %2092 = vmatprep.subr.mxu0 0.0
    %2093 = vmatpush1.msra.mxu0 %v68
    %2094 = vmatprep.subr.mxu0 0.0
    %2095 = vmatpush1.msra.mxu0 %v69
    %2096 = vmatprep.subr.mxu0 0.0
    %2097 = vmatpush1.msra.mxu0 %v70
    %2098 = vmatprep.subr.mxu0 0.0
    %2099 = vmatpush1.msra.mxu0 %v71
    %2100 = vmatprep.subr.mxu0 0.0
    %2101 = vmatpush1.msra.mxu0 %v72
    %2102 = vmatprep.subr.mxu0 0.0
    %2103 = vmatpush1.msra.mxu0 %v73
    %2104 = vmatprep.subr.mxu0 0.0
    %2105 = vmatpush1.msra.mxu0 %v74
    %2106 = vmatprep.mubr.f32.mxu0 %v2040
    %2107 = vmatmul.mubr.f32.gmra.mrb[0].mxu0 %v2038
    %v2108 = vpop.f32.mrb[0].mxu0
    %v2109 = vadd.f32 0.0, %v2108
    %v2110 = vpop.f32.mrb[0].mxu0
    %2111 = vdwg.mxu0
    %s2112 = scalar_lea.vmem [#allocation5], 8
    %2113 = vst [vmem:[%s2112] sm:$0xff] %v2109
    // Predicated region
    $region34: #{tpu_custom_call.1} parent=1 // pred_check
      _
    $region35: #{tpu_custom_call.1} parent=1 // pred_check_branch
      %2115 = sbr.rel (0) target = $region37
    $region36: #{tpu_custom_call.1} parent=1 // pred_region
      %s2117 = ssub.s32 256, 256
      %2118 = vsyncadd [#allocation4], %s2117
      %s2119 = sshll.u32 [#allocation5], 4
      %s2120 = int_to_ptr.vmem [resolvable:$true] %s2119
      %2125 = dma.vmem_to_hbm [thread:$0]  %s2120, 256, %s7, [#allocation4], 128, 128, 8
    $region37: #{tpu_custom_call.1} parent=1 // pred_fallthru
      _
    // Predicated region
    $region38: #{tpu_custom_call.1} parent=1 // pred_check
      _
    $region39: #{tpu_custom_call.1} parent=1 // pred_check_branch
      %2127 = sbr.rel (0) target = $region41
    $region40: #{tpu_custom_call.1} parent=1 // pred_region
      %2128 = dma.done [#allocation4], 256
    $region41: #{tpu_custom_call.1} parent=1 // pred_fallthru
      _
    %2129 = vsyncpa [#allocation3], 1
    %2130 = vsyncpa [#allocation4], 1

</llo_original>
